<compile_context>
chip_gen: v7x
topology: tpu7x:2x2x1
jax: 0.10.0
libtpu: 0.0.40
codegen_flags: <defaults>
</compile_context>

<pallas_src>
import math

import jax
import jax.numpy as jnp
from jax.experimental import pallas as pl
from jax.experimental.pallas import tpu as pltpu

IN_FEAT = 500            # per-LSTM input size = W/2 with W = 1000
HID = 100                # LSTM hidden size
NUM_LSTM = 4
OUT_DIM = 2

IN_PAD = 512             # 500 padded to lane-aligned 512
HID_PAD = 128            # 100 padded to one vreg lane width
NUM_GATES = 3            # (i, g, o) -- forget gate is dead because c0 == 0
GATE_W = NUM_GATES * HID_PAD          # 384
X_W = NUM_LSTM * IN_PAD               # 2048: packed per-row input slab
OUT_PAD = 128                         # FC2 output padded 2 -> 128 (lane-dense store)

COMPUTE_DTYPE = jnp.bfloat16          # weight / matmul-input dtype (f32 accumulation)
OUT_DTYPE = jnp.bfloat16              # lane-dense output slab dtype
MAX_BATCH_TILE = 512                  # batch tile for large-B calls

# Static weight-byte count for the CostEstimate (bf16 weights, f32 biases).
_WEIGHT_BYTES = (NUM_LSTM * IN_PAD * GATE_W * 2 + NUM_LSTM * GATE_W * 4
                 + NUM_LSTM * HID_PAD * HID_PAD * 2 + HID_PAD * 4
                 + HID_PAD * OUT_PAD * 2 + OUT_PAD * 4)


def fused_kernel(x_ref, wg_ref, bg_ref, w1_ref, b1_ref, w2_ref, b2_ref, out_ref):
    """Whole forward pass for one batch tile.

    x_ref : (TB, 2048)     packed per-row input: 4 chunks of 512 (bf16)
    wg_ref: (4, 512, 384)  per-LSTM W_ih^T for gates (i, g, o), zero-padded
    bg_ref: (4, 1, 384)    b_ih + b_hh for gates (i, g, o), zero-padded (f32)
    w1_ref: (4, 128, 128)  FC1^T split per LSTM-chunk, zero-padded
    b1_ref: (1, 128)       FC1 bias (f32)
    w2_ref: (128, 128)     FC2^T, output padded 2 -> 128
    b2_ref: (1, 128)       FC2 bias (f32)
    out_ref: (TB, 128)     lane-dense result slab (cols 0:2 are the real output)
    """
    acc = None
    for k in range(NUM_LSTM):          # static unroll; 4 independent LSTMs, T == 1
        xk = x_ref[:, k * IN_PAD:(k + 1) * IN_PAD]       # free 128-aligned view
        gates = jnp.dot(xk, wg_ref[k],
                        preferred_element_type=jnp.float32) + bg_ref[k]
        i_g = jax.nn.sigmoid(gates[:, 0:HID_PAD])
        g_g = jnp.tanh(gates[:, HID_PAD:2 * HID_PAD])
        o_g = jax.nn.sigmoid(gates[:, 2 * HID_PAD:3 * HID_PAD])
        # c0 = 0  =>  c1 = i*g ; h1 = o*tanh(c1). Pad lanes: sigmoid(0)*tanh(0) == 0.
        h_k = o_g * jnp.tanh(i_g * g_g)
        h_k = jnp.maximum(h_k, 0.2 * h_k)                # LeakyReLU(0.2), per-chunk
        # FC1 folded into the unroll: h1 = sum_k leaky(h_k) @ W1^T[k] + b1.
        part = jnp.dot(h_k.astype(w1_ref.dtype), w1_ref[k],
                       preferred_element_type=jnp.float32)
        acc = part if acc is None else acc + part

    h1 = acc + b1_ref[...]
    h1 = jnp.maximum(h1, 0.2 * h1)                       # LeakyReLU(0.2)

    h2 = jnp.dot(h1.astype(w2_ref.dtype), w2_ref[...],
                 preferred_element_type=jnp.float32) + b2_ref[...]
    out_ref[...] = jnp.maximum(h2, 0.0).astype(out_ref.dtype)   # ReLU, lane-dense


def init_params(key, weight_dtype=COMPUTE_DTYPE):
    """PyTorch-style uniform init, packed into the padded kernel layout."""
    ks = jax.random.split(key, NUM_LSTM * 4 + 4)
    bound = 1.0 / math.sqrt(HID)
    wg = jnp.zeros((NUM_LSTM, IN_PAD, GATE_W), jnp.float32)
    bg = jnp.zeros((NUM_LSTM, 1, GATE_W), jnp.float32)
    idx = 0
    for k in range(NUM_LSTM):
        w_ih = jax.random.uniform(ks[idx], (4 * HID, IN_FEAT), jnp.float32, -bound, bound); idx += 1
        _w_hh = jax.random.uniform(ks[idx], (4 * HID, HID), jnp.float32, -bound, bound); idx += 1
        b_ih = jax.random.uniform(ks[idx], (4 * HID,), jnp.float32, -bound, bound); idx += 1
        b_hh = jax.random.uniform(ks[idx], (4 * HID,), jnp.float32, -bound, bound); idx += 1
        b = b_ih + b_hh
        # W_hh is dead for h0 = 0, T = 1: drawn for parity with the torch module,
        # but never shipped to the device kernel.
        # PyTorch gate order in weight_ih_l0 is (i, f, g, o); keep (i, g, o).
        for dst, src in enumerate((0, 2, 3)):
            wg = wg.at[k, :IN_FEAT, dst * HID_PAD:dst * HID_PAD + HID].set(
                w_ih[src * HID:(src + 1) * HID, :].T)
            bg = bg.at[k, 0, dst * HID_PAD:dst * HID_PAD + HID].set(
                b[src * HID:(src + 1) * HID])

    bound1 = 1.0 / math.sqrt(4 * HID)
    w1 = jax.random.uniform(ks[idx], (HID, 4 * HID), jnp.float32, -bound1, bound1); idx += 1
    b1 = jax.random.uniform(ks[idx], (HID,), jnp.float32, -bound1, bound1); idx += 1
    bound2 = 1.0 / math.sqrt(HID)
    w2 = jax.random.uniform(ks[idx], (OUT_DIM, HID), jnp.float32, -bound2, bound2); idx += 1
    b2 = jax.random.uniform(ks[idx], (OUT_DIM,), jnp.float32, -bound2, bound2); idx += 1

    # FC1^T split into 4 per-chunk blocks (4, 128, 128): block k multiplies h_k.
    w1t = w1.T                                          # (400, 100)
    w1p = jnp.zeros((NUM_LSTM, HID_PAD, HID_PAD), jnp.float32)
    for k in range(NUM_LSTM):
        w1p = w1p.at[k, :HID, :HID].set(w1t[k * HID:(k + 1) * HID, :])
    b1p = jnp.zeros((1, HID_PAD), jnp.float32).at[0, :HID].set(b1)
    w2p = jnp.zeros((HID_PAD, OUT_PAD), jnp.float32).at[:HID, :OUT_DIM].set(w2.T)
    b2p = jnp.zeros((1, OUT_PAD), jnp.float32).at[0, :OUT_DIM].set(b2)

    # Weights in bf16 (halves the dominant HBM weight traffic); biases stay f32
    # (added after the f32 accumulation).
    return (wg.astype(weight_dtype), bg,
            w1p.astype(weight_dtype), b1p,
            w2p.astype(weight_dtype), b2p)


def _round_up(x, m):
    return (x + m - 1) // m * m


def _tensorcores_per_chip():
    """Best-effort TensorCores-per-chip query (v7x has 2); safe default 1."""
    try:
        info = pltpu.get_tpu_info()
        for attr in ("tensorcores_per_chip", "num_tensorcores", "num_cores",
                     "cores_per_chip"):
            n = getattr(info, attr, None)
            if n:
                return int(n)
    except Exception:
        pass
    try:
        if "v7" in jax.devices()[0].device_kind.lower():
            return 2
    except Exception:
        pass
    return 1


def _choose_tiling(B, num_tc):
    """Batch tile (multiple of 16: bf16 sublane packing) and padded batch."""
    if num_tc >= 2 and B >= 32:
        # >= 2 independent tiles so both TensorCores get work on v7x.
        tb = min(MAX_BATCH_TILE, _round_up(pl.cdiv(B, 2), 16))
    elif B <= MAX_BATCH_TILE:
        tb = _round_up(B, 16)
    else:
        tb = MAX_BATCH_TILE
    return tb, _round_up(B, tb)


def forward(x, params):
    B, T, F = x.shape
    assert F == NUM_LSTM * IN_FEAT, "feature dim must be 2000 (W=1000, 4 slices of 500)"
    assert T == 1, "Flatten -> Linear(400, 100) in the reference module requires seq_len == 1"
    wg, bg, w1p, b1p, w2p, b2p = params

    tb, b_pad = _choose_tiling(B, _tensorcores_per_chip())
    n_tiles = b_pad // tb

    # Input-side glue, NO transpose: split the 2000 features into the 4 LSTM
    # chunks, pad 500 -> 512 and batch -> b_pad, flatten back to a lane-dense
    # (b_pad, 2048) slab and cast to the matmul input dtype.  One fused pass.
    xs = x.reshape(B, NUM_LSTM, IN_FEAT)
    xs = jnp.pad(xs, ((0, b_pad - B), (0, 0), (0, IN_PAD - IN_FEAT)))
    xs = xs.reshape(b_pad, X_W).astype(wg.dtype)          # (b_pad, 2048) bf16

    flops_per_row = 2 * (NUM_LSTM * IN_PAD * GATE_W
                         + NUM_LSTM * HID_PAD * HID_PAD
                         + HID_PAD * OUT_PAD)
    trans_per_row = NUM_LSTM * 4 * HID_PAD                # 2x sigmoid + 2x tanh per LSTM
    cost = pl.CostEstimate(
        flops=flops_per_row * b_pad,
        transcendentals=trans_per_row * b_pad,
        bytes_accessed=b_pad * (X_W * 2 + OUT_PAD * 2) + _WEIGHT_BYTES,
    )

    out_pad = pl.pallas_call(
        fused_kernel,
        out_shape=jax.ShapeDtypeStruct((b_pad, OUT_PAD), OUT_DTYPE),
        grid_spec=pltpu.PrefetchScalarGridSpec(
            num_scalar_prefetch=0,
            grid=(n_tiles,),
            in_specs=[
                pl.BlockSpec((tb, X_W), lambda b: (b, 0)),
                pl.BlockSpec((NUM_LSTM, IN_PAD, GATE_W), lambda b: (0, 0, 0)),
                pl.BlockSpec((NUM_LSTM, 1, GATE_W), lambda b: (0, 0, 0)),
                pl.BlockSpec((NUM_LSTM, HID_PAD, HID_PAD), lambda b: (0, 0, 0)),
                pl.BlockSpec((1, HID_PAD), lambda b: (0, 0)),
                pl.BlockSpec((HID_PAD, OUT_PAD), lambda b: (0, 0)),
                pl.BlockSpec((1, OUT_PAD), lambda b: (0, 0)),
            ],
            out_specs=pl.BlockSpec((tb, OUT_PAD), lambda b: (b, 0)),
        ),
        compiler_params=pltpu.CompilerParams(
            dimension_semantics=("parallel",)),   # batch tiles are independent
        cost_estimate=cost,
    )(xs, wg, bg, w1p, b1p, w2p, b2p)

    return out_pad[:B, :OUT_DIM].astype(jnp.float32)


def reference_forward(x, params):
    """Pure-JAX reference mirroring the kernel math (incl. bf16 input rounding)."""
    wg, bg, w1p, b1p, w2p, b2p = params
    B = x.shape[0]
    xs = x.reshape(B, NUM_LSTM, IN_FEAT)
    xs = jnp.pad(xs, ((0, 0), (0, 0), (0, IN_PAD - IN_FEAT)))
    xs = xs.astype(wg.dtype).astype(jnp.float32)
    wg32 = wg.astype(jnp.float32)
    w1_32 = w1p.astype(jnp.float32)
    w2_32 = w2p.astype(jnp.float32)
    acc = jnp.zeros((B, HID_PAD), jnp.float32)
    for k in range(NUM_LSTM):
        g = xs[:, k, :] @ wg32[k] + bg[k]
        i_g = jax.nn.sigmoid(g[:, :HID_PAD])
        g_g = jnp.tanh(g[:, HID_PAD:2 * HID_PAD])
        o_g = jax.nn.sigmoid(g[:, 2 * HID_PAD:])
        h_k = o_g * jnp.tanh(i_g * g_g)
        h_k = jnp.maximum(h_k, 0.2 * h_k)
        acc = acc + h_k.astype(w1p.dtype).astype(jnp.float32) @ w1_32[k]
    h1 = acc + b1p
    h1 = jnp.maximum(h1, 0.2 * h1)
    h2 = h1.astype(w2p.dtype).astype(jnp.float32) @ w2_32 + b2p
    return jnp.maximum(h2, 0.0)[:, :OUT_DIM]


if __name__ == "__main__":
    B, T = 4, 1  # seq length must be 1 (see assert in forward); feature dim fixed at 2000
    key = jax.random.PRNGKey(0)
    kx, kp = jax.random.split(key)
    x = jax.random.normal(kx, (B, T, NUM_LSTM * IN_FEAT), jnp.float32)
    params = init_params(kp)

    out = jax.jit(forward)(x, params)
    jax.block_until_ready(out)

    assert out.shape == (B, OUT_DIM)
    assert bool(jnp.all(out >= 0.0))  # final ReLU

    ref = reference_forward(x, params)
    assert bool(jnp.allclose(out, ref, rtol=1e-2, atol=1e-2)), (
        "kernel/reference mismatch: max abs err "
        f"{float(jnp.max(jnp.abs(out - ref)))}")
    print("KERNEL_OK")
</pallas_src>

<mosaic_0001>
module attributes {stable_mosaic.version = 11 : i64} {
  func.func @fused_kernel(%arg0: i32, %arg1: memref<16x2048xbf16, #tpu.memory_space<vmem>>, %arg2: memref<4x512x384xbf16, #tpu.memory_space<vmem>>, %arg3: memref<4x1x384xf32, #tpu.memory_space<vmem>>, %arg4: memref<4x128x128xbf16, #tpu.memory_space<vmem>>, %arg5: memref<1x128xf32, #tpu.memory_space<vmem>>, %arg6: memref<128x128xbf16, #tpu.memory_space<vmem>>, %arg7: memref<1x128xf32, #tpu.memory_space<vmem>>, %arg8: memref<16x128xbf16, #tpu.memory_space<vmem>>) attributes {dimension_semantics = [#tpu.dimension_semantics<parallel>], iteration_bounds = array<i64: 1>, scalar_prefetch = 0 : i64, scratch_operands = 0 : i64, tpu.core_type = #tpu.core_type<tc>, window_params = [{transform_indices = @transform_0, window_bounds = array<i64: 16, 2048>}, {pipeline_mode = #tpu.pipeline_mode<synchronous>, transform_indices = @transform_1, window_bounds = array<i64: 4, 512, 384>}, {pipeline_mode = #tpu.pipeline_mode<synchronous>, transform_indices = @transform_2, window_bounds = array<i64: 4, 1, 384>}, {pipeline_mode = #tpu.pipeline_mode<synchronous>, transform_indices = @transform_3, window_bounds = array<i64: 4, 128, 128>}, {pipeline_mode = #tpu.pipeline_mode<synchronous>, transform_indices = @transform_4, window_bounds = array<i64: 1, 128>}, {pipeline_mode = #tpu.pipeline_mode<synchronous>, transform_indices = @transform_5, window_bounds = array<i64: 128, 128>}, {pipeline_mode = #tpu.pipeline_mode<synchronous>, transform_indices = @transform_6, window_bounds = array<i64: 1, 128>}, {transform_indices = @transform_7, window_bounds = array<i64: 16, 128>}]} {
    %c0 = arith.constant 0 : index
    %c0_0 = arith.constant 0 : index
    %0 = vector.load %arg1[%c0, %c0_0] : memref<16x2048xbf16, #tpu.memory_space<vmem>>, vector<16x512xbf16>
    %c0_1 = arith.constant 0 : index
    %c0_2 = arith.constant 0 : index
    %c0_3 = arith.constant 0 : index
    %1 = vector.load %arg2[%c0_1, %c0_2, %c0_3] : memref<4x512x384xbf16, #tpu.memory_space<vmem>>, vector<1x512x384xbf16>
    %2 = vector.shape_cast %1 : vector<1x512x384xbf16> to vector<512x384xbf16>
    %cst = arith.constant dense<0.000000e+00> : vector<16x384xf32>
    %3 = tpu.matmul %0, %2, %cst {dimension_numbers = #tpu.dot_dimension_numbers<[1], [0], [0], [1], [0, 0, 1, 1], [], []>} : vector<16x512xbf16>, vector<512x384xbf16>, vector<16x384xf32> -> vector<16x384xf32>
    %c0_4 = arith.constant 0 : index
    %c0_5 = arith.constant 0 : index
    %c0_6 = arith.constant 0 : index
    %4 = vector.load %arg3[%c0_4, %c0_5, %c0_6] : memref<4x1x384xf32, #tpu.memory_space<vmem>>, vector<1x1x384xf32>
    %5 = vector.shape_cast %4 : vector<1x1x384xf32> to vector<1x384xf32>
    %6 = vector.broadcast %5 : vector<1x384xf32> to vector<16x384xf32>
    %7 = arith.addf %3, %6 : vector<16x384xf32>
    %8 = vector.extract_strided_slice %7 {offsets = [0, 0], sizes = [16, 128], strides = [1, 1]} : vector<16x384xf32> to vector<16x128xf32>
    %9 = arith.negf %8 : vector<16x128xf32>
    %10 = math.exp %9 : vector<16x128xf32>
    %cst_7 = arith.constant 1.000000e+00 : f32
    %11 = vector.broadcast %cst_7 : f32 to vector<16x128xf32>
    %12 = arith.addf %11, %10 : vector<16x128xf32>
    %13 = arith.divf %11, %12 : vector<16x128xf32>
    %14 = vector.extract_strided_slice %7 {offsets = [0, 128], sizes = [16, 128], strides = [1, 1]} : vector<16x384xf32> to vector<16x128xf32>
    %15 = math.tanh %14 : vector<16x128xf32>
    %16 = vector.extract_strided_slice %7 {offsets = [0, 256], sizes = [16, 128], strides = [1, 1]} : vector<16x384xf32> to vector<16x128xf32>
    %17 = arith.negf %16 : vector<16x128xf32>
    %18 = math.exp %17 : vector<16x128xf32>
    %cst_8 = arith.constant 1.000000e+00 : f32
    %19 = vector.broadcast %cst_8 : f32 to vector<16x128xf32>
    %20 = arith.addf %19, %18 : vector<16x128xf32>
    %21 = arith.divf %19, %20 : vector<16x128xf32>
    %22 = arith.mulf %13, %15 : vector<16x128xf32>
    %23 = math.tanh %22 : vector<16x128xf32>
    %24 = arith.mulf %21, %23 : vector<16x128xf32>
    %cst_9 = arith.constant 2.000000e-01 : f32
    %25 = vector.broadcast %cst_9 : f32 to vector<16x128xf32>
    %26 = arith.mulf %25, %24 : vector<16x128xf32>
    %27 = arith.maximumf %24, %26 : vector<16x128xf32>
    %28 = arith.truncf %27 : vector<16x128xf32> to vector<16x128xbf16>
    %c0_10 = arith.constant 0 : index
    %c0_11 = arith.constant 0 : index
    %c0_12 = arith.constant 0 : index
    %29 = vector.load %arg4[%c0_10, %c0_11, %c0_12] : memref<4x128x128xbf16, #tpu.memory_space<vmem>>, vector<1x128x128xbf16>
    %30 = vector.shape_cast %29 : vector<1x128x128xbf16> to vector<128x128xbf16>
    %cst_13 = arith.constant dense<0.000000e+00> : vector<16x128xf32>
    %31 = tpu.matmul %28, %30, %cst_13 {dimension_numbers = #tpu.dot_dimension_numbers<[1], [0], [0], [1], [0, 0, 1, 1], [], []>} : vector<16x128xbf16>, vector<128x128xbf16>, vector<16x128xf32> -> vector<16x128xf32>
    %c0_14 = arith.constant 0 : index
    %c512 = arith.constant 512 : index
    %32 = vector.load %arg1[%c0_14, %c512] : memref<16x2048xbf16, #tpu.memory_space<vmem>>, vector<16x512xbf16>
    %c1 = arith.constant 1 : index
    %c0_15 = arith.constant 0 : index
    %c0_16 = arith.constant 0 : index
    %33 = vector.load %arg2[%c1, %c0_15, %c0_16] : memref<4x512x384xbf16, #tpu.memory_space<vmem>>, vector<1x512x384xbf16>
    %34 = vector.shape_cast %33 : vector<1x512x384xbf16> to vector<512x384xbf16>
    %cst_17 = arith.constant dense<0.000000e+00> : vector<16x384xf32>
    %35 = tpu.matmul %32, %34, %cst_17 {dimension_numbers = #tpu.dot_dimension_numbers<[1], [0], [0], [1], [0, 0, 1, 1], [], []>} : vector<16x512xbf16>, vector<512x384xbf16>, vector<16x384xf32> -> vector<16x384xf32>
    %c1_18 = arith.constant 1 : index
    %c0_19 = arith.constant 0 : index
    %c0_20 = arith.constant 0 : index
    %36 = vector.load %arg3[%c1_18, %c0_19, %c0_20] : memref<4x1x384xf32, #tpu.memory_space<vmem>>, vector<1x1x384xf32>
    %37 = vector.shape_cast %36 : vector<1x1x384xf32> to vector<1x384xf32>
    %38 = vector.broadcast %37 : vector<1x384xf32> to vector<16x384xf32>
    %39 = arith.addf %35, %38 : vector<16x384xf32>
    %40 = vector.extract_strided_slice %39 {offsets = [0, 0], sizes = [16, 128], strides = [1, 1]} : vector<16x384xf32> to vector<16x128xf32>
    %41 = arith.negf %40 : vector<16x128xf32>
    %42 = math.exp %41 : vector<16x128xf32>
    %cst_21 = arith.constant 1.000000e+00 : f32
    %43 = vector.broadcast %cst_21 : f32 to vector<16x128xf32>
    %44 = arith.addf %43, %42 : vector<16x128xf32>
    %45 = arith.divf %43, %44 : vector<16x128xf32>
    %46 = vector.extract_strided_slice %39 {offsets = [0, 128], sizes = [16, 128], strides = [1, 1]} : vector<16x384xf32> to vector<16x128xf32>
    %47 = math.tanh %46 : vector<16x128xf32>
    %48 = vector.extract_strided_slice %39 {offsets = [0, 256], sizes = [16, 128], strides = [1, 1]} : vector<16x384xf32> to vector<16x128xf32>
    %49 = arith.negf %48 : vector<16x128xf32>
    %50 = math.exp %49 : vector<16x128xf32>
    %cst_22 = arith.constant 1.000000e+00 : f32
    %51 = vector.broadcast %cst_22 : f32 to vector<16x128xf32>
    %52 = arith.addf %51, %50 : vector<16x128xf32>
    %53 = arith.divf %51, %52 : vector<16x128xf32>
    %54 = arith.mulf %45, %47 : vector<16x128xf32>
    %55 = math.tanh %54 : vector<16x128xf32>
    %56 = arith.mulf %53, %55 : vector<16x128xf32>
    %cst_23 = arith.constant 2.000000e-01 : f32
    %57 = vector.broadcast %cst_23 : f32 to vector<16x128xf32>
    %58 = arith.mulf %57, %56 : vector<16x128xf32>
    %59 = arith.maximumf %56, %58 : vector<16x128xf32>
    %60 = arith.truncf %59 : vector<16x128xf32> to vector<16x128xbf16>
    %c1_24 = arith.constant 1 : index
    %c0_25 = arith.constant 0 : index
    %c0_26 = arith.constant 0 : index
    %61 = vector.load %arg4[%c1_24, %c0_25, %c0_26] : memref<4x128x128xbf16, #tpu.memory_space<vmem>>, vector<1x128x128xbf16>
    %62 = vector.shape_cast %61 : vector<1x128x128xbf16> to vector<128x128xbf16>
    %cst_27 = arith.constant dense<0.000000e+00> : vector<16x128xf32>
    %63 = tpu.matmul %60, %62, %cst_27 {dimension_numbers = #tpu.dot_dimension_numbers<[1], [0], [0], [1], [0, 0, 1, 1], [], []>} : vector<16x128xbf16>, vector<128x128xbf16>, vector<16x128xf32> -> vector<16x128xf32>
    %64 = arith.addf %31, %63 : vector<16x128xf32>
    %c0_28 = arith.constant 0 : index
    %c1024 = arith.constant 1024 : index
    %65 = vector.load %arg1[%c0_28, %c1024] : memref<16x2048xbf16, #tpu.memory_space<vmem>>, vector<16x512xbf16>
    %c2 = arith.constant 2 : index
    %c0_29 = arith.constant 0 : index
    %c0_30 = arith.constant 0 : index
    %66 = vector.load %arg2[%c2, %c0_29, %c0_30] : memref<4x512x384xbf16, #tpu.memory_space<vmem>>, vector<1x512x384xbf16>
    %67 = vector.shape_cast %66 : vector<1x512x384xbf16> to vector<512x384xbf16>
    %cst_31 = arith.constant dense<0.000000e+00> : vector<16x384xf32>
    %68 = tpu.matmul %65, %67, %cst_31 {dimension_numbers = #tpu.dot_dimension_numbers<[1], [0], [0], [1], [0, 0, 1, 1], [], []>} : vector<16x512xbf16>, vector<512x384xbf16>, vector<16x384xf32> -> vector<16x384xf32>
    %c2_32 = arith.constant 2 : index
    %c0_33 = arith.constant 0 : index
    %c0_34 = arith.constant 0 : index
    %69 = vector.load %arg3[%c2_32, %c0_33, %c0_34] : memref<4x1x384xf32, #tpu.memory_space<vmem>>, vector<1x1x384xf32>
    %70 = vector.shape_cast %69 : vector<1x1x384xf32> to vector<1x384xf32>
    %71 = vector.broadcast %70 : vector<1x384xf32> to vector<16x384xf32>
    %72 = arith.addf %68, %71 : vector<16x384xf32>
    %73 = vector.extract_strided_slice %72 {offsets = [0, 0], sizes = [16, 128], strides = [1, 1]} : vector<16x384xf32> to vector<16x128xf32>
    %74 = arith.negf %73 : vector<16x128xf32>
    %75 = math.exp %74 : vector<16x128xf32>
    %cst_35 = arith.constant 1.000000e+00 : f32
    %76 = vector.broadcast %cst_35 : f32 to vector<16x128xf32>
    %77 = arith.addf %76, %75 : vector<16x128xf32>
    %78 = arith.divf %76, %77 : vector<16x128xf32>
    %79 = vector.extract_strided_slice %72 {offsets = [0, 128], sizes = [16, 128], strides = [1, 1]} : vector<16x384xf32> to vector<16x128xf32>
    %80 = math.tanh %79 : vector<16x128xf32>
    %81 = vector.extract_strided_slice %72 {offsets = [0, 256], sizes = [16, 128], strides = [1, 1]} : vector<16x384xf32> to vector<16x128xf32>
    %82 = arith.negf %81 : vector<16x128xf32>
    %83 = math.exp %82 : vector<16x128xf32>
    %cst_36 = arith.constant 1.000000e+00 : f32
    %84 = vector.broadcast %cst_36 : f32 to vector<16x128xf32>
    %85 = arith.addf %84, %83 : vector<16x128xf32>
    %86 = arith.divf %84, %85 : vector<16x128xf32>
    %87 = arith.mulf %78, %80 : vector<16x128xf32>
    %88 = math.tanh %87 : vector<16x128xf32>
    %89 = arith.mulf %86, %88 : vector<16x128xf32>
    %cst_37 = arith.constant 2.000000e-01 : f32
    %90 = vector.broadcast %cst_37 : f32 to vector<16x128xf32>
    %91 = arith.mulf %90, %89 : vector<16x128xf32>
    %92 = arith.maximumf %89, %91 : vector<16x128xf32>
    %93 = arith.truncf %92 : vector<16x128xf32> to vector<16x128xbf16>
    %c2_38 = arith.constant 2 : index
    %c0_39 = arith.constant 0 : index
    %c0_40 = arith.constant 0 : index
    %94 = vector.load %arg4[%c2_38, %c0_39, %c0_40] : memref<4x128x128xbf16, #tpu.memory_space<vmem>>, vector<1x128x128xbf16>
    %95 = vector.shape_cast %94 : vector<1x128x128xbf16> to vector<128x128xbf16>
    %cst_41 = arith.constant dense<0.000000e+00> : vector<16x128xf32>
    %96 = tpu.matmul %93, %95, %cst_41 {dimension_numbers = #tpu.dot_dimension_numbers<[1], [0], [0], [1], [0, 0, 1, 1], [], []>} : vector<16x128xbf16>, vector<128x128xbf16>, vector<16x128xf32> -> vector<16x128xf32>
    %97 = arith.addf %64, %96 : vector<16x128xf32>
    %c0_42 = arith.constant 0 : index
    %c1536 = arith.constant 1536 : index
    %98 = vector.load %arg1[%c0_42, %c1536] : memref<16x2048xbf16, #tpu.memory_space<vmem>>, vector<16x512xbf16>
    %c3 = arith.constant 3 : index
    %c0_43 = arith.constant 0 : index
    %c0_44 = arith.constant 0 : index
    %99 = vector.load %arg2[%c3, %c0_43, %c0_44] : memref<4x512x384xbf16, #tpu.memory_space<vmem>>, vector<1x512x384xbf16>
    %100 = vector.shape_cast %99 : vector<1x512x384xbf16> to vector<512x384xbf16>
    %cst_45 = arith.constant dense<0.000000e+00> : vector<16x384xf32>
    %101 = tpu.matmul %98, %100, %cst_45 {dimension_numbers = #tpu.dot_dimension_numbers<[1], [0], [0], [1], [0, 0, 1, 1], [], []>} : vector<16x512xbf16>, vector<512x384xbf16>, vector<16x384xf32> -> vector<16x384xf32>
    %c3_46 = arith.constant 3 : index
    %c0_47 = arith.constant 0 : index
    %c0_48 = arith.constant 0 : index
    %102 = vector.load %arg3[%c3_46, %c0_47, %c0_48] : memref<4x1x384xf32, #tpu.memory_space<vmem>>, vector<1x1x384xf32>
    %103 = vector.shape_cast %102 : vector<1x1x384xf32> to vector<1x384xf32>
    %104 = vector.broadcast %103 : vector<1x384xf32> to vector<16x384xf32>
    %105 = arith.addf %101, %104 : vector<16x384xf32>
    %106 = vector.extract_strided_slice %105 {offsets = [0, 0], sizes = [16, 128], strides = [1, 1]} : vector<16x384xf32> to vector<16x128xf32>
    %107 = arith.negf %106 : vector<16x128xf32>
    %108 = math.exp %107 : vector<16x128xf32>
    %cst_49 = arith.constant 1.000000e+00 : f32
    %109 = vector.broadcast %cst_49 : f32 to vector<16x128xf32>
    %110 = arith.addf %109, %108 : vector<16x128xf32>
    %111 = arith.divf %109, %110 : vector<16x128xf32>
    %112 = vector.extract_strided_slice %105 {offsets = [0, 128], sizes = [16, 128], strides = [1, 1]} : vector<16x384xf32> to vector<16x128xf32>
    %113 = math.tanh %112 : vector<16x128xf32>
    %114 = vector.extract_strided_slice %105 {offsets = [0, 256], sizes = [16, 128], strides = [1, 1]} : vector<16x384xf32> to vector<16x128xf32>
    %115 = arith.negf %114 : vector<16x128xf32>
    %116 = math.exp %115 : vector<16x128xf32>
    %cst_50 = arith.constant 1.000000e+00 : f32
    %117 = vector.broadcast %cst_50 : f32 to vector<16x128xf32>
    %118 = arith.addf %117, %116 : vector<16x128xf32>
    %119 = arith.divf %117, %118 : vector<16x128xf32>
    %120 = arith.mulf %111, %113 : vector<16x128xf32>
    %121 = math.tanh %120 : vector<16x128xf32>
    %122 = arith.mulf %119, %121 : vector<16x128xf32>
    %cst_51 = arith.constant 2.000000e-01 : f32
    %123 = vector.broadcast %cst_51 : f32 to vector<16x128xf32>
    %124 = arith.mulf %123, %122 : vector<16x128xf32>
    %125 = arith.maximumf %122, %124 : vector<16x128xf32>
    %126 = arith.truncf %125 : vector<16x128xf32> to vector<16x128xbf16>
    %c3_52 = arith.constant 3 : index
    %c0_53 = arith.constant 0 : index
    %c0_54 = arith.constant 0 : index
    %127 = vector.load %arg4[%c3_52, %c0_53, %c0_54] : memref<4x128x128xbf16, #tpu.memory_space<vmem>>, vector<1x128x128xbf16>
    %128 = vector.shape_cast %127 : vector<1x128x128xbf16> to vector<128x128xbf16>
    %cst_55 = arith.constant dense<0.000000e+00> : vector<16x128xf32>
    %129 = tpu.matmul %126, %128, %cst_55 {dimension_numbers = #tpu.dot_dimension_numbers<[1], [0], [0], [1], [0, 0, 1, 1], [], []>} : vector<16x128xbf16>, vector<128x128xbf16>, vector<16x128xf32> -> vector<16x128xf32>
    %130 = arith.addf %97, %129 : vector<16x128xf32>
    %c0_56 = arith.constant 0 : index
    %c0_57 = arith.constant 0 : index
    %131 = vector.load %arg5[%c0_56, %c0_57] : memref<1x128xf32, #tpu.memory_space<vmem>>, vector<1x128xf32>
    %132 = vector.broadcast %131 : vector<1x128xf32> to vector<16x128xf32>
    %133 = arith.addf %130, %132 : vector<16x128xf32>
    %cst_58 = arith.constant 2.000000e-01 : f32
    %134 = vector.broadcast %cst_58 : f32 to vector<16x128xf32>
    %135 = arith.mulf %134, %133 : vector<16x128xf32>
    %136 = arith.maximumf %133, %135 : vector<16x128xf32>
    %137 = arith.truncf %136 : vector<16x128xf32> to vector<16x128xbf16>
    %c0_59 = arith.constant 0 : index
    %c0_60 = arith.constant 0 : index
    %138 = vector.load %arg6[%c0_59, %c0_60] : memref<128x128xbf16, #tpu.memory_space<vmem>>, vector<128x128xbf16>
    %cst_61 = arith.constant dense<0.000000e+00> : vector<16x128xf32>
    %139 = tpu.matmul %137, %138, %cst_61 {dimension_numbers = #tpu.dot_dimension_numbers<[1], [0], [0], [1], [0, 0, 1, 1], [], []>} : vector<16x128xbf16>, vector<128x128xbf16>, vector<16x128xf32> -> vector<16x128xf32>
    %c0_62 = arith.constant 0 : index
    %c0_63 = arith.constant 0 : index
    %140 = vector.load %arg7[%c0_62, %c0_63] : memref<1x128xf32, #tpu.memory_space<vmem>>, vector<1x128xf32>
    %141 = vector.broadcast %140 : vector<1x128xf32> to vector<16x128xf32>
    %142 = arith.addf %139, %141 : vector<16x128xf32>
    %cst_64 = arith.constant 0.000000e+00 : f32
    %143 = vector.broadcast %cst_64 : f32 to vector<16x128xf32>
    %144 = arith.maximumf %142, %143 : vector<16x128xf32>
    %145 = arith.truncf %144 : vector<16x128xf32> to vector<16x128xbf16>
    %c0_65 = arith.constant 0 : index
    %c0_66 = arith.constant 0 : index
    %146 = vector.load %arg8[%c0_65, %c0_66] : memref<16x128xbf16, #tpu.memory_space<vmem>>, vector<16x128xbf16>
    tpu.vector_store %arg8[%c0_65, %c0_66], %145 {strides = array<i32>} : memref<16x128xbf16, #tpu.memory_space<vmem>>, vector<16x128xbf16>,
    return
  }
  func.func @transform_0(%arg0: i32) -> (i32, i32) {
    %c0_i32 = arith.constant 0 : i32
    %c0_i32_0 = arith.constant 0 : i32
    return %arg0, %c0_i32 : i32, i32
  }
  func.func @transform_1(%arg0: i32) -> (i32, i32, i32) {
    %c0_i32 = arith.constant 0 : i32
    %c0_i32_0 = arith.constant 0 : i32
    %c0_i32_1 = arith.constant 0 : i32
    %c0_i32_2 = arith.constant 0 : i32
    return %c0_i32, %c0_i32_0, %c0_i32_1 : i32, i32, i32
  }
  func.func @transform_2(%arg0: i32) -> (i32, i32, i32) {
    %c0_i32 = arith.constant 0 : i32
    %c0_i32_0 = arith.constant 0 : i32
    %c0_i32_1 = arith.constant 0 : i32
    %c0_i32_2 = arith.constant 0 : i32
    return %c0_i32, %c0_i32_0, %c0_i32_1 : i32, i32, i32
  }
  func.func @transform_3(%arg0: i32) -> (i32, i32, i32) {
    %c0_i32 = arith.constant 0 : i32
    %c0_i32_0 = arith.constant 0 : i32
    %c0_i32_1 = arith.constant 0 : i32
    %c0_i32_2 = arith.constant 0 : i32
    return %c0_i32, %c0_i32_0, %c0_i32_1 : i32, i32, i32
  }
  func.func @transform_4(%arg0: i32) -> (i32, i32) {
    %c0_i32 = arith.constant 0 : i32
    %c0_i32_0 = arith.constant 0 : i32
    %c0_i32_1 = arith.constant 0 : i32
    return %c0_i32, %c0_i32_0 : i32, i32
  }
  func.func @transform_5(%arg0: i32) -> (i32, i32) {
    %c0_i32 = arith.constant 0 : i32
    %c0_i32_0 = arith.constant 0 : i32
    %c0_i32_1 = arith.constant 0 : i32
    return %c0_i32, %c0_i32_0 : i32, i32
  }
  func.func @transform_6(%arg0: i32) -> (i32, i32) {
    %c0_i32 = arith.constant 0 : i32
    %c0_i32_0 = arith.constant 0 : i32
    %c0_i32_1 = arith.constant 0 : i32
    return %c0_i32, %c0_i32_0 : i32, i32
  }
  func.func @transform_7(%arg0: i32) -> (i32, i32) {
    %c0_i32 = arith.constant 0 : i32
    %c0_i32_0 = arith.constant 0 : i32
    return %arg0, %c0_i32 : i32, i32
  }
}

</mosaic_0001>

<llo_original>
// kernel: forward.1
$region0: #{forward.1}
  #allocation0 [shape = 'u32[]', space=smem, size = 0x4, offset = 0x4, fixed_abs, tag = 'smem constant byte address 0x4 - core index']
  #allocation1 [shape = 'u32[144,128]{1,0:T(1,128)}', space=vmem, size = 0x12000, scoped, tag = 'internal scratch']
  %s0 = inlined_call_operand.vmem [shape: bf16[16,2048], index: 0, kind: input, shape index: {}]
  %s1 = inlined_call_operand.hbm [shape: bf16[4,512,384], index: 1, kind: input, shape index: {}]
  %s2 = inlined_call_operand.hbm [shape: f32[4,1,384], index: 2, kind: input, shape index: {}]
  %s3 = inlined_call_operand.hbm [shape: bf16[4,128,128], index: 3, kind: input, shape index: {}]
  %s4 = inlined_call_operand.hbm [shape: f32[1,128], index: 4, kind: input, shape index: {}]
  %s5 = inlined_call_operand.hbm [shape: bf16[128,128], index: 5, kind: input, shape index: {}]
  %s6 = inlined_call_operand.hbm [shape: f32[1,128], index: 6, kind: input, shape index: {}]
  %s7 = inlined_call_operand.vmem [shape: bf16[16,128], index: 7, kind: output, shape index: {}]
  %s8 = sld [smem:[#allocation0]]
  $region62: #{forward.1} parent=0
    _
  %s10 = ssub.s32 1, %s8
  %s11 = scalar_select 0, %s10, %s8
  $region1: #{forward.1} parent=0
    #allocation2 [shape = 'u8[1572864]{0}', space=vmem, size = 0x180000, scoped, tag = 'input window, operand 1, single buffered']
    #allocation3 [shape = 's32[1]{0}', space=sflag, size = 0x4, scoped, tag = 'scoped memory for forward.1']
    #allocation4 [shape = 'u8[6144]{0}', space=vmem, size = 0x1800, scoped, tag = 'input window, operand 2, single buffered']
    #allocation5 [shape = 's32[1]{0}', space=sflag, size = 0x4, scoped, tag = 'scoped memory for forward.1']
    #allocation6 [shape = 'u8[131072]{0}', space=vmem, size = 0x20000, scoped, tag = 'input window, operand 3, single buffered']
    #allocation7 [shape = 'u8[512]{0}', space=vmem, size = 0x400, scoped, tag = 'input window, operand 4, single buffered']
    #allocation8 [shape = 's32[1]{0}', space=sflag, size = 0x4, scoped, tag = 'scoped memory for forward.1']
    #allocation9 [shape = 'u8[32768]{0}', space=vmem, size = 0x8000, scoped, tag = 'input window, operand 5, single buffered']
    #allocation10 [shape = 'u8[512]{0}', space=vmem, size = 0x400, scoped, tag = 'input window, operand 6, single buffered']
    #allocation11 [shape = 's32[1]{0}', space=sflag, size = 0x4, scoped, tag = 'scoped memory for forward.1']
    %12 = vsyncpa [#allocation3], 0
    %13 = vsyncpa [#allocation5], 0
    %14 = vsyncpa [#allocation8], 0
    %15 = vsyncpa [#allocation11], 0
    // Predicated region
    $region2: #{forward.1} parent=1 // pred_check
      _
    $region3: #{forward.1} parent=1 // pred_check_branch
      %17 = sbr.rel (0) target = $region5
    $region4: #{forward.1} parent=1 // pred_region
      _
    $region5: #{forward.1} parent=1 // pred_fallthru
      _
    // Predicated region
    $region6: #{forward.1} parent=1 // pred_check
      _
    $region7: #{forward.1} parent=1 // pred_check_branch
      %19 = sbr.rel (0) target = $region9
    $region8: #{forward.1} parent=1 // pred_region
      %s21 = ssub.s32 49152, 49152
      %22 = vsyncadd [#allocation3], %s21
      %s23 = sshll.u32 [#allocation2], 4
      %s24 = int_to_ptr.vmem [resolvable:$true] %s23
      %29 = dma.hbm_to_vmem [thread:$0]  %s1, 49152, %s24, [#allocation3], 192, 192, 12
    $region9: #{forward.1} parent=1 // pred_fallthru
      _
    // Predicated region
    $region10: #{forward.1} parent=1 // pred_check
      _
    $region11: #{forward.1} parent=1 // pred_check_branch
      %31 = sbr.rel (0) target = $region13
    $region12: #{forward.1} parent=1 // pred_region
      %s33 = ssub.s32 192, 192
      %34 = vsyncadd [#allocation5], %s33
      %s35 = sshll.u32 [#allocation4], 4
      %s36 = int_to_ptr.vmem [resolvable:$true] %s35
      %41 = dma.hbm_to_vmem [thread:$0]  %s2, 192, %s36, [#allocation5], 48, 48, 3
    $region13: #{forward.1} parent=1 // pred_fallthru
      _
    // Predicated region
    $region14: #{forward.1} parent=1 // pred_check
      _
    $region15: #{forward.1} parent=1 // pred_check_branch
      %43 = sbr.rel (0) target = $region17
    $region16: #{forward.1} parent=1 // pred_region
      %s45 = ssub.s32 4096, 4096
      %46 = vsyncadd [#allocation5], %s45
      %s47 = sshll.u32 [#allocation6], 4
      %s48 = int_to_ptr.vmem [resolvable:$true] %s47
      %53 = dma.hbm_to_vmem [thread:$0]  %s3, 4096, %s48, [#allocation5], 64, 64, 4
    $region17: #{forward.1} parent=1 // pred_fallthru
      _
    // Predicated region
    $region18: #{forward.1} parent=1 // pred_check
      _
    $region19: #{forward.1} parent=1 // pred_check_branch
      %55 = sbr.rel (0) target = $region21
    $region20: #{forward.1} parent=1 // pred_region
      %s57 = ssub.s32 16, 16
      %58 = vsyncadd [#allocation8], %s57
      %s60 = sshll.u32 [#allocation7], 4
      %s61 = int_to_ptr.vmem [resolvable:$true] %s60
      %63 = dma.hbm_to_vmem [thread:$0]  %s4, 16, %s61, [#allocation8]
    $region21: #{forward.1} parent=1 // pred_fallthru
      _
    // Predicated region
    $region22: #{forward.1} parent=1 // pred_check
      _
    $region23: #{forward.1} parent=1 // pred_check_branch
      %65 = sbr.rel (0) target = $region25
    $region24: #{forward.1} parent=1 // pred_region
      %s67 = ssub.s32 1024, 1024
      %68 = vsyncadd [#allocation8], %s67
      %s69 = sshll.u32 [#allocation9], 4
      %s70 = int_to_ptr.vmem [resolvable:$true] %s69
      %75 = dma.hbm_to_vmem [thread:$0]  %s5, 1024, %s70, [#allocation8], 64, 64, 4
    $region25: #{forward.1} parent=1 // pred_fallthru
      _
    // Predicated region
    $region26: #{forward.1} parent=1 // pred_check
      _
    $region27: #{forward.1} parent=1 // pred_check_branch
      %77 = sbr.rel (0) target = $region29
    $region28: #{forward.1} parent=1 // pred_region
      %s79 = ssub.s32 16, 16
      %80 = vsyncadd [#allocation11], %s79
      %s82 = sshll.u32 [#allocation10], 4
      %s83 = int_to_ptr.vmem [resolvable:$true] %s82
      %85 = dma.hbm_to_vmem [thread:$0]  %s6, 16, %s83, [#allocation11]
    $region29: #{forward.1} parent=1 // pred_fallthru
      _
    // Predicated region
    $region30: #{forward.1} parent=1 // pred_check
      _
    $region31: #{forward.1} parent=1 // pred_check_branch
      %87 = sbr.rel (0) target = $region33
    $region32: #{forward.1} parent=1 // pred_region
      %88 = dma.done [#allocation3], 49152
    $region33: #{forward.1} parent=1 // pred_fallthru
      _
    // Predicated region
    $region34: #{forward.1} parent=1 // pred_check
      _
    $region35: #{forward.1} parent=1 // pred_check_branch
      %90 = sbr.rel (0) target = $region37
    $region36: #{forward.1} parent=1 // pred_region
      %91 = dma.done [#allocation5], 192
    $region37: #{forward.1} parent=1 // pred_fallthru
      _
    // Predicated region
    $region38: #{forward.1} parent=1 // pred_check
      _
    $region39: #{forward.1} parent=1 // pred_check_branch
      %93 = sbr.rel (0) target = $region41
    $region40: #{forward.1} parent=1 // pred_region
      %94 = dma.done [#allocation5], 4096
    $region41: #{forward.1} parent=1 // pred_fallthru
      _
    // Predicated region
    $region42: #{forward.1} parent=1 // pred_check
      _
    $region43: #{forward.1} parent=1 // pred_check_branch
      %96 = sbr.rel (0) target = $region45
    $region44: #{forward.1} parent=1 // pred_region
      %97 = dma.done [#allocation8], 16
    $region45: #{forward.1} parent=1 // pred_fallthru
      _
    // Predicated region
    $region46: #{forward.1} parent=1 // pred_check
      _
    $region47: #{forward.1} parent=1 // pred_check_branch
      %99 = sbr.rel (0) target = $region49
    $region48: #{forward.1} parent=1 // pred_region
      %100 = dma.done [#allocation8], 1024
    $region49: #{forward.1} parent=1 // pred_fallthru
      _
    // Predicated region
    $region50: #{forward.1} parent=1 // pred_check
      _
    $region51: #{forward.1} parent=1 // pred_check_branch
      %102 = sbr.rel (0) target = $region53
    $region52: #{forward.1} parent=1 // pred_region
      %103 = dma.done [#allocation11], 16
    $region53: #{forward.1} parent=1 // pred_fallthru
      _
    %v105 = vld [vmem:[%s0] sm:$0xff]
    %v106 = vld [vmem:[%s0 + $0x8] sm:$0xff]
    %v107 = vld [vmem:[%s0 + $0x40] sm:$0xff]
    %v108 = vld [vmem:[%s0 + $0x48] sm:$0xff]
    %v109 = vld [vmem:[#allocation2] sm:$0xff]
    %v110 = vld [vmem:[#allocation2 + $0x8] sm:$0xf]
    %v111 = vld [vmem:[#allocation2 + $0xc] sm:$0xff]
    %v112 = vld [vmem:[#allocation2 + $0x14] sm:$0xf]
    %v113 = vld [vmem:[#allocation2 + $0x18] sm:$0xff]
    %v114 = vld [vmem:[#allocation2 + $0x20] sm:$0xf]
    %v115 = vld [vmem:[#allocation2 + $0x24] sm:$0xff]
    %v116 = vld [vmem:[#allocation2 + $0x2c] sm:$0xf]
    %v117 = vld [vmem:[#allocation2 + $0x30] sm:$0xff]
    %v118 = vld [vmem:[#allocation2 + $0x38] sm:$0xf]
    %v119 = vld [vmem:[#allocation2 + $0x3c] sm:$0xff]
    %v120 = vld [vmem:[#allocation2 + $0x44] sm:$0xf]
    %v121 = vld [vmem:[#allocation2 + $0x48] sm:$0xff]
    %v122 = vld [vmem:[#allocation2 + $0x50] sm:$0xf]
    %v123 = vld [vmem:[#allocation2 + $0x54] sm:$0xff]
    %v124 = vld [vmem:[#allocation2 + $0x5c] sm:$0xf]
    %v125 = vld [vmem:[#allocation2 + $0x60] sm:$0xff]
    %v126 = vld [vmem:[#allocation2 + $0x68] sm:$0xf]
    %v127 = vld [vmem:[#allocation2 + $0x6c] sm:$0xff]
    %v128 = vld [vmem:[#allocation2 + $0x74] sm:$0xf]
    %v129 = vld [vmem:[#allocation2 + $0x78] sm:$0xff]
    %v130 = vld [vmem:[#allocation2 + $0x80] sm:$0xf]
    %v131 = vld [vmem:[#allocation2 + $0x84] sm:$0xff]
    %v132 = vld [vmem:[#allocation2 + $0x8c] sm:$0xf]
    %v133 = vld [vmem:[#allocation2 + $0x90] sm:$0xff]
    %v134 = vld [vmem:[#allocation2 + $0x98] sm:$0xf]
    %v135 = vld [vmem:[#allocation2 + $0x9c] sm:$0xff]
    %v136 = vld [vmem:[#allocation2 + $0xa4] sm:$0xf]
    %v137 = vld [vmem:[#allocation2 + $0xa8] sm:$0xff]
    %v138 = vld [vmem:[#allocation2 + $0xb0] sm:$0xf]
    %v139 = vld [vmem:[#allocation2 + $0xb4] sm:$0xff]
    %v140 = vld [vmem:[#allocation2 + $0xbc] sm:$0xf]
    %v141 = vld [vmem:[#allocation2 + $0xc0] sm:$0xff]
    %v142 = vld [vmem:[#allocation2 + $0xc8] sm:$0xf]
    %v143 = vld [vmem:[#allocation2 + $0xcc] sm:$0xff]
    %v144 = vld [vmem:[#allocation2 + $0xd4] sm:$0xf]
    %v145 = vld [vmem:[#allocation2 + $0xd8] sm:$0xff]
    %v146 = vld [vmem:[#allocation2 + $0xe0] sm:$0xf]
    %v147 = vld [vmem:[#allocation2 + $0xe4] sm:$0xff]
    %v148 = vld [vmem:[#allocation2 + $0xec] sm:$0xf]
    %v149 = vld [vmem:[#allocation2 + $0xf0] sm:$0xff]
    %v150 = vld [vmem:[#allocation2 + $0xf8] sm:$0xf]
    %v151 = vld [vmem:[#allocation2 + $0xfc] sm:$0xff]
    %v152 = vld [vmem:[#allocation2 + $0x104] sm:$0xf]
    %v153 = vld [vmem:[#allocation2 + $0x108] sm:$0xff]
    %v154 = vld [vmem:[#allocation2 + $0x110] sm:$0xf]
    %v155 = vld [vmem:[#allocation2 + $0x114] sm:$0xff]
    %v156 = vld [vmem:[#allocation2 + $0x11c] sm:$0xf]
    %v157 = vld [vmem:[#allocation2 + $0x120] sm:$0xff]
    %v158 = vld [vmem:[#allocation2 + $0x128] sm:$0xf]
    %v159 = vld [vmem:[#allocation2 + $0x12c] sm:$0xff]
    %v160 = vld [vmem:[#allocation2 + $0x134] sm:$0xf]
    %v161 = vld [vmem:[#allocation2 + $0x138] sm:$0xff]
    %v162 = vld [vmem:[#allocation2 + $0x140] sm:$0xf]
    %v163 = vld [vmem:[#allocation2 + $0x144] sm:$0xff]
    %v164 = vld [vmem:[#allocation2 + $0x14c] sm:$0xf]
    %v165 = vld [vmem:[#allocation2 + $0x150] sm:$0xff]
    %v166 = vld [vmem:[#allocation2 + $0x158] sm:$0xf]
    %v167 = vld [vmem:[#allocation2 + $0x15c] sm:$0xff]
    %v168 = vld [vmem:[#allocation2 + $0x164] sm:$0xf]
    %v169 = vld [vmem:[#allocation2 + $0x168] sm:$0xff]
    %v170 = vld [vmem:[#allocation2 + $0x170] sm:$0xf]
    %v171 = vld [vmem:[#allocation2 + $0x174] sm:$0xff]
    %v172 = vld [vmem:[#allocation2 + $0x17c] sm:$0xf]
    %v173 = vld [vmem:[#allocation2 + $0x180] sm:$0xff]
    %v174 = vld [vmem:[#allocation2 + $0x188] sm:$0xf]
    %v175 = vld [vmem:[#allocation2 + $0x18c] sm:$0xff]
    %v176 = vld [vmem:[#allocation2 + $0x194] sm:$0xf]
    %v177 = vld [vmem:[#allocation2 + $0x198] sm:$0xff]
    %v178 = vld [vmem:[#allocation2 + $0x1a0] sm:$0xf]
    %v179 = vld [vmem:[#allocation2 + $0x1a4] sm:$0xff]
    %v180 = vld [vmem:[#allocation2 + $0x1ac] sm:$0xf]
    %v181 = vld [vmem:[#allocation2 + $0x1b0] sm:$0xff]
    %v182 = vld [vmem:[#allocation2 + $0x1b8] sm:$0xf]
    %v183 = vld [vmem:[#allocation2 + $0x1bc] sm:$0xff]
    %v184 = vld [vmem:[#allocation2 + $0x1c4] sm:$0xf]
    %v185 = vld [vmem:[#allocation2 + $0x1c8] sm:$0xff]
    %v186 = vld [vmem:[#allocation2 + $0x1d0] sm:$0xf]
    %v187 = vld [vmem:[#allocation2 + $0x1d4] sm:$0xff]
    %v188 = vld [vmem:[#allocation2 + $0x1dc] sm:$0xf]
    %v189 = vld [vmem:[#allocation2 + $0x1e0] sm:$0xff]
    %v190 = vld [vmem:[#allocation2 + $0x1e8] sm:$0xf]
    %v191 = vld [vmem:[#allocation2 + $0x1ec] sm:$0xff]
    %v192 = vld [vmem:[#allocation2 + $0x1f4] sm:$0xf]
    %v193 = vld [vmem:[#allocation2 + $0x1f8] sm:$0xff]
    %v194 = vld [vmem:[#allocation2 + $0x200] sm:$0xf]
    %v195 = vld [vmem:[#allocation2 + $0x204] sm:$0xff]
    %v196 = vld [vmem:[#allocation2 + $0x20c] sm:$0xf]
    %v197 = vld [vmem:[#allocation2 + $0x210] sm:$0xff]
    %v198 = vld [vmem:[#allocation2 + $0x218] sm:$0xf]
    %v199 = vld [vmem:[#allocation2 + $0x21c] sm:$0xff]
    %v200 = vld [vmem:[#allocation2 + $0x224] sm:$0xf]
    %v201 = vld [vmem:[#allocation2 + $0x228] sm:$0xff]
    %v202 = vld [vmem:[#allocation2 + $0x230] sm:$0xf]
    %v203 = vld [vmem:[#allocation2 + $0x234] sm:$0xff]
    %v204 = vld [vmem:[#allocation2 + $0x23c] sm:$0xf]
    %v205 = vld [vmem:[#allocation2 + $0x240] sm:$0xff]
    %v206 = vld [vmem:[#allocation2 + $0x248] sm:$0xf]
    %v207 = vld [vmem:[#allocation2 + $0x24c] sm:$0xff]
    %v208 = vld [vmem:[#allocation2 + $0x254] sm:$0xf]
    %v209 = vld [vmem:[#allocation2 + $0x258] sm:$0xff]
    %v210 = vld [vmem:[#allocation2 + $0x260] sm:$0xf]
    %v211 = vld [vmem:[#allocation2 + $0x264] sm:$0xff]
    %v212 = vld [vmem:[#allocation2 + $0x26c] sm:$0xf]
    %v213 = vld [vmem:[#allocation2 + $0x270] sm:$0xff]
    %v214 = vld [vmem:[#allocation2 + $0x278] sm:$0xf]
    %v215 = vld [vmem:[#allocation2 + $0x27c] sm:$0xff]
    %v216 = vld [vmem:[#allocation2 + $0x284] sm:$0xf]
    %v217 = vld [vmem:[#allocation2 + $0x288] sm:$0xff]
    %v218 = vld [vmem:[#allocation2 + $0x290] sm:$0xf]
    %v219 = vld [vmem:[#allocation2 + $0x294] sm:$0xff]
    %v220 = vld [vmem:[#allocation2 + $0x29c] sm:$0xf]
    %v221 = vld [vmem:[#allocation2 + $0x2a0] sm:$0xff]
    %v222 = vld [vmem:[#allocation2 + $0x2a8] sm:$0xf]
    %v223 = vld [vmem:[#allocation2 + $0x2ac] sm:$0xff]
    %v224 = vld [vmem:[#allocation2 + $0x2b4] sm:$0xf]
    %v225 = vld [vmem:[#allocation2 + $0x2b8] sm:$0xff]
    %v226 = vld [vmem:[#allocation2 + $0x2c0] sm:$0xf]
    %v227 = vld [vmem:[#allocation2 + $0x2c4] sm:$0xff]
    %v228 = vld [vmem:[#allocation2 + $0x2cc] sm:$0xf]
    %v229 = vld [vmem:[#allocation2 + $0x2d0] sm:$0xff]
    %v230 = vld [vmem:[#allocation2 + $0x2d8] sm:$0xf]
    %v231 = vld [vmem:[#allocation2 + $0x2dc] sm:$0xff]
    %v232 = vld [vmem:[#allocation2 + $0x2e4] sm:$0xf]
    %v233 = vld [vmem:[#allocation2 + $0x2e8] sm:$0xff]
    %v234 = vld [vmem:[#allocation2 + $0x2f0] sm:$0xf]
    %v235 = vld [vmem:[#allocation2 + $0x2f4] sm:$0xff]
    %v236 = vld [vmem:[#allocation2 + $0x2fc] sm:$0xf]
    %v237 = vld [vmem:[#allocation4] sm:$0x7]
    %v239 = vlaneseq
    %v240 = vshrl.u32 %v239, 7
    %v241 = vsub.s32 0, %v240
    %v242 = vrot.slane %v237, %v241
    %v243 = vlaneseq
    %v244 = vshrl.u32 %v243, 7
    %v245 = vsub.s32 1, %v244
    %v246 = vrot.slane %v237, %v245
    %v247 = vlaneseq
    %v248 = vshrl.u32 %v247, 7
    %v249 = vsub.s32 2, %v248
    %v250 = vrot.slane %v237, %v249
    %v258 = vunpack.c.l.b16 %v105
    %v259 = vunpack.c.h.b16 %v105
    %v260 = vunpack.c.l.b16 %v106
    %v261 = vunpack.c.h.b16 %v106
    %v262 = vunpack.c.l.b16 %v107
    %v263 = vunpack.c.h.b16 %v107
    %v264 = vunpack.c.l.b16 %v108
    %v265 = vunpack.c.h.b16 %v108
    %v266 = vpack.c.b16 %v262, %v258
    %v267 = vpack.c.b16 %v263, %v259
    %v268 = vpack.c.b16 %v264, %v260
    %v269 = vpack.c.b16 %v265, %v261
    %v402 = vunpack.c.l.b16 %v109
    %v403 = vunpack.c.h.b16 %v109
    %v404 = vunpack.c.l.b16 %v110
    %v405 = vunpack.c.l.b16 %v111
    %v406 = vunpack.c.h.b16 %v111
    %v407 = vunpack.c.l.b16 %v112
    %v408 = vunpack.c.l.b16 %v113
    %v409 = vunpack.c.h.b16 %v113
    %v410 = vunpack.c.l.b16 %v114
    %v411 = vunpack.c.l.b16 %v115
    %v412 = vunpack.c.h.b16 %v115
    %v413 = vunpack.c.l.b16 %v116
    %v414 = vunpack.c.l.b16 %v117
    %v415 = vunpack.c.h.b16 %v117
    %v416 = vunpack.c.l.b16 %v118
    %v417 = vunpack.c.l.b16 %v119
    %v418 = vunpack.c.h.b16 %v119
    %v419 = vunpack.c.l.b16 %v120
    %v420 = vunpack.c.l.b16 %v121
    %v421 = vunpack.c.h.b16 %v121
    %v422 = vunpack.c.l.b16 %v122
    %v423 = vunpack.c.l.b16 %v123
    %v424 = vunpack.c.h.b16 %v123
    %v425 = vunpack.c.l.b16 %v124
    %v426 = vunpack.c.l.b16 %v125
    %v427 = vunpack.c.h.b16 %v125
    %v428 = vunpack.c.l.b16 %v126
    %v429 = vunpack.c.l.b16 %v127
    %v430 = vunpack.c.h.b16 %v127
    %v431 = vunpack.c.l.b16 %v128
    %v432 = vunpack.c.l.b16 %v129
    %v433 = vunpack.c.h.b16 %v129
    %v434 = vunpack.c.l.b16 %v130
    %v435 = vunpack.c.l.b16 %v131
    %v436 = vunpack.c.h.b16 %v131
    %v437 = vunpack.c.l.b16 %v132
    %v438 = vunpack.c.l.b16 %v133
    %v439 = vunpack.c.h.b16 %v133
    %v440 = vunpack.c.l.b16 %v134
    %v441 = vunpack.c.l.b16 %v135
    %v442 = vunpack.c.h.b16 %v135
    %v443 = vunpack.c.l.b16 %v136
    %v444 = vunpack.c.l.b16 %v137
    %v445 = vunpack.c.h.b16 %v137
    %v446 = vunpack.c.l.b16 %v138
    %v447 = vunpack.c.l.b16 %v139
    %v448 = vunpack.c.h.b16 %v139
    %v449 = vunpack.c.l.b16 %v140
    %v450 = vunpack.c.l.b16 %v141
    %v451 = vunpack.c.h.b16 %v141
    %v452 = vunpack.c.l.b16 %v142
    %v453 = vunpack.c.l.b16 %v143
    %v454 = vunpack.c.h.b16 %v143
    %v455 = vunpack.c.l.b16 %v144
    %v456 = vunpack.c.l.b16 %v145
    %v457 = vunpack.c.h.b16 %v145
    %v458 = vunpack.c.l.b16 %v146
    %v459 = vunpack.c.l.b16 %v147
    %v460 = vunpack.c.h.b16 %v147
    %v461 = vunpack.c.l.b16 %v148
    %v462 = vunpack.c.l.b16 %v149
    %v463 = vunpack.c.h.b16 %v149
    %v464 = vunpack.c.l.b16 %v150
    %v465 = vunpack.c.l.b16 %v151
    %v466 = vunpack.c.h.b16 %v151
    %v467 = vunpack.c.l.b16 %v152
    %v468 = vunpack.c.l.b16 %v153
    %v469 = vunpack.c.h.b16 %v153
    %v470 = vunpack.c.l.b16 %v154
    %v471 = vunpack.c.l.b16 %v155
    %v472 = vunpack.c.h.b16 %v155
    %v473 = vunpack.c.l.b16 %v156
    %v474 = vunpack.c.l.b16 %v157
    %v475 = vunpack.c.h.b16 %v157
    %v476 = vunpack.c.l.b16 %v158
    %v477 = vunpack.c.l.b16 %v159
    %v478 = vunpack.c.h.b16 %v159
    %v479 = vunpack.c.l.b16 %v160
    %v480 = vunpack.c.l.b16 %v161
    %v481 = vunpack.c.h.b16 %v161
    %v482 = vunpack.c.l.b16 %v162
    %v483 = vunpack.c.l.b16 %v163
    %v484 = vunpack.c.h.b16 %v163
    %v485 = vunpack.c.l.b16 %v164
    %v486 = vunpack.c.l.b16 %v165
    %v487 = vunpack.c.h.b16 %v165
    %v488 = vunpack.c.l.b16 %v166
    %v489 = vunpack.c.l.b16 %v167
    %v490 = vunpack.c.h.b16 %v167
    %v491 = vunpack.c.l.b16 %v168
    %v492 = vunpack.c.l.b16 %v169
    %v493 = vunpack.c.h.b16 %v169
    %v494 = vunpack.c.l.b16 %v170
    %v495 = vunpack.c.l.b16 %v171
    %v496 = vunpack.c.h.b16 %v171
    %v497 = vunpack.c.l.b16 %v172
    %v498 = vunpack.c.l.b16 %v173
    %v499 = vunpack.c.h.b16 %v173
    %v500 = vunpack.c.l.b16 %v174
    %v501 = vunpack.c.l.b16 %v175
    %v502 = vunpack.c.h.b16 %v175
    %v503 = vunpack.c.l.b16 %v176
    %v504 = vunpack.c.l.b16 %v177
    %v505 = vunpack.c.h.b16 %v177
    %v506 = vunpack.c.l.b16 %v178
    %v507 = vunpack.c.l.b16 %v179
    %v508 = vunpack.c.h.b16 %v179
    %v509 = vunpack.c.l.b16 %v180
    %v510 = vunpack.c.l.b16 %v181
    %v511 = vunpack.c.h.b16 %v181
    %v512 = vunpack.c.l.b16 %v182
    %v513 = vunpack.c.l.b16 %v183
    %v514 = vunpack.c.h.b16 %v183
    %v515 = vunpack.c.l.b16 %v184
    %v516 = vunpack.c.l.b16 %v185
    %v517 = vunpack.c.h.b16 %v185
    %v518 = vunpack.c.l.b16 %v186
    %v519 = vunpack.c.l.b16 %v187
    %v520 = vunpack.c.h.b16 %v187
    %v521 = vunpack.c.l.b16 %v188
    %v522 = vunpack.c.l.b16 %v189
    %v523 = vunpack.c.h.b16 %v189
    %v524 = vunpack.c.l.b16 %v190
    %v525 = vunpack.c.l.b16 %v191
    %v526 = vunpack.c.h.b16 %v191
    %v527 = vunpack.c.l.b16 %v192
    %v528 = vunpack.c.l.b16 %v193
    %v529 = vunpack.c.h.b16 %v193
    %v530 = vunpack.c.l.b16 %v194
    %v531 = vunpack.c.l.b16 %v195
    %v532 = vunpack.c.h.b16 %v195
    %v533 = vunpack.c.l.b16 %v196
    %v534 = vunpack.c.l.b16 %v197
    %v535 = vunpack.c.h.b16 %v197
    %v536 = vunpack.c.l.b16 %v198
    %v537 = vunpack.c.l.b16 %v199
    %v538 = vunpack.c.h.b16 %v199
    %v539 = vunpack.c.l.b16 %v200
    %v540 = vunpack.c.l.b16 %v201
    %v541 = vunpack.c.h.b16 %v201
    %v542 = vunpack.c.l.b16 %v202
    %v543 = vunpack.c.l.b16 %v203
    %v544 = vunpack.c.h.b16 %v203
    %v545 = vunpack.c.l.b16 %v204
    %v546 = vunpack.c.l.b16 %v205
    %v547 = vunpack.c.h.b16 %v205
    %v548 = vunpack.c.l.b16 %v206
    %v549 = vunpack.c.l.b16 %v207
    %v550 = vunpack.c.h.b16 %v207
    %v551 = vunpack.c.l.b16 %v208
    %v552 = vunpack.c.l.b16 %v209
    %v553 = vunpack.c.h.b16 %v209
    %v554 = vunpack.c.l.b16 %v210
    %v555 = vunpack.c.l.b16 %v211
    %v556 = vunpack.c.h.b16 %v211
    %v557 = vunpack.c.l.b16 %v212
    %v558 = vunpack.c.l.b16 %v213
    %v559 = vunpack.c.h.b16 %v213
    %v560 = vunpack.c.l.b16 %v214
    %v561 = vunpack.c.l.b16 %v215
    %v562 = vunpack.c.h.b16 %v215
    %v563 = vunpack.c.l.b16 %v216
    %v564 = vunpack.c.l.b16 %v217
    %v565 = vunpack.c.h.b16 %v217
    %v566 = vunpack.c.l.b16 %v218
    %v567 = vunpack.c.l.b16 %v219
    %v568 = vunpack.c.h.b16 %v219
    %v569 = vunpack.c.l.b16 %v220
    %v570 = vunpack.c.l.b16 %v221
    %v571 = vunpack.c.h.b16 %v221
    %v572 = vunpack.c.l.b16 %v222
    %v573 = vunpack.c.l.b16 %v223
    %v574 = vunpack.c.h.b16 %v223
    %v575 = vunpack.c.l.b16 %v224
    %v576 = vunpack.c.l.b16 %v225
    %v577 = vunpack.c.h.b16 %v225
    %v578 = vunpack.c.l.b16 %v226
    %v579 = vunpack.c.l.b16 %v227
    %v580 = vunpack.c.h.b16 %v227
    %v581 = vunpack.c.l.b16 %v228
    %v582 = vunpack.c.l.b16 %v229
    %v583 = vunpack.c.h.b16 %v229
    %v584 = vunpack.c.l.b16 %v230
    %v585 = vunpack.c.l.b16 %v231
    %v586 = vunpack.c.h.b16 %v231
    %v587 = vunpack.c.l.b16 %v232
    %v588 = vunpack.c.l.b16 %v233
    %v589 = vunpack.c.h.b16 %v233
    %v590 = vunpack.c.l.b16 %v234
    %v591 = vunpack.c.l.b16 %v235
    %v592 = vunpack.c.h.b16 %v235
    %v593 = vunpack.c.l.b16 %v236
    %v594 = vpack.c.b16 %v405, %v402
    %v595 = vpack.c.b16 %v406, %v403
    %v596 = vpack.c.b16 %v407, %v404
    %v597 = vpack.c.b16 %v411, %v408
    %v598 = vpack.c.b16 %v412, %v409
    %v599 = vpack.c.b16 %v413, %v410
    %v600 = vpack.c.b16 %v417, %v414
    %v601 = vpack.c.b16 %v418, %v415
    %v602 = vpack.c.b16 %v419, %v416
    %v603 = vpack.c.b16 %v423, %v420
    %v604 = vpack.c.b16 %v424, %v421
    %v605 = vpack.c.b16 %v425, %v422
    %v606 = vpack.c.b16 %v429, %v426
    %v607 = vpack.c.b16 %v430, %v427
    %v608 = vpack.c.b16 %v431, %v428
    %v609 = vpack.c.b16 %v435, %v432
    %v610 = vpack.c.b16 %v436, %v433
    %v611 = vpack.c.b16 %v437, %v434
    %v612 = vpack.c.b16 %v441, %v438
    %v613 = vpack.c.b16 %v442, %v439
    %v614 = vpack.c.b16 %v443, %v440
    %v615 = vpack.c.b16 %v447, %v444
    %v616 = vpack.c.b16 %v448, %v445
    %v617 = vpack.c.b16 %v449, %v446
    %v618 = vpack.c.b16 %v453, %v450
    %v619 = vpack.c.b16 %v454, %v451
    %v620 = vpack.c.b16 %v455, %v452
    %v621 = vpack.c.b16 %v459, %v456
    %v622 = vpack.c.b16 %v460, %v457
    %v623 = vpack.c.b16 %v461, %v458
    %v624 = vpack.c.b16 %v465, %v462
    %v625 = vpack.c.b16 %v466, %v463
    %v626 = vpack.c.b16 %v467, %v464
    %v627 = vpack.c.b16 %v471, %v468
    %v628 = vpack.c.b16 %v472, %v469
    %v629 = vpack.c.b16 %v473, %v470
    %v630 = vpack.c.b16 %v477, %v474
    %v631 = vpack.c.b16 %v478, %v475
    %v632 = vpack.c.b16 %v479, %v476
    %v633 = vpack.c.b16 %v483, %v480
    %v634 = vpack.c.b16 %v484, %v481
    %v635 = vpack.c.b16 %v485, %v482
    %v636 = vpack.c.b16 %v489, %v486
    %v637 = vpack.c.b16 %v490, %v487
    %v638 = vpack.c.b16 %v491, %v488
    %v639 = vpack.c.b16 %v495, %v492
    %v640 = vpack.c.b16 %v496, %v493
    %v641 = vpack.c.b16 %v497, %v494
    %v642 = vpack.c.b16 %v501, %v498
    %v643 = vpack.c.b16 %v502, %v499
    %v644 = vpack.c.b16 %v503, %v500
    %v645 = vpack.c.b16 %v507, %v504
    %v646 = vpack.c.b16 %v508, %v505
    %v647 = vpack.c.b16 %v509, %v506
    %v648 = vpack.c.b16 %v513, %v510
    %v649 = vpack.c.b16 %v514, %v511
    %v650 = vpack.c.b16 %v515, %v512
    %v651 = vpack.c.b16 %v519, %v516
    %v652 = vpack.c.b16 %v520, %v517
    %v653 = vpack.c.b16 %v521, %v518
    %v654 = vpack.c.b16 %v525, %v522
    %v655 = vpack.c.b16 %v526, %v523
    %v656 = vpack.c.b16 %v527, %v524
    %v657 = vpack.c.b16 %v531, %v528
    %v658 = vpack.c.b16 %v532, %v529
    %v659 = vpack.c.b16 %v533, %v530
    %v660 = vpack.c.b16 %v537, %v534
    %v661 = vpack.c.b16 %v538, %v535
    %v662 = vpack.c.b16 %v539, %v536
    %v663 = vpack.c.b16 %v543, %v540
    %v664 = vpack.c.b16 %v544, %v541
    %v665 = vpack.c.b16 %v545, %v542
    %v666 = vpack.c.b16 %v549, %v546
    %v667 = vpack.c.b16 %v550, %v547
    %v668 = vpack.c.b16 %v551, %v548
    %v669 = vpack.c.b16 %v555, %v552
    %v670 = vpack.c.b16 %v556, %v553
    %v671 = vpack.c.b16 %v557, %v554
    %v672 = vpack.c.b16 %v561, %v558
    %v673 = vpack.c.b16 %v562, %v559
    %v674 = vpack.c.b16 %v563, %v560
    %v675 = vpack.c.b16 %v567, %v564
    %v676 = vpack.c.b16 %v568, %v565
    %v677 = vpack.c.b16 %v569, %v566
    %v678 = vpack.c.b16 %v573, %v570
    %v679 = vpack.c.b16 %v574, %v571
    %v680 = vpack.c.b16 %v575, %v572
    %v681 = vpack.c.b16 %v579, %v576
    %v682 = vpack.c.b16 %v580, %v577
    %v683 = vpack.c.b16 %v581, %v578
    %v684 = vpack.c.b16 %v585, %v582
    %v685 = vpack.c.b16 %v586, %v583
    %v686 = vpack.c.b16 %v587, %v584
    %v687 = vpack.c.b16 %v591, %v588
    %v688 = vpack.c.b16 %v592, %v589
    %v689 = vpack.c.b16 %v593, %v590
    %786 = vmatprep.subr.bf16.mxu0 %v595
    %787 = vmatpush1.bf16.msra.mxu0 %v594
    %788 = vmatprep.subr.bf16.mxu0 %v598
    %789 = vmatpush1.bf16.msra.mxu0 %v597
    %790 = vmatprep.subr.bf16.mxu0 %v601
    %791 = vmatpush1.bf16.msra.mxu0 %v600
    %792 = vmatprep.subr.bf16.mxu0 %v604
    %793 = vmatpush1.bf16.msra.mxu0 %v603
    %794 = vmatprep.subr.bf16.mxu0 %v607
    %795 = vmatpush1.bf16.msra.mxu0 %v606
    %796 = vmatprep.subr.bf16.mxu0 %v610
    %797 = vmatpush1.bf16.msra.mxu0 %v609
    %798 = vmatprep.subr.bf16.mxu0 %v613
    %799 = vmatpush1.bf16.msra.mxu0 %v612
    %800 = vmatprep.subr.bf16.mxu0 %v616
    %801 = vmatpush1.bf16.msra.mxu0 %v615
    %802 = vmatprep.subr.bf16.mxu0 %v619
    %803 = vmatpush1.bf16.msra.mxu0 %v618
    %804 = vmatprep.subr.bf16.mxu0 %v622
    %805 = vmatpush1.bf16.msra.mxu0 %v621
    %806 = vmatprep.subr.bf16.mxu0 %v625
    %807 = vmatpush1.bf16.msra.mxu0 %v624
    %808 = vmatprep.subr.bf16.mxu0 %v628
    %809 = vmatpush1.bf16.msra.mxu0 %v627
    %810 = vmatprep.subr.bf16.mxu0 %v631
    %811 = vmatpush1.bf16.msra.mxu0 %v630
    %812 = vmatprep.subr.bf16.mxu0 %v634
    %813 = vmatpush1.bf16.msra.mxu0 %v633
    %814 = vmatprep.subr.bf16.mxu0 %v637
    %815 = vmatpush1.bf16.msra.mxu0 %v636
    %816 = vmatprep.subr.bf16.mxu0 %v640
    %817 = vmatpush1.bf16.msra.mxu0 %v639
    %818 = vmatprep.mubr.bf16.mxu0 %v267
    %819 = vmatmul.mubr.bf16.gmra.mrb[0].mxu0 %v266
    %v820 = vpop.f32.mrb[0].mxu0
    %v821 = vadd.f32 %v242, %v820
    %v822 = vpop.f32.mrb[0].mxu0
    %v823 = vadd.f32 %v246, %v822
    %v824 = vpop.f32.mrb[0].mxu0
    %v825 = vadd.f32 %v242, %v824
    %v826 = vpop.f32.mrb[0].mxu0
    %v827 = vadd.f32 %v246, %v826
    %828 = vdwg.mxu0
    %829 = vmatprep.subr.bf16.mxu0 %v643
    %830 = vmatpush1.bf16.msra.mxu0 %v642
    %831 = vmatprep.subr.bf16.mxu0 %v646
    %832 = vmatpush1.bf16.msra.mxu0 %v645
    %833 = vmatprep.subr.bf16.mxu0 %v649
    %834 = vmatpush1.bf16.msra.mxu0 %v648
    %835 = vmatprep.subr.bf16.mxu0 %v652
    %836 = vmatpush1.bf16.msra.mxu0 %v651
    %837 = vmatprep.subr.bf16.mxu0 %v655
    %838 = vmatpush1.bf16.msra.mxu0 %v654
    %839 = vmatprep.subr.bf16.mxu0 %v658
    %840 = vmatpush1.bf16.msra.mxu0 %v657
    %841 = vmatprep.subr.bf16.mxu0 %v661
    %842 = vmatpush1.bf16.msra.mxu0 %v660
    %843 = vmatprep.subr.bf16.mxu0 %v664
    %844 = vmatpush1.bf16.msra.mxu0 %v663
    %845 = vmatprep.subr.bf16.mxu0 %v667
    %846 = vmatpush1.bf16.msra.mxu0 %v666
    %847 = vmatprep.subr.bf16.mxu0 %v670
    %848 = vmatpush1.bf16.msra.mxu0 %v669
    %849 = vmatprep.subr.bf16.mxu0 %v673
    %850 = vmatpush1.bf16.msra.mxu0 %v672
    %851 = vmatprep.subr.bf16.mxu0 %v676
    %852 = vmatpush1.bf16.msra.mxu0 %v675
    %853 = vmatprep.subr.bf16.mxu0 %v679
    %854 = vmatpush1.bf16.msra.mxu0 %v678
    %855 = vmatprep.subr.bf16.mxu0 %v682
    %856 = vmatpush1.bf16.msra.mxu0 %v681
    %857 = vmatprep.subr.bf16.mxu0 %v685
    %858 = vmatpush1.bf16.msra.mxu0 %v684
    %859 = vmatprep.subr.bf16.mxu0 %v688
    %860 = vmatpush1.bf16.msra.mxu0 %v687
    %861 = vmatprep.mubr.bf16.mxu0 %v269
    %862 = vmatmul.mubr.bf16.gmra.mrb[0].mxu0 %v268
    %v863 = vpop.f32.mrb[0].mxu0
    %v864 = vadd.f32 %v821, %v863
    %v865 = vpop.f32.mrb[0].mxu0
    %v866 = vadd.f32 %v823, %v865
    %v867 = vpop.f32.mrb[0].mxu0
    %v868 = vadd.f32 %v825, %v867
    %v869 = vpop.f32.mrb[0].mxu0
    %v870 = vadd.f32 %v827, %v869
    %871 = vdwg.mxu0
    %872 = vmatprep.subr.bf16.mxu0 0
    %873 = vmatpush1.bf16.msra.mxu0 %v596
    %874 = vmatprep.subr.bf16.mxu0 0
    %875 = vmatpush1.bf16.msra.mxu0 %v599
    %876 = vmatprep.subr.bf16.mxu0 0
    %877 = vmatpush1.bf16.msra.mxu0 %v602
    %878 = vmatprep.subr.bf16.mxu0 0
    %879 = vmatpush1.bf16.msra.mxu0 %v605
    %880 = vmatprep.subr.bf16.mxu0 0
    %881 = vmatpush1.bf16.msra.mxu0 %v608
    %882 = vmatprep.subr.bf16.mxu0 0
    %883 = vmatpush1.bf16.msra.mxu0 %v611
    %884 = vmatprep.subr.bf16.mxu0 0
    %885 = vmatpush1.bf16.msra.mxu0 %v614
    %886 = vmatprep.subr.bf16.mxu0 0
    %887 = vmatpush1.bf16.msra.mxu0 %v617
    %888 = vmatprep.subr.bf16.mxu0 0
    %889 = vmatpush1.bf16.msra.mxu0 %v620
    %890 = vmatprep.subr.bf16.mxu0 0
    %891 = vmatpush1.bf16.msra.mxu0 %v623
    %892 = vmatprep.subr.bf16.mxu0 0
    %893 = vmatpush1.bf16.msra.mxu0 %v626
    %894 = vmatprep.subr.bf16.mxu0 0
    %895 = vmatpush1.bf16.msra.mxu0 %v629
    %896 = vmatprep.subr.bf16.mxu0 0
    %897 = vmatpush1.bf16.msra.mxu0 %v632
    %898 = vmatprep.subr.bf16.mxu0 0
    %899 = vmatpush1.bf16.msra.mxu0 %v635
    %900 = vmatprep.subr.bf16.mxu0 0
    %901 = vmatpush1.bf16.msra.mxu0 %v638
    %902 = vmatprep.subr.bf16.mxu0 0
    %903 = vmatpush1.bf16.msra.mxu0 %v641
    %904 = vmatprep.mubr.bf16.mxu0 %v267
    %905 = vmatmul.mubr.bf16.gmra.mrb[0].mxu0 %v266
    %v906 = vpop.f32.mrb[0].mxu0
    %v907 = vadd.f32 %v250, %v906
    %v908 = vpop.f32.mrb[0].mxu0
    %v909 = vpop.f32.mrb[0].mxu0
    %v910 = vadd.f32 %v250, %v909
    %v911 = vpop.f32.mrb[0].mxu0
    %912 = vdwg.mxu0
    %913 = vmatprep.subr.bf16.mxu0 0
    %914 = vmatpush1.bf16.msra.mxu0 %v644
    %915 = vmatprep.subr.bf16.mxu0 0
    %916 = vmatpush1.bf16.msra.mxu0 %v647
    %917 = vmatprep.subr.bf16.mxu0 0
    %918 = vmatpush1.bf16.msra.mxu0 %v650
    %919 = vmatprep.subr.bf16.mxu0 0
    %920 = vmatpush1.bf16.msra.mxu0 %v653
    %921 = vmatprep.subr.bf16.mxu0 0
    %922 = vmatpush1.bf16.msra.mxu0 %v656
    %923 = vmatprep.subr.bf16.mxu0 0
    %924 = vmatpush1.bf16.msra.mxu0 %v659
    %925 = vmatprep.subr.bf16.mxu0 0
    %926 = vmatpush1.bf16.msra.mxu0 %v662
    %927 = vmatprep.subr.bf16.mxu0 0
    %928 = vmatpush1.bf16.msra.mxu0 %v665
    %929 = vmatprep.subr.bf16.mxu0 0
    %930 = vmatpush1.bf16.msra.mxu0 %v668
    %931 = vmatprep.subr.bf16.mxu0 0
    %932 = vmatpush1.bf16.msra.mxu0 %v671
    %933 = vmatprep.subr.bf16.mxu0 0
    %934 = vmatpush1.bf16.msra.mxu0 %v674
    %935 = vmatprep.subr.bf16.mxu0 0
    %936 = vmatpush1.bf16.msra.mxu0 %v677
    %937 = vmatprep.subr.bf16.mxu0 0
    %938 = vmatpush1.bf16.msra.mxu0 %v680
    %939 = vmatprep.subr.bf16.mxu0 0
    %940 = vmatpush1.bf16.msra.mxu0 %v683
    %941 = vmatprep.subr.bf16.mxu0 0
    %942 = vmatpush1.bf16.msra.mxu0 %v686
    %943 = vmatprep.subr.bf16.mxu0 0
    %944 = vmatpush1.bf16.msra.mxu0 %v689
    %945 = vmatprep.mubr.bf16.mxu0 %v269
    %946 = vmatmul.mubr.bf16.gmra.mrb[0].mxu0 %v268
    %v947 = vpop.f32.mrb[0].mxu0
    %v948 = vadd.f32 %v907, %v947
    %v949 = vpop.f32.mrb[0].mxu0
    %v950 = vpop.f32.mrb[0].mxu0
    %v951 = vadd.f32 %v910, %v950
    %v952 = vpop.f32.mrb[0].mxu0
    %953 = vdwg.mxu0
    %v954 = vxor.u32 %v864, 2147483648
    %v955 = vxor.u32 %v868, 2147483648
    %v956 = vmul.f32 %v954, 1.442695
    %v957 = vpow.pop %v956
    %v958 = vmul.f32 %v955, 1.442695
    %v959 = vpow.pop %v958
    %v960 = vadd.f32 %v957, 1.0
    %v961 = vadd.f32 %v959, 1.0
    %v962 = vrcp.pop %v960
    %v963 = vmul.f32 1.0, %v962
    %v964 = vrcp.pop %v961
    %v965 = vmul.f32 1.0, %v964
    %v966 = vtanh.pop %v866
    %v967 = vtanh.pop %v870
    %v968 = vxor.u32 %v948, 2147483648
    %v969 = vxor.u32 %v951, 2147483648
    %v970 = vmul.f32 %v968, 1.442695
    %v971 = vpow.pop %v970
    %v972 = vmul.f32 %v969, 1.442695
    %v973 = vpow.pop %v972
    %v974 = vadd.f32 %v971, 1.0
    %v975 = vadd.f32 %v973, 1.0
    %v976 = vrcp.pop %v974
    %v977 = vmul.f32 1.0, %v976
    %v978 = vrcp.pop %v975
    %v979 = vmul.f32 1.0, %v978
    %v980 = vmul.f32 %v963, %v966
    %v981 = vmul.f32 %v965, %v967
    %v982 = vtanh.pop %v980
    %v983 = vtanh.pop %v981
    %v984 = vmul.f32 %v977, %v982
    %v985 = vmul.f32 %v979, %v983
    %v986 = vmul.f32 %v984, 0.2
    %v987 = vmul.f32 %v985, 0.2
    %v988 = vmax.f32 %v984, %v986
    %v989 = vmax.f32 %v985, %v987
    %v990 = vpack.c.bf16 %v989, %v988
    %v991 = vld [vmem:[#allocation6] sm:$0xf]
    %v992 = vld [vmem:[#allocation6 + $0x4] sm:$0xf]
    %v993 = vld [vmem:[#allocation6 + $0x8] sm:$0xf]
    %v994 = vld [vmem:[#allocation6 + $0xc] sm:$0xf]
    %v995 = vld [vmem:[#allocation6 + $0x10] sm:$0xf]
    %v996 = vld [vmem:[#allocation6 + $0x14] sm:$0xf]
    %v997 = vld [vmem:[#allocation6 + $0x18] sm:$0xf]
    %v998 = vld [vmem:[#allocation6 + $0x1c] sm:$0xf]
    %v999 = vld [vmem:[#allocation6 + $0x20] sm:$0xf]
    %v1000 = vld [vmem:[#allocation6 + $0x24] sm:$0xf]
    %v1001 = vld [vmem:[#allocation6 + $0x28] sm:$0xf]
    %v1002 = vld [vmem:[#allocation6 + $0x2c] sm:$0xf]
    %v1003 = vld [vmem:[#allocation6 + $0x30] sm:$0xf]
    %v1004 = vld [vmem:[#allocation6 + $0x34] sm:$0xf]
    %v1005 = vld [vmem:[#allocation6 + $0x38] sm:$0xf]
    %v1006 = vld [vmem:[#allocation6 + $0x3c] sm:$0xf]
    %v1007 = vld [vmem:[%s0 + $0x10] sm:$0xff]
    %v1008 = vld [vmem:[%s0 + $0x18] sm:$0xff]
    %v1009 = vld [vmem:[%s0 + $0x50] sm:$0xff]
    %v1010 = vld [vmem:[%s0 + $0x58] sm:$0xff]
    %s1011 = scalar_lea.vmem [#allocation2], 768
    %v1012 = vld [vmem:[%s1011] sm:$0xff]
    %v1013 = vld [vmem:[%s1011 + $0x8] sm:$0xf]
    %v1014 = vld [vmem:[%s1011 + $0xc] sm:$0xff]
    %v1015 = vld [vmem:[%s1011 + $0x14] sm:$0xf]
    %v1016 = vld [vmem:[%s1011 + $0x18] sm:$0xff]
    %v1017 = vld [vmem:[%s1011 + $0x20] sm:$0xf]
    %v1018 = vld [vmem:[%s1011 + $0x24] sm:$0xff]
    %v1019 = vld [vmem:[%s1011 + $0x2c] sm:$0xf]
    %v1020 = vld [vmem:[%s1011 + $0x30] sm:$0xff]
    %v1021 = vld [vmem:[%s1011 + $0x38] sm:$0xf]
    %v1022 = vld [vmem:[%s1011 + $0x3c] sm:$0xff]
    %v1023 = vld [vmem:[%s1011 + $0x44] sm:$0xf]
    %v1024 = vld [vmem:[%s1011 + $0x48] sm:$0xff]
    %v1025 = vld [vmem:[%s1011 + $0x50] sm:$0xf]
    %v1026 = vld [vmem:[%s1011 + $0x54] sm:$0xff]
    %v1027 = vld [vmem:[%s1011 + $0x5c] sm:$0xf]
    %v1028 = vld [vmem:[%s1011 + $0x60] sm:$0xff]
    %v1029 = vld [vmem:[%s1011 + $0x68] sm:$0xf]
    %v1030 = vld [vmem:[%s1011 + $0x6c] sm:$0xff]
    %v1031 = vld [vmem:[%s1011 + $0x74] sm:$0xf]
    %v1032 = vld [vmem:[%s1011 + $0x78] sm:$0xff]
    %v1033 = vld [vmem:[%s1011 + $0x80] sm:$0xf]
    %v1034 = vld [vmem:[%s1011 + $0x84] sm:$0xff]
    %v1035 = vld [vmem:[%s1011 + $0x8c] sm:$0xf]
    %v1036 = vld [vmem:[%s1011 + $0x90] sm:$0xff]
    %v1037 = vld [vmem:[%s1011 + $0x98] sm:$0xf]
    %v1038 = vld [vmem:[%s1011 + $0x9c] sm:$0xff]
    %v1039 = vld [vmem:[%s1011 + $0xa4] sm:$0xf]
    %v1040 = vld [vmem:[%s1011 + $0xa8] sm:$0xff]
    %v1041 = vld [vmem:[%s1011 + $0xb0] sm:$0xf]
    %v1042 = vld [vmem:[%s1011 + $0xb4] sm:$0xff]
    %v1043 = vld [vmem:[%s1011 + $0xbc] sm:$0xf]
    %v1044 = vld [vmem:[%s1011 + $0xc0] sm:$0xff]
    %v1045 = vld [vmem:[%s1011 + $0xc8] sm:$0xf]
    %v1046 = vld [vmem:[%s1011 + $0xcc] sm:$0xff]
    %v1047 = vld [vmem:[%s1011 + $0xd4] sm:$0xf]
    %v1048 = vld [vmem:[%s1011 + $0xd8] sm:$0xff]
    %v1049 = vld [vmem:[%s1011 + $0xe0] sm:$0xf]
    %v1050 = vld [vmem:[%s1011 + $0xe4] sm:$0xff]
    %v1051 = vld [vmem:[%s1011 + $0xec] sm:$0xf]
    %v1052 = vld [vmem:[%s1011 + $0xf0] sm:$0xff]
    %v1053 = vld [vmem:[%s1011 + $0xf8] sm:$0xf]
    %v1054 = vld [vmem:[%s1011 + $0xfc] sm:$0xff]
    %v1055 = vld [vmem:[%s1011 + $0x104] sm:$0xf]
    %v1056 = vld [vmem:[%s1011 + $0x108] sm:$0xff]
    %v1057 = vld [vmem:[%s1011 + $0x110] sm:$0xf]
    %v1058 = vld [vmem:[%s1011 + $0x114] sm:$0xff]
    %v1059 = vld [vmem:[%s1011 + $0x11c] sm:$0xf]
    %v1060 = vld [vmem:[%s1011 + $0x120] sm:$0xff]
    %v1061 = vld [vmem:[%s1011 + $0x128] sm:$0xf]
    %v1062 = vld [vmem:[%s1011 + $0x12c] sm:$0xff]
    %v1063 = vld [vmem:[%s1011 + $0x134] sm:$0xf]
    %v1064 = vld [vmem:[%s1011 + $0x138] sm:$0xff]
    %v1065 = vld [vmem:[%s1011 + $0x140] sm:$0xf]
    %v1066 = vld [vmem:[%s1011 + $0x144] sm:$0xff]
    %v1067 = vld [vmem:[%s1011 + $0x14c] sm:$0xf]
    %v1068 = vld [vmem:[%s1011 + $0x150] sm:$0xff]
    %v1069 = vld [vmem:[%s1011 + $0x158] sm:$0xf]
    %v1070 = vld [vmem:[%s1011 + $0x15c] sm:$0xff]
    %v1071 = vld [vmem:[%s1011 + $0x164] sm:$0xf]
    %v1072 = vld [vmem:[%s1011 + $0x168] sm:$0xff]
    %v1073 = vld [vmem:[%s1011 + $0x170] sm:$0xf]
    %v1074 = vld [vmem:[%s1011 + $0x174] sm:$0xff]
    %v1075 = vld [vmem:[%s1011 + $0x17c] sm:$0xf]
    %v1076 = vld [vmem:[%s1011 + $0x180] sm:$0xff]
    %v1077 = vld [vmem:[%s1011 + $0x188] sm:$0xf]
    %v1078 = vld [vmem:[%s1011 + $0x18c] sm:$0xff]
    %v1079 = vld [vmem:[%s1011 + $0x194] sm:$0xf]
    %v1080 = vld [vmem:[%s1011 + $0x198] sm:$0xff]
    %v1081 = vld [vmem:[%s1011 + $0x1a0] sm:$0xf]
    %v1082 = vld [vmem:[%s1011 + $0x1a4] sm:$0xff]
    %v1083 = vld [vmem:[%s1011 + $0x1ac] sm:$0xf]
    %v1084 = vld [vmem:[%s1011 + $0x1b0] sm:$0xff]
    %v1085 = vld [vmem:[%s1011 + $0x1b8] sm:$0xf]
    %v1086 = vld [vmem:[%s1011 + $0x1bc] sm:$0xff]
    %v1087 = vld [vmem:[%s1011 + $0x1c4] sm:$0xf]
    %v1088 = vld [vmem:[%s1011 + $0x1c8] sm:$0xff]
    %v1089 = vld [vmem:[%s1011 + $0x1d0] sm:$0xf]
    %v1090 = vld [vmem:[%s1011 + $0x1d4] sm:$0xff]
    %v1091 = vld [vmem:[%s1011 + $0x1dc] sm:$0xf]
    %v1092 = vld [vmem:[%s1011 + $0x1e0] sm:$0xff]
    %v1093 = vld [vmem:[%s1011 + $0x1e8] sm:$0xf]
    %v1094 = vld [vmem:[%s1011 + $0x1ec] sm:$0xff]
    %v1095 = vld [vmem:[%s1011 + $0x1f4] sm:$0xf]
    %v1096 = vld [vmem:[%s1011 + $0x1f8] sm:$0xff]
    %v1097 = vld [vmem:[%s1011 + $0x200] sm:$0xf]
    %v1098 = vld [vmem:[%s1011 + $0x204] sm:$0xff]
    %v1099 = vld [vmem:[%s1011 + $0x20c] sm:$0xf]
    %v1100 = vld [vmem:[%s1011 + $0x210] sm:$0xff]
    %v1101 = vld [vmem:[%s1011 + $0x218] sm:$0xf]
    %v1102 = vld [vmem:[%s1011 + $0x21c] sm:$0xff]
    %v1103 = vld [vmem:[%s1011 + $0x224] sm:$0xf]
    %v1104 = vld [vmem:[%s1011 + $0x228] sm:$0xff]
    %v1105 = vld [vmem:[%s1011 + $0x230] sm:$0xf]
    %v1106 = vld [vmem:[%s1011 + $0x234] sm:$0xff]
    %v1107 = vld [vmem:[%s1011 + $0x23c] sm:$0xf]
    %v1108 = vld [vmem:[%s1011 + $0x240] sm:$0xff]
    %v1109 = vld [vmem:[%s1011 + $0x248] sm:$0xf]
    %v1110 = vld [vmem:[%s1011 + $0x24c] sm:$0xff]
    %v1111 = vld [vmem:[%s1011 + $0x254] sm:$0xf]
    %v1112 = vld [vmem:[%s1011 + $0x258] sm:$0xff]
    %v1113 = vld [vmem:[%s1011 + $0x260] sm:$0xf]
    %v1114 = vld [vmem:[%s1011 + $0x264] sm:$0xff]
    %v1115 = vld [vmem:[%s1011 + $0x26c] sm:$0xf]
    %v1116 = vld [vmem:[%s1011 + $0x270] sm:$0xff]
    %v1117 = vld [vmem:[%s1011 + $0x278] sm:$0xf]
    %v1118 = vld [vmem:[%s1011 + $0x27c] sm:$0xff]
    %v1119 = vld [vmem:[%s1011 + $0x284] sm:$0xf]
    %v1120 = vld [vmem:[%s1011 + $0x288] sm:$0xff]
    %v1121 = vld [vmem:[%s1011 + $0x290] sm:$0xf]
    %v1122 = vld [vmem:[%s1011 + $0x294] sm:$0xff]
    %v1123 = vld [vmem:[%s1011 + $0x29c] sm:$0xf]
    %v1124 = vld [vmem:[%s1011 + $0x2a0] sm:$0xff]
    %v1125 = vld [vmem:[%s1011 + $0x2a8] sm:$0xf]
    %v1126 = vld [vmem:[%s1011 + $0x2ac] sm:$0xff]
    %v1127 = vld [vmem:[%s1011 + $0x2b4] sm:$0xf]
    %v1128 = vld [vmem:[%s1011 + $0x2b8] sm:$0xff]
    %v1129 = vld [vmem:[%s1011 + $0x2c0] sm:$0xf]
    %v1130 = vld [vmem:[%s1011 + $0x2c4] sm:$0xff]
    %v1131 = vld [vmem:[%s1011 + $0x2cc] sm:$0xf]
    %v1132 = vld [vmem:[%s1011 + $0x2d0] sm:$0xff]
    %v1133 = vld [vmem:[%s1011 + $0x2d8] sm:$0xf]
    %v1134 = vld [vmem:[%s1011 + $0x2dc] sm:$0xff]
    %v1135 = vld [vmem:[%s1011 + $0x2e4] sm:$0xf]
    %v1136 = vld [vmem:[%s1011 + $0x2e8] sm:$0xff]
    %v1137 = vld [vmem:[%s1011 + $0x2f0] sm:$0xf]
    %v1138 = vld [vmem:[%s1011 + $0x2f4] sm:$0xff]
    %v1139 = vld [vmem:[%s1011 + $0x2fc] sm:$0xf]
    %s1140 = scalar_lea.vmem [#allocation4], 3
    %v1141 = vld [vmem:[%s1140] sm:$0x7]
    %v1143 = vlaneseq
    %v1144 = vshrl.u32 %v1143, 7
    %v1145 = vsub.s32 0, %v1144
    %v1146 = vrot.slane %v1141, %v1145
    %v1147 = vlaneseq
    %v1148 = vshrl.u32 %v1147, 7
    %v1149 = vsub.s32 1, %v1148
    %v1150 = vrot.slane %v1141, %v1149
    %v1151 = vlaneseq
    %v1152 = vshrl.u32 %v1151, 7
    %v1153 = vsub.s32 2, %v1152
    %v1154 = vrot.slane %v1141, %v1153
    %v1162 = vunpack.c.l.b16 %v1007
    %v1163 = vunpack.c.h.b16 %v1007
    %v1164 = vunpack.c.l.b16 %v1008
    %v1165 = vunpack.c.h.b16 %v1008
    %v1166 = vunpack.c.l.b16 %v1009
    %v1167 = vunpack.c.h.b16 %v1009
    %v1168 = vunpack.c.l.b16 %v1010
    %v1169 = vunpack.c.h.b16 %v1010
    %v1170 = vpack.c.b16 %v1166, %v1162
    %v1171 = vpack.c.b16 %v1167, %v1163
    %v1172 = vpack.c.b16 %v1168, %v1164
    %v1173 = vpack.c.b16 %v1169, %v1165
    %v1306 = vunpack.c.l.b16 %v1012
    %v1307 = vunpack.c.h.b16 %v1012
    %v1308 = vunpack.c.l.b16 %v1013
    %v1309 = vunpack.c.l.b16 %v1014
    %v1310 = vunpack.c.h.b16 %v1014
    %v1311 = vunpack.c.l.b16 %v1015
    %v1312 = vunpack.c.l.b16 %v1016
    %v1313 = vunpack.c.h.b16 %v1016
    %v1314 = vunpack.c.l.b16 %v1017
    %v1315 = vunpack.c.l.b16 %v1018
    %v1316 = vunpack.c.h.b16 %v1018
    %v1317 = vunpack.c.l.b16 %v1019
    %v1318 = vunpack.c.l.b16 %v1020
    %v1319 = vunpack.c.h.b16 %v1020
    %v1320 = vunpack.c.l.b16 %v1021
    %v1321 = vunpack.c.l.b16 %v1022
    %v1322 = vunpack.c.h.b16 %v1022
    %v1323 = vunpack.c.l.b16 %v1023
    %v1324 = vunpack.c.l.b16 %v1024
    %v1325 = vunpack.c.h.b16 %v1024
    %v1326 = vunpack.c.l.b16 %v1025
    %v1327 = vunpack.c.l.b16 %v1026
    %v1328 = vunpack.c.h.b16 %v1026
    %v1329 = vunpack.c.l.b16 %v1027
    %v1330 = vunpack.c.l.b16 %v1028
    %v1331 = vunpack.c.h.b16 %v1028
    %v1332 = vunpack.c.l.b16 %v1029
    %v1333 = vunpack.c.l.b16 %v1030
    %v1334 = vunpack.c.h.b16 %v1030
    %v1335 = vunpack.c.l.b16 %v1031
    %v1336 = vunpack.c.l.b16 %v1032
    %v1337 = vunpack.c.h.b16 %v1032
    %v1338 = vunpack.c.l.b16 %v1033
    %v1339 = vunpack.c.l.b16 %v1034
    %v1340 = vunpack.c.h.b16 %v1034
    %v1341 = vunpack.c.l.b16 %v1035
    %v1342 = vunpack.c.l.b16 %v1036
    %v1343 = vunpack.c.h.b16 %v1036
    %v1344 = vunpack.c.l.b16 %v1037
    %v1345 = vunpack.c.l.b16 %v1038
    %v1346 = vunpack.c.h.b16 %v1038
    %v1347 = vunpack.c.l.b16 %v1039
    %v1348 = vunpack.c.l.b16 %v1040
    %v1349 = vunpack.c.h.b16 %v1040
    %v1350 = vunpack.c.l.b16 %v1041
    %v1351 = vunpack.c.l.b16 %v1042
    %v1352 = vunpack.c.h.b16 %v1042
    %v1353 = vunpack.c.l.b16 %v1043
    %v1354 = vunpack.c.l.b16 %v1044
    %v1355 = vunpack.c.h.b16 %v1044
    %v1356 = vunpack.c.l.b16 %v1045
    %v1357 = vunpack.c.l.b16 %v1046
    %v1358 = vunpack.c.h.b16 %v1046
    %v1359 = vunpack.c.l.b16 %v1047
    %v1360 = vunpack.c.l.b16 %v1048
    %v1361 = vunpack.c.h.b16 %v1048
    %v1362 = vunpack.c.l.b16 %v1049
    %v1363 = vunpack.c.l.b16 %v1050
    %v1364 = vunpack.c.h.b16 %v1050
    %v1365 = vunpack.c.l.b16 %v1051
    %v1366 = vunpack.c.l.b16 %v1052
    %v1367 = vunpack.c.h.b16 %v1052
    %v1368 = vunpack.c.l.b16 %v1053
    %v1369 = vunpack.c.l.b16 %v1054
    %v1370 = vunpack.c.h.b16 %v1054
    %v1371 = vunpack.c.l.b16 %v1055
    %v1372 = vunpack.c.l.b16 %v1056
    %v1373 = vunpack.c.h.b16 %v1056
    %v1374 = vunpack.c.l.b16 %v1057
    %v1375 = vunpack.c.l.b16 %v1058
    %v1376 = vunpack.c.h.b16 %v1058
    %v1377 = vunpack.c.l.b16 %v1059
    %v1378 = vunpack.c.l.b16 %v1060
    %v1379 = vunpack.c.h.b16 %v1060
    %v1380 = vunpack.c.l.b16 %v1061
    %v1381 = vunpack.c.l.b16 %v1062
    %v1382 = vunpack.c.h.b16 %v1062
    %v1383 = vunpack.c.l.b16 %v1063
    %v1384 = vunpack.c.l.b16 %v1064
    %v1385 = vunpack.c.h.b16 %v1064
    %v1386 = vunpack.c.l.b16 %v1065
    %v1387 = vunpack.c.l.b16 %v1066
    %v1388 = vunpack.c.h.b16 %v1066
    %v1389 = vunpack.c.l.b16 %v1067
    %v1390 = vunpack.c.l.b16 %v1068
    %v1391 = vunpack.c.h.b16 %v1068
    %v1392 = vunpack.c.l.b16 %v1069
    %v1393 = vunpack.c.l.b16 %v1070
    %v1394 = vunpack.c.h.b16 %v1070
    %v1395 = vunpack.c.l.b16 %v1071
    %v1396 = vunpack.c.l.b16 %v1072
    %v1397 = vunpack.c.h.b16 %v1072
    %v1398 = vunpack.c.l.b16 %v1073
    %v1399 = vunpack.c.l.b16 %v1074
    %v1400 = vunpack.c.h.b16 %v1074
    %v1401 = vunpack.c.l.b16 %v1075
    %v1402 = vunpack.c.l.b16 %v1076
    %v1403 = vunpack.c.h.b16 %v1076
    %v1404 = vunpack.c.l.b16 %v1077
    %v1405 = vunpack.c.l.b16 %v1078
    %v1406 = vunpack.c.h.b16 %v1078
    %v1407 = vunpack.c.l.b16 %v1079
    %v1408 = vunpack.c.l.b16 %v1080
    %v1409 = vunpack.c.h.b16 %v1080
    %v1410 = vunpack.c.l.b16 %v1081
    %v1411 = vunpack.c.l.b16 %v1082
    %v1412 = vunpack.c.h.b16 %v1082
    %v1413 = vunpack.c.l.b16 %v1083
    %v1414 = vunpack.c.l.b16 %v1084
    %v1415 = vunpack.c.h.b16 %v1084
    %v1416 = vunpack.c.l.b16 %v1085
    %v1417 = vunpack.c.l.b16 %v1086
    %v1418 = vunpack.c.h.b16 %v1086
    %v1419 = vunpack.c.l.b16 %v1087
    %v1420 = vunpack.c.l.b16 %v1088
    %v1421 = vunpack.c.h.b16 %v1088
    %v1422 = vunpack.c.l.b16 %v1089
    %v1423 = vunpack.c.l.b16 %v1090
    %v1424 = vunpack.c.h.b16 %v1090
    %v1425 = vunpack.c.l.b16 %v1091
    %v1426 = vunpack.c.l.b16 %v1092
    %v1427 = vunpack.c.h.b16 %v1092
    %v1428 = vunpack.c.l.b16 %v1093
    %v1429 = vunpack.c.l.b16 %v1094
    %v1430 = vunpack.c.h.b16 %v1094
    %v1431 = vunpack.c.l.b16 %v1095
    %v1432 = vunpack.c.l.b16 %v1096
    %v1433 = vunpack.c.h.b16 %v1096
    %v1434 = vunpack.c.l.b16 %v1097
    %v1435 = vunpack.c.l.b16 %v1098
    %v1436 = vunpack.c.h.b16 %v1098
    %v1437 = vunpack.c.l.b16 %v1099
    %v1438 = vunpack.c.l.b16 %v1100
    %v1439 = vunpack.c.h.b16 %v1100
    %v1440 = vunpack.c.l.b16 %v1101
    %v1441 = vunpack.c.l.b16 %v1102
    %v1442 = vunpack.c.h.b16 %v1102
    %v1443 = vunpack.c.l.b16 %v1103
    %v1444 = vunpack.c.l.b16 %v1104
    %v1445 = vunpack.c.h.b16 %v1104
    %v1446 = vunpack.c.l.b16 %v1105
    %v1447 = vunpack.c.l.b16 %v1106
    %v1448 = vunpack.c.h.b16 %v1106
    %v1449 = vunpack.c.l.b16 %v1107
    %v1450 = vunpack.c.l.b16 %v1108
    %v1451 = vunpack.c.h.b16 %v1108
    %v1452 = vunpack.c.l.b16 %v1109
    %v1453 = vunpack.c.l.b16 %v1110
    %v1454 = vunpack.c.h.b16 %v1110
    %v1455 = vunpack.c.l.b16 %v1111
    %v1456 = vunpack.c.l.b16 %v1112
    %v1457 = vunpack.c.h.b16 %v1112
    %v1458 = vunpack.c.l.b16 %v1113
    %v1459 = vunpack.c.l.b16 %v1114
    %v1460 = vunpack.c.h.b16 %v1114
    %v1461 = vunpack.c.l.b16 %v1115
    %v1462 = vunpack.c.l.b16 %v1116
    %v1463 = vunpack.c.h.b16 %v1116
    %v1464 = vunpack.c.l.b16 %v1117
    %v1465 = vunpack.c.l.b16 %v1118
    %v1466 = vunpack.c.h.b16 %v1118
    %v1467 = vunpack.c.l.b16 %v1119
    %v1468 = vunpack.c.l.b16 %v1120
    %v1469 = vunpack.c.h.b16 %v1120
    %v1470 = vunpack.c.l.b16 %v1121
    %v1471 = vunpack.c.l.b16 %v1122
    %v1472 = vunpack.c.h.b16 %v1122
    %v1473 = vunpack.c.l.b16 %v1123
    %v1474 = vunpack.c.l.b16 %v1124
    %v1475 = vunpack.c.h.b16 %v1124
    %v1476 = vunpack.c.l.b16 %v1125
    %v1477 = vunpack.c.l.b16 %v1126
    %v1478 = vunpack.c.h.b16 %v1126
    %v1479 = vunpack.c.l.b16 %v1127
    %v1480 = vunpack.c.l.b16 %v1128
    %v1481 = vunpack.c.h.b16 %v1128
    %v1482 = vunpack.c.l.b16 %v1129
    %v1483 = vunpack.c.l.b16 %v1130
    %v1484 = vunpack.c.h.b16 %v1130
    %v1485 = vunpack.c.l.b16 %v1131
    %v1486 = vunpack.c.l.b16 %v1132
    %v1487 = vunpack.c.h.b16 %v1132
    %v1488 = vunpack.c.l.b16 %v1133
    %v1489 = vunpack.c.l.b16 %v1134
    %v1490 = vunpack.c.h.b16 %v1134
    %v1491 = vunpack.c.l.b16 %v1135
    %v1492 = vunpack.c.l.b16 %v1136
    %v1493 = vunpack.c.h.b16 %v1136
    %v1494 = vunpack.c.l.b16 %v1137
    %v1495 = vunpack.c.l.b16 %v1138
    %v1496 = vunpack.c.h.b16 %v1138
    %v1497 = vunpack.c.l.b16 %v1139
    %v1498 = vpack.c.b16 %v1309, %v1306
    %v1499 = vpack.c.b16 %v1310, %v1307
    %v1500 = vpack.c.b16 %v1311, %v1308
    %v1501 = vpack.c.b16 %v1315, %v1312
    %v1502 = vpack.c.b16 %v1316, %v1313
    %v1503 = vpack.c.b16 %v1317, %v1314
    %v1504 = vpack.c.b16 %v1321, %v1318
    %v1505 = vpack.c.b16 %v1322, %v1319
    %v1506 = vpack.c.b16 %v1323, %v1320
    %v1507 = vpack.c.b16 %v1327, %v1324
    %v1508 = vpack.c.b16 %v1328, %v1325
    %v1509 = vpack.c.b16 %v1329, %v1326
    %v1510 = vpack.c.b16 %v1333, %v1330
    %v1511 = vpack.c.b16 %v1334, %v1331
    %v1512 = vpack.c.b16 %v1335, %v1332
    %v1513 = vpack.c.b16 %v1339, %v1336
    %v1514 = vpack.c.b16 %v1340, %v1337
    %v1515 = vpack.c.b16 %v1341, %v1338
    %v1516 = vpack.c.b16 %v1345, %v1342
    %v1517 = vpack.c.b16 %v1346, %v1343
    %v1518 = vpack.c.b16 %v1347, %v1344
    %v1519 = vpack.c.b16 %v1351, %v1348
    %v1520 = vpack.c.b16 %v1352, %v1349
    %v1521 = vpack.c.b16 %v1353, %v1350
    %v1522 = vpack.c.b16 %v1357, %v1354
    %v1523 = vpack.c.b16 %v1358, %v1355
    %v1524 = vpack.c.b16 %v1359, %v1356
    %v1525 = vpack.c.b16 %v1363, %v1360
    %v1526 = vpack.c.b16 %v1364, %v1361
    %v1527 = vpack.c.b16 %v1365, %v1362
    %v1528 = vpack.c.b16 %v1369, %v1366
    %v1529 = vpack.c.b16 %v1370, %v1367
    %v1530 = vpack.c.b16 %v1371, %v1368
    %v1531 = vpack.c.b16 %v1375, %v1372
    %v1532 = vpack.c.b16 %v1376, %v1373
    %v1533 = vpack.c.b16 %v1377, %v1374
    %v1534 = vpack.c.b16 %v1381, %v1378
    %v1535 = vpack.c.b16 %v1382, %v1379
    %v1536 = vpack.c.b16 %v1383, %v1380
    %v1537 = vpack.c.b16 %v1387, %v1384
    %v1538 = vpack.c.b16 %v1388, %v1385
    %v1539 = vpack.c.b16 %v1389, %v1386
    %v1540 = vpack.c.b16 %v1393, %v1390
    %v1541 = vpack.c.b16 %v1394, %v1391
    %v1542 = vpack.c.b16 %v1395, %v1392
    %v1543 = vpack.c.b16 %v1399, %v1396
    %v1544 = vpack.c.b16 %v1400, %v1397
    %v1545 = vpack.c.b16 %v1401, %v1398
    %v1546 = vpack.c.b16 %v1405, %v1402
    %v1547 = vpack.c.b16 %v1406, %v1403
    %v1548 = vpack.c.b16 %v1407, %v1404
    %v1549 = vpack.c.b16 %v1411, %v1408
    %v1550 = vpack.c.b16 %v1412, %v1409
    %v1551 = vpack.c.b16 %v1413, %v1410
    %v1552 = vpack.c.b16 %v1417, %v1414
    %v1553 = vpack.c.b16 %v1418, %v1415
    %v1554 = vpack.c.b16 %v1419, %v1416
    %v1555 = vpack.c.b16 %v1423, %v1420
    %v1556 = vpack.c.b16 %v1424, %v1421
    %v1557 = vpack.c.b16 %v1425, %v1422
    %v1558 = vpack.c.b16 %v1429, %v1426
    %v1559 = vpack.c.b16 %v1430, %v1427
    %v1560 = vpack.c.b16 %v1431, %v1428
    %v1561 = vpack.c.b16 %v1435, %v1432
    %v1562 = vpack.c.b16 %v1436, %v1433
    %v1563 = vpack.c.b16 %v1437, %v1434
    %v1564 = vpack.c.b16 %v1441, %v1438
    %v1565 = vpack.c.b16 %v1442, %v1439
    %v1566 = vpack.c.b16 %v1443, %v1440
    %v1567 = vpack.c.b16 %v1447, %v1444
    %v1568 = vpack.c.b16 %v1448, %v1445
    %v1569 = vpack.c.b16 %v1449, %v1446
    %v1570 = vpack.c.b16 %v1453, %v1450
    %v1571 = vpack.c.b16 %v1454, %v1451
    %v1572 = vpack.c.b16 %v1455, %v1452
    %v1573 = vpack.c.b16 %v1459, %v1456
    %v1574 = vpack.c.b16 %v1460, %v1457
    %v1575 = vpack.c.b16 %v1461, %v1458
    %v1576 = vpack.c.b16 %v1465, %v1462
    %v1577 = vpack.c.b16 %v1466, %v1463
    %v1578 = vpack.c.b16 %v1467, %v1464
    %v1579 = vpack.c.b16 %v1471, %v1468
    %v1580 = vpack.c.b16 %v1472, %v1469
    %v1581 = vpack.c.b16 %v1473, %v1470
    %v1582 = vpack.c.b16 %v1477, %v1474
    %v1583 = vpack.c.b16 %v1478, %v1475
    %v1584 = vpack.c.b16 %v1479, %v1476
    %v1585 = vpack.c.b16 %v1483, %v1480
    %v1586 = vpack.c.b16 %v1484, %v1481
    %v1587 = vpack.c.b16 %v1485, %v1482
    %v1588 = vpack.c.b16 %v1489, %v1486
    %v1589 = vpack.c.b16 %v1490, %v1487
    %v1590 = vpack.c.b16 %v1491, %v1488
    %v1591 = vpack.c.b16 %v1495, %v1492
    %v1592 = vpack.c.b16 %v1496, %v1493
    %v1593 = vpack.c.b16 %v1497, %v1494
    %1690 = vmatprep.subr.bf16.mxu0 %v1499
    %1691 = vmatpush1.bf16.msra.mxu0 %v1498
    %1692 = vmatprep.subr.bf16.mxu0 %v1502
    %1693 = vmatpush1.bf16.msra.mxu0 %v1501
    %1694 = vmatprep.subr.bf16.mxu0 %v1505
    %1695 = vmatpush1.bf16.msra.mxu0 %v1504
    %1696 = vmatprep.subr.bf16.mxu0 %v1508
    %1697 = vmatpush1.bf16.msra.mxu0 %v1507
    %1698 = vmatprep.subr.bf16.mxu0 %v1511
    %1699 = vmatpush1.bf16.msra.mxu0 %v1510
    %1700 = vmatprep.subr.bf16.mxu0 %v1514
    %1701 = vmatpush1.bf16.msra.mxu0 %v1513
    %1702 = vmatprep.subr.bf16.mxu0 %v1517
    %1703 = vmatpush1.bf16.msra.mxu0 %v1516
    %1704 = vmatprep.subr.bf16.mxu0 %v1520
    %1705 = vmatpush1.bf16.msra.mxu0 %v1519
    %1706 = vmatprep.subr.bf16.mxu0 %v1523
    %1707 = vmatpush1.bf16.msra.mxu0 %v1522
    %1708 = vmatprep.subr.bf16.mxu0 %v1526
    %1709 = vmatpush1.bf16.msra.mxu0 %v1525
    %1710 = vmatprep.subr.bf16.mxu0 %v1529
    %1711 = vmatpush1.bf16.msra.mxu0 %v1528
    %1712 = vmatprep.subr.bf16.mxu0 %v1532
    %1713 = vmatpush1.bf16.msra.mxu0 %v1531
    %1714 = vmatprep.subr.bf16.mxu0 %v1535
    %1715 = vmatpush1.bf16.msra.mxu0 %v1534
    %1716 = vmatprep.subr.bf16.mxu0 %v1538
    %1717 = vmatpush1.bf16.msra.mxu0 %v1537
    %1718 = vmatprep.subr.bf16.mxu0 %v1541
    %1719 = vmatpush1.bf16.msra.mxu0 %v1540
    %1720 = vmatprep.subr.bf16.mxu0 %v1544
    %1721 = vmatpush1.bf16.msra.mxu0 %v1543
    %1722 = vmatprep.mubr.bf16.mxu0 %v1171
    %1723 = vmatmul.mubr.bf16.gmra.mrb[0].mxu0 %v1170
    %v1724 = vpop.f32.mrb[0].mxu0
    %v1725 = vadd.f32 %v1146, %v1724
    %v1726 = vpop.f32.mrb[0].mxu0
    %v1727 = vadd.f32 %v1150, %v1726
    %v1728 = vpop.f32.mrb[0].mxu0
    %v1729 = vadd.f32 %v1146, %v1728
    %v1730 = vpop.f32.mrb[0].mxu0
    %v1731 = vadd.f32 %v1150, %v1730
    %1732 = vdwg.mxu0
    %1733 = vmatprep.subr.bf16.mxu0 %v1547
    %1734 = vmatpush1.bf16.msra.mxu0 %v1546
    %1735 = vmatprep.subr.bf16.mxu0 %v1550
    %1736 = vmatpush1.bf16.msra.mxu0 %v1549
    %1737 = vmatprep.subr.bf16.mxu0 %v1553
    %1738 = vmatpush1.bf16.msra.mxu0 %v1552
    %1739 = vmatprep.subr.bf16.mxu0 %v1556
    %1740 = vmatpush1.bf16.msra.mxu0 %v1555
    %1741 = vmatprep.subr.bf16.mxu0 %v1559
    %1742 = vmatpush1.bf16.msra.mxu0 %v1558
    %1743 = vmatprep.subr.bf16.mxu0 %v1562
    %1744 = vmatpush1.bf16.msra.mxu0 %v1561
    %1745 = vmatprep.subr.bf16.mxu0 %v1565
    %1746 = vmatpush1.bf16.msra.mxu0 %v1564
    %1747 = vmatprep.subr.bf16.mxu0 %v1568
    %1748 = vmatpush1.bf16.msra.mxu0 %v1567
    %1749 = vmatprep.subr.bf16.mxu0 %v1571
    %1750 = vmatpush1.bf16.msra.mxu0 %v1570
    %1751 = vmatprep.subr.bf16.mxu0 %v1574
    %1752 = vmatpush1.bf16.msra.mxu0 %v1573
    %1753 = vmatprep.subr.bf16.mxu0 %v1577
    %1754 = vmatpush1.bf16.msra.mxu0 %v1576
    %1755 = vmatprep.subr.bf16.mxu0 %v1580
    %1756 = vmatpush1.bf16.msra.mxu0 %v1579
    %1757 = vmatprep.subr.bf16.mxu0 %v1583
    %1758 = vmatpush1.bf16.msra.mxu0 %v1582
    %1759 = vmatprep.subr.bf16.mxu0 %v1586
    %1760 = vmatpush1.bf16.msra.mxu0 %v1585
    %1761 = vmatprep.subr.bf16.mxu0 %v1589
    %1762 = vmatpush1.bf16.msra.mxu0 %v1588
    %1763 = vmatprep.subr.bf16.mxu0 %v1592
    %1764 = vmatpush1.bf16.msra.mxu0 %v1591
    %1765 = vmatprep.mubr.bf16.mxu0 %v1173
    %1766 = vmatmul.mubr.bf16.gmra.mrb[0].mxu0 %v1172
    %v1767 = vpop.f32.mrb[0].mxu0
    %v1768 = vadd.f32 %v1725, %v1767
    %v1769 = vpop.f32.mrb[0].mxu0
    %v1770 = vadd.f32 %v1727, %v1769
    %v1771 = vpop.f32.mrb[0].mxu0
    %v1772 = vadd.f32 %v1729, %v1771
    %v1773 = vpop.f32.mrb[0].mxu0
    %v1774 = vadd.f32 %v1731, %v1773
    %1775 = vdwg.mxu0
    %1776 = vmatprep.subr.bf16.mxu0 0
    %1777 = vmatpush1.bf16.msra.mxu0 %v1500
    %1778 = vmatprep.subr.bf16.mxu0 0
    %1779 = vmatpush1.bf16.msra.mxu0 %v1503
    %1780 = vmatprep.subr.bf16.mxu0 0
    %1781 = vmatpush1.bf16.msra.mxu0 %v1506
    %1782 = vmatprep.subr.bf16.mxu0 0
    %1783 = vmatpush1.bf16.msra.mxu0 %v1509
    %1784 = vmatprep.subr.bf16.mxu0 0
    %1785 = vmatpush1.bf16.msra.mxu0 %v1512
    %1786 = vmatprep.subr.bf16.mxu0 0
    %1787 = vmatpush1.bf16.msra.mxu0 %v1515
    %1788 = vmatprep.subr.bf16.mxu0 0
    %1789 = vmatpush1.bf16.msra.mxu0 %v1518
    %1790 = vmatprep.subr.bf16.mxu0 0
    %1791 = vmatpush1.bf16.msra.mxu0 %v1521
    %1792 = vmatprep.subr.bf16.mxu0 0
    %1793 = vmatpush1.bf16.msra.mxu0 %v1524
    %1794 = vmatprep.subr.bf16.mxu0 0
    %1795 = vmatpush1.bf16.msra.mxu0 %v1527
    %1796 = vmatprep.subr.bf16.mxu0 0
    %1797 = vmatpush1.bf16.msra.mxu0 %v1530
    %1798 = vmatprep.subr.bf16.mxu0 0
    %1799 = vmatpush1.bf16.msra.mxu0 %v1533
    %1800 = vmatprep.subr.bf16.mxu0 0
    %1801 = vmatpush1.bf16.msra.mxu0 %v1536
    %1802 = vmatprep.subr.bf16.mxu0 0
    %1803 = vmatpush1.bf16.msra.mxu0 %v1539
    %1804 = vmatprep.subr.bf16.mxu0 0
    %1805 = vmatpush1.bf16.msra.mxu0 %v1542
    %1806 = vmatprep.subr.bf16.mxu0 0
    %1807 = vmatpush1.bf16.msra.mxu0 %v1545
    %1808 = vmatprep.mubr.bf16.mxu0 %v1171
    %1809 = vmatmul.mubr.bf16.gmra.mrb[0].mxu0 %v1170
    %v1810 = vpop.f32.mrb[0].mxu0
    %v1811 = vadd.f32 %v1154, %v1810
    %v1812 = vpop.f32.mrb[0].mxu0
    %v1813 = vpop.f32.mrb[0].mxu0
    %v1814 = vadd.f32 %v1154, %v1813
    %v1815 = vpop.f32.mrb[0].mxu0
    %1816 = vdwg.mxu0
    %1817 = vmatprep.subr.bf16.mxu0 0
    %1818 = vmatpush1.bf16.msra.mxu0 %v1548
    %1819 = vmatprep.subr.bf16.mxu0 0
    %1820 = vmatpush1.bf16.msra.mxu0 %v1551
    %1821 = vmatprep.subr.bf16.mxu0 0
    %1822 = vmatpush1.bf16.msra.mxu0 %v1554
    %1823 = vmatprep.subr.bf16.mxu0 0
    %1824 = vmatpush1.bf16.msra.mxu0 %v1557
    %1825 = vmatprep.subr.bf16.mxu0 0
    %1826 = vmatpush1.bf16.msra.mxu0 %v1560
    %1827 = vmatprep.subr.bf16.mxu0 0
    %1828 = vmatpush1.bf16.msra.mxu0 %v1563
    %1829 = vmatprep.subr.bf16.mxu0 0
    %1830 = vmatpush1.bf16.msra.mxu0 %v1566
    %1831 = vmatprep.subr.bf16.mxu0 0
    %1832 = vmatpush1.bf16.msra.mxu0 %v1569
    %1833 = vmatprep.subr.bf16.mxu0 0
    %1834 = vmatpush1.bf16.msra.mxu0 %v1572
    %1835 = vmatprep.subr.bf16.mxu0 0
    %1836 = vmatpush1.bf16.msra.mxu0 %v1575
    %1837 = vmatprep.subr.bf16.mxu0 0
    %1838 = vmatpush1.bf16.msra.mxu0 %v1578
    %1839 = vmatprep.subr.bf16.mxu0 0
    %1840 = vmatpush1.bf16.msra.mxu0 %v1581
    %1841 = vmatprep.subr.bf16.mxu0 0
    %1842 = vmatpush1.bf16.msra.mxu0 %v1584
    %1843 = vmatprep.subr.bf16.mxu0 0
    %1844 = vmatpush1.bf16.msra.mxu0 %v1587
    %1845 = vmatprep.subr.bf16.mxu0 0
    %1846 = vmatpush1.bf16.msra.mxu0 %v1590
    %1847 = vmatprep.subr.bf16.mxu0 0
    %1848 = vmatpush1.bf16.msra.mxu0 %v1593
    %1849 = vmatprep.mubr.bf16.mxu0 %v1173
    %1850 = vmatmul.mubr.bf16.gmra.mrb[0].mxu0 %v1172
    %v1851 = vpop.f32.mrb[0].mxu0
    %v1852 = vadd.f32 %v1811, %v1851
    %v1853 = vpop.f32.mrb[0].mxu0
    %v1854 = vpop.f32.mrb[0].mxu0
    %v1855 = vadd.f32 %v1814, %v1854
    %v1856 = vpop.f32.mrb[0].mxu0
    %1857 = vdwg.mxu0
    %v1858 = vxor.u32 %v1768, 2147483648
    %v1859 = vxor.u32 %v1772, 2147483648
    %v1860 = vmul.f32 %v1858, 1.442695
    %v1861 = vpow.pop %v1860
    %v1862 = vmul.f32 %v1859, 1.442695
    %v1863 = vpow.pop %v1862
    %v1864 = vadd.f32 %v1861, 1.0
    %v1865 = vadd.f32 %v1863, 1.0
    %v1866 = vrcp.pop %v1864
    %v1867 = vmul.f32 1.0, %v1866
    %v1868 = vrcp.pop %v1865
    %v1869 = vmul.f32 1.0, %v1868
    %v1870 = vtanh.pop %v1770
    %v1871 = vtanh.pop %v1774
    %v1872 = vxor.u32 %v1852, 2147483648
    %v1873 = vxor.u32 %v1855, 2147483648
    %v1874 = vmul.f32 %v1872, 1.442695
    %v1875 = vpow.pop %v1874
    %v1876 = vmul.f32 %v1873, 1.442695
    %v1877 = vpow.pop %v1876
    %v1878 = vadd.f32 %v1875, 1.0
    %v1879 = vadd.f32 %v1877, 1.0
    %v1880 = vrcp.pop %v1878
    %v1881 = vmul.f32 1.0, %v1880
    %v1882 = vrcp.pop %v1879
    %v1883 = vmul.f32 1.0, %v1882
    %v1884 = vmul.f32 %v1867, %v1870
    %v1885 = vmul.f32 %v1869, %v1871
    %v1886 = vtanh.pop %v1884
    %v1887 = vtanh.pop %v1885
    %v1888 = vmul.f32 %v1881, %v1886
    %v1889 = vmul.f32 %v1883, %v1887
    %v1890 = vmul.f32 %v1888, 0.2
    %v1891 = vmul.f32 %v1889, 0.2
    %v1892 = vmax.f32 %v1888, %v1890
    %v1893 = vmax.f32 %v1889, %v1891
    %v1894 = vpack.c.bf16 %v1893, %v1892
    %s1895 = scalar_lea.vmem [#allocation6], 64
    %v1896 = vld [vmem:[%s1895] sm:$0xf]
    %v1897 = vld [vmem:[%s1895 + $0x4] sm:$0xf]
    %v1898 = vld [vmem:[%s1895 + $0x8] sm:$0xf]
    %v1899 = vld [vmem:[%s1895 + $0xc] sm:$0xf]
    %v1900 = vld [vmem:[%s1895 + $0x10] sm:$0xf]
    %v1901 = vld [vmem:[%s1895 + $0x14] sm:$0xf]
    %v1902 = vld [vmem:[%s1895 + $0x18] sm:$0xf]
    %v1903 = vld [vmem:[%s1895 + $0x1c] sm:$0xf]
    %v1904 = vld [vmem:[%s1895 + $0x20] sm:$0xf]
    %v1905 = vld [vmem:[%s1895 + $0x24] sm:$0xf]
    %v1906 = vld [vmem:[%s1895 + $0x28] sm:$0xf]
    %v1907 = vld [vmem:[%s1895 + $0x2c] sm:$0xf]
    %v1908 = vld [vmem:[%s1895 + $0x30] sm:$0xf]
    %v1909 = vld [vmem:[%s1895 + $0x34] sm:$0xf]
    %v1910 = vld [vmem:[%s1895 + $0x38] sm:$0xf]
    %v1911 = vld [vmem:[%s1895 + $0x3c] sm:$0xf]
    %v1928 = vunpack.c.l.b16 %v1896
    %v1929 = vunpack.c.l.b16 %v1897
    %v1930 = vunpack.c.l.b16 %v1898
    %v1931 = vunpack.c.l.b16 %v1899
    %v1932 = vunpack.c.l.b16 %v1900
    %v1933 = vunpack.c.l.b16 %v1901
    %v1934 = vunpack.c.l.b16 %v1902
    %v1935 = vunpack.c.l.b16 %v1903
    %v1936 = vunpack.c.l.b16 %v1904
    %v1937 = vunpack.c.l.b16 %v1905
    %v1938 = vunpack.c.l.b16 %v1906
    %v1939 = vunpack.c.l.b16 %v1907
    %v1940 = vunpack.c.l.b16 %v1908
    %v1941 = vunpack.c.l.b16 %v1909
    %v1942 = vunpack.c.l.b16 %v1910
    %v1943 = vunpack.c.l.b16 %v1911
    %v1944 = vpack.c.b16 %v1929, %v1928
    %v1945 = vpack.c.b16 %v1931, %v1930
    %v1946 = vpack.c.b16 %v1933, %v1932
    %v1947 = vpack.c.b16 %v1935, %v1934
    %v1948 = vpack.c.b16 %v1937, %v1936
    %v1949 = vpack.c.b16 %v1939, %v1938
    %v1950 = vpack.c.b16 %v1941, %v1940
    %v1951 = vpack.c.b16 %v1943, %v1942
    %1960 = vmatprep.subr.bf16.mxu0 0
    %1961 = vmatpush1.bf16.msra.mxu0 %v1944
    %1962 = vmatprep.subr.bf16.mxu0 0
    %1963 = vmatpush1.bf16.msra.mxu0 %v1945
    %1964 = vmatprep.subr.bf16.mxu0 0
    %1965 = vmatpush1.bf16.msra.mxu0 %v1946
    %1966 = vmatprep.subr.bf16.mxu0 0
    %1967 = vmatpush1.bf16.msra.mxu0 %v1947
    %1968 = vmatprep.subr.bf16.mxu0 0
    %1969 = vmatpush1.bf16.msra.mxu0 %v1948
    %1970 = vmatprep.subr.bf16.mxu0 0
    %1971 = vmatpush1.bf16.msra.mxu0 %v1949
    %1972 = vmatprep.subr.bf16.mxu0 0
    %1973 = vmatpush1.bf16.msra.mxu0 %v1950
    %1974 = vmatprep.subr.bf16.mxu0 0
    %1975 = vmatpush1.bf16.msra.mxu0 %v1951
    %1976 = vmatprep.subr.bf16.mxu0 0
    %1977 = vmatpush1.bf16.msra.mxu0 0
    %1978 = vmatprep.subr.bf16.mxu0 0
    %1979 = vmatpush1.bf16.msra.mxu0 0
    %1980 = vmatprep.subr.bf16.mxu0 0
    %1981 = vmatpush1.bf16.msra.mxu0 0
    %1982 = vmatprep.subr.bf16.mxu0 0
    %1983 = vmatpush1.bf16.msra.mxu0 0
    %1984 = vmatprep.subr.bf16.mxu0 0
    %1985 = vmatpush1.bf16.msra.mxu0 0
    %1986 = vmatprep.subr.bf16.mxu0 0
    %1987 = vmatpush1.bf16.msra.mxu0 0
    %1988 = vmatprep.subr.bf16.mxu0 0
    %1989 = vmatpush1.bf16.msra.mxu0 0
    %1990 = vmatprep.subr.bf16.mxu0 0
    %1991 = vmatpush1.bf16.msra.mxu0 0
    %1992 = vmatprep.mubr.bf16.mxu0 0
    %1993 = vmatmul.mubr.bf16.gmra.mrb[0].mxu0 %v1894
    %v1994 = vpop.f32.mrb[0].mxu0
    %v1995 = vadd.f32 0.0, %v1994
    %v1996 = vpop.f32.mrb[0].mxu0
    %v1997 = vpop.f32.mrb[0].mxu0
    %v1998 = vadd.f32 0.0, %v1997
    %v1999 = vpop.f32.mrb[0].mxu0
    %2000 = vdwg.mxu0
    %v2017 = vunpack.c.l.b16 %v991
    %v2018 = vunpack.c.l.b16 %v992
    %v2019 = vunpack.c.l.b16 %v993
    %v2020 = vunpack.c.l.b16 %v994
    %v2021 = vunpack.c.l.b16 %v995
    %v2022 = vunpack.c.l.b16 %v996
    %v2023 = vunpack.c.l.b16 %v997
    %v2024 = vunpack.c.l.b16 %v998
    %v2025 = vunpack.c.l.b16 %v999
    %v2026 = vunpack.c.l.b16 %v1000
    %v2027 = vunpack.c.l.b16 %v1001
    %v2028 = vunpack.c.l.b16 %v1002
    %v2029 = vunpack.c.l.b16 %v1003
    %v2030 = vunpack.c.l.b16 %v1004
    %v2031 = vunpack.c.l.b16 %v1005
    %v2032 = vunpack.c.l.b16 %v1006
    %v2033 = vpack.c.b16 %v2018, %v2017
    %v2034 = vpack.c.b16 %v2020, %v2019
    %v2035 = vpack.c.b16 %v2022, %v2021
    %v2036 = vpack.c.b16 %v2024, %v2023
    %v2037 = vpack.c.b16 %v2026, %v2025
    %v2038 = vpack.c.b16 %v2028, %v2027
    %v2039 = vpack.c.b16 %v2030, %v2029
    %v2040 = vpack.c.b16 %v2032, %v2031
    %2049 = vmatprep.subr.bf16.mxu0 0
    %2050 = vmatpush1.bf16.msra.mxu0 %v2033
    %2051 = vmatprep.subr.bf16.mxu0 0
    %2052 = vmatpush1.bf16.msra.mxu0 %v2034
    %2053 = vmatprep.subr.bf16.mxu0 0
    %2054 = vmatpush1.bf16.msra.mxu0 %v2035
    %2055 = vmatprep.subr.bf16.mxu0 0
    %2056 = vmatpush1.bf16.msra.mxu0 %v2036
    %2057 = vmatprep.subr.bf16.mxu0 0
    %2058 = vmatpush1.bf16.msra.mxu0 %v2037
    %2059 = vmatprep.subr.bf16.mxu0 0
    %2060 = vmatpush1.bf16.msra.mxu0 %v2038
    %2061 = vmatprep.subr.bf16.mxu0 0
    %2062 = vmatpush1.bf16.msra.mxu0 %v2039
    %2063 = vmatprep.subr.bf16.mxu0 0
    %2064 = vmatpush1.bf16.msra.mxu0 %v2040
    %2065 = vmatprep.subr.bf16.mxu0 0
    %2066 = vmatpush1.bf16.msra.mxu0 0
    %2067 = vmatprep.subr.bf16.mxu0 0
    %2068 = vmatpush1.bf16.msra.mxu0 0
    %2069 = vmatprep.subr.bf16.mxu0 0
    %2070 = vmatpush1.bf16.msra.mxu0 0
    %2071 = vmatprep.subr.bf16.mxu0 0
    %2072 = vmatpush1.bf16.msra.mxu0 0
    %2073 = vmatprep.subr.bf16.mxu0 0
    %2074 = vmatpush1.bf16.msra.mxu0 0
    %2075 = vmatprep.subr.bf16.mxu0 0
    %2076 = vmatpush1.bf16.msra.mxu0 0
    %2077 = vmatprep.subr.bf16.mxu0 0
    %2078 = vmatpush1.bf16.msra.mxu0 0
    %2079 = vmatprep.subr.bf16.mxu0 0
    %2080 = vmatpush1.bf16.msra.mxu0 0
    %2081 = vmatprep.mubr.bf16.mxu0 0
    %2082 = vmatmul.mubr.bf16.gmra.mrb[0].mxu0 %v990
    %v2083 = vpop.f32.mrb[0].mxu0
    %v2084 = vadd.f32 %v1995, %v2083
    %v2085 = vpop.f32.mrb[0].mxu0
    %v2086 = vpop.f32.mrb[0].mxu0
    %v2087 = vadd.f32 %v1998, %v2086
    %v2088 = vpop.f32.mrb[0].mxu0
    %2089 = vdwg.mxu0
    %v2090 = vld [vmem:[%s0 + $0x20] sm:$0xff]
    %v2091 = vld [vmem:[%s0 + $0x28] sm:$0xff]
    %v2092 = vld [vmem:[%s0 + $0x60] sm:$0xff]
    %v2093 = vld [vmem:[%s0 + $0x68] sm:$0xff]
    %s2094 = scalar_lea.vmem [#allocation2], 1536
    %v2095 = vld [vmem:[%s2094] sm:$0xff]
    %v2096 = vld [vmem:[%s2094 + $0x8] sm:$0xf]
    %v2097 = vld [vmem:[%s2094 + $0xc] sm:$0xff]
    %v2098 = vld [vmem:[%s2094 + $0x14] sm:$0xf]
    %v2099 = vld [vmem:[%s2094 + $0x18] sm:$0xff]
    %v2100 = vld [vmem:[%s2094 + $0x20] sm:$0xf]
    %v2101 = vld [vmem:[%s2094 + $0x24] sm:$0xff]
    %v2102 = vld [vmem:[%s2094 + $0x2c] sm:$0xf]
    %v2103 = vld [vmem:[%s2094 + $0x30] sm:$0xff]
    %v2104 = vld [vmem:[%s2094 + $0x38] sm:$0xf]
    %v2105 = vld [vmem:[%s2094 + $0x3c] sm:$0xff]
    %v2106 = vld [vmem:[%s2094 + $0x44] sm:$0xf]
    %v2107 = vld [vmem:[%s2094 + $0x48] sm:$0xff]
    %v2108 = vld [vmem:[%s2094 + $0x50] sm:$0xf]
    %v2109 = vld [vmem:[%s2094 + $0x54] sm:$0xff]
    %v2110 = vld [vmem:[%s2094 + $0x5c] sm:$0xf]
    %v2111 = vld [vmem:[%s2094 + $0x60] sm:$0xff]
    %v2112 = vld [vmem:[%s2094 + $0x68] sm:$0xf]
    %v2113 = vld [vmem:[%s2094 + $0x6c] sm:$0xff]
    %v2114 = vld [vmem:[%s2094 + $0x74] sm:$0xf]
    %v2115 = vld [vmem:[%s2094 + $0x78] sm:$0xff]
    %v2116 = vld [vmem:[%s2094 + $0x80] sm:$0xf]
    %v2117 = vld [vmem:[%s2094 + $0x84] sm:$0xff]
    %v2118 = vld [vmem:[%s2094 + $0x8c] sm:$0xf]
    %v2119 = vld [vmem:[%s2094 + $0x90] sm:$0xff]
    %v2120 = vld [vmem:[%s2094 + $0x98] sm:$0xf]
    %v2121 = vld [vmem:[%s2094 + $0x9c] sm:$0xff]
    %v2122 = vld [vmem:[%s2094 + $0xa4] sm:$0xf]
    %v2123 = vld [vmem:[%s2094 + $0xa8] sm:$0xff]
    %v2124 = vld [vmem:[%s2094 + $0xb0] sm:$0xf]
    %v2125 = vld [vmem:[%s2094 + $0xb4] sm:$0xff]
    %v2126 = vld [vmem:[%s2094 + $0xbc] sm:$0xf]
    %v2127 = vld [vmem:[%s2094 + $0xc0] sm:$0xff]
    %v2128 = vld [vmem:[%s2094 + $0xc8] sm:$0xf]
    %v2129 = vld [vmem:[%s2094 + $0xcc] sm:$0xff]
    %v2130 = vld [vmem:[%s2094 + $0xd4] sm:$0xf]
    %v2131 = vld [vmem:[%s2094 + $0xd8] sm:$0xff]
    %v2132 = vld [vmem:[%s2094 + $0xe0] sm:$0xf]
    %v2133 = vld [vmem:[%s2094 + $0xe4] sm:$0xff]
    %v2134 = vld [vmem:[%s2094 + $0xec] sm:$0xf]
    %v2135 = vld [vmem:[%s2094 + $0xf0] sm:$0xff]
    %v2136 = vld [vmem:[%s2094 + $0xf8] sm:$0xf]
    %v2137 = vld [vmem:[%s2094 + $0xfc] sm:$0xff]
    %v2138 = vld [vmem:[%s2094 + $0x104] sm:$0xf]
    %v2139 = vld [vmem:[%s2094 + $0x108] sm:$0xff]
    %v2140 = vld [vmem:[%s2094 + $0x110] sm:$0xf]
    %v2141 = vld [vmem:[%s2094 + $0x114] sm:$0xff]
    %v2142 = vld [vmem:[%s2094 + $0x11c] sm:$0xf]
    %v2143 = vld [vmem:[%s2094 + $0x120] sm:$0xff]
    %v2144 = vld [vmem:[%s2094 + $0x128] sm:$0xf]
    %v2145 = vld [vmem:[%s2094 + $0x12c] sm:$0xff]
    %v2146 = vld [vmem:[%s2094 + $0x134] sm:$0xf]
    %v2147 = vld [vmem:[%s2094 + $0x138] sm:$0xff]
    %v2148 = vld [vmem:[%s2094 + $0x140] sm:$0xf]
    %v2149 = vld [vmem:[%s2094 + $0x144] sm:$0xff]
    %v2150 = vld [vmem:[%s2094 + $0x14c] sm:$0xf]
    %v2151 = vld [vmem:[%s2094 + $0x150] sm:$0xff]
    %v2152 = vld [vmem:[%s2094 + $0x158] sm:$0xf]
    %v2153 = vld [vmem:[%s2094 + $0x15c] sm:$0xff]
    %v2154 = vld [vmem:[%s2094 + $0x164] sm:$0xf]
    %v2155 = vld [vmem:[%s2094 + $0x168] sm:$0xff]
    %v2156 = vld [vmem:[%s2094 + $0x170] sm:$0xf]
    %v2157 = vld [vmem:[%s2094 + $0x174] sm:$0xff]
    %v2158 = vld [vmem:[%s2094 + $0x17c] sm:$0xf]
    %v2159 = vld [vmem:[%s2094 + $0x180] sm:$0xff]
    %v2160 = vld [vmem:[%s2094 + $0x188] sm:$0xf]
    %v2161 = vld [vmem:[%s2094 + $0x18c] sm:$0xff]
    %v2162 = vld [vmem:[%s2094 + $0x194] sm:$0xf]
    %v2163 = vld [vmem:[%s2094 + $0x198] sm:$0xff]
    %v2164 = vld [vmem:[%s2094 + $0x1a0] sm:$0xf]
    %v2165 = vld [vmem:[%s2094 + $0x1a4] sm:$0xff]
    %v2166 = vld [vmem:[%s2094 + $0x1ac] sm:$0xf]
    %v2167 = vld [vmem:[%s2094 + $0x1b0] sm:$0xff]
    %v2168 = vld [vmem:[%s2094 + $0x1b8] sm:$0xf]
    %v2169 = vld [vmem:[%s2094 + $0x1bc] sm:$0xff]
    %v2170 = vld [vmem:[%s2094 + $0x1c4] sm:$0xf]
    %v2171 = vld [vmem:[%s2094 + $0x1c8] sm:$0xff]
    %v2172 = vld [vmem:[%s2094 + $0x1d0] sm:$0xf]
    %v2173 = vld [vmem:[%s2094 + $0x1d4] sm:$0xff]
    %v2174 = vld [vmem:[%s2094 + $0x1dc] sm:$0xf]
    %v2175 = vld [vmem:[%s2094 + $0x1e0] sm:$0xff]
    %v2176 = vld [vmem:[%s2094 + $0x1e8] sm:$0xf]
    %v2177 = vld [vmem:[%s2094 + $0x1ec] sm:$0xff]
    %v2178 = vld [vmem:[%s2094 + $0x1f4] sm:$0xf]
    %v2179 = vld [vmem:[%s2094 + $0x1f8] sm:$0xff]
    %v2180 = vld [vmem:[%s2094 + $0x200] sm:$0xf]
    %v2181 = vld [vmem:[%s2094 + $0x204] sm:$0xff]
    %v2182 = vld [vmem:[%s2094 + $0x20c] sm:$0xf]
    %v2183 = vld [vmem:[%s2094 + $0x210] sm:$0xff]
    %v2184 = vld [vmem:[%s2094 + $0x218] sm:$0xf]
    %v2185 = vld [vmem:[%s2094 + $0x21c] sm:$0xff]
    %v2186 = vld [vmem:[%s2094 + $0x224] sm:$0xf]
    %v2187 = vld [vmem:[%s2094 + $0x228] sm:$0xff]
    %v2188 = vld [vmem:[%s2094 + $0x230] sm:$0xf]
    %v2189 = vld [vmem:[%s2094 + $0x234] sm:$0xff]
    %v2190 = vld [vmem:[%s2094 + $0x23c] sm:$0xf]
    %v2191 = vld [vmem:[%s2094 + $0x240] sm:$0xff]
    %v2192 = vld [vmem:[%s2094 + $0x248] sm:$0xf]
    %v2193 = vld [vmem:[%s2094 + $0x24c] sm:$0xff]
    %v2194 = vld [vmem:[%s2094 + $0x254] sm:$0xf]
    %v2195 = vld [vmem:[%s2094 + $0x258] sm:$0xff]
    %v2196 = vld [vmem:[%s2094 + $0x260] sm:$0xf]
    %v2197 = vld [vmem:[%s2094 + $0x264] sm:$0xff]
    %v2198 = vld [vmem:[%s2094 + $0x26c] sm:$0xf]
    %v2199 = vld [vmem:[%s2094 + $0x270] sm:$0xff]
    %v2200 = vld [vmem:[%s2094 + $0x278] sm:$0xf]
    %v2201 = vld [vmem:[%s2094 + $0x27c] sm:$0xff]
    %v2202 = vld [vmem:[%s2094 + $0x284] sm:$0xf]
    %v2203 = vld [vmem:[%s2094 + $0x288] sm:$0xff]
    %v2204 = vld [vmem:[%s2094 + $0x290] sm:$0xf]
    %v2205 = vld [vmem:[%s2094 + $0x294] sm:$0xff]
    %v2206 = vld [vmem:[%s2094 + $0x29c] sm:$0xf]
    %v2207 = vld [vmem:[%s2094 + $0x2a0] sm:$0xff]
    %v2208 = vld [vmem:[%s2094 + $0x2a8] sm:$0xf]
    %v2209 = vld [vmem:[%s2094 + $0x2ac] sm:$0xff]
    %v2210 = vld [vmem:[%s2094 + $0x2b4] sm:$0xf]
    %v2211 = vld [vmem:[%s2094 + $0x2b8] sm:$0xff]
    %v2212 = vld [vmem:[%s2094 + $0x2c0] sm:$0xf]
    %v2213 = vld [vmem:[%s2094 + $0x2c4] sm:$0xff]
    %v2214 = vld [vmem:[%s2094 + $0x2cc] sm:$0xf]
    %v2215 = vld [vmem:[%s2094 + $0x2d0] sm:$0xff]
    %v2216 = vld [vmem:[%s2094 + $0x2d8] sm:$0xf]
    %v2217 = vld [vmem:[%s2094 + $0x2dc] sm:$0xff]
    %v2218 = vld [vmem:[%s2094 + $0x2e4] sm:$0xf]
    %v2219 = vld [vmem:[%s2094 + $0x2e8] sm:$0xff]
    %v2220 = vld [vmem:[%s2094 + $0x2f0] sm:$0xf]
    %v2221 = vld [vmem:[%s2094 + $0x2f4] sm:$0xff]
    %v2222 = vld [vmem:[%s2094 + $0x2fc] sm:$0xf]
    %s2223 = scalar_lea.vmem [#allocation4], 6
    %v2224 = vld [vmem:[%s2223] sm:$0x7]
    %v2226 = vlaneseq
    %v2227 = vshrl.u32 %v2226, 7
    %v2228 = vsub.s32 0, %v2227
    %v2229 = vrot.slane %v2224, %v2228
    %v2230 = vlaneseq
    %v2231 = vshrl.u32 %v2230, 7
    %v2232 = vsub.s32 1, %v2231
    %v2233 = vrot.slane %v2224, %v2232
    %v2234 = vlaneseq
    %v2235 = vshrl.u32 %v2234, 7
    %v2236 = vsub.s32 2, %v2235
    %v2237 = vrot.slane %v2224, %v2236
    %v2245 = vunpack.c.l.b16 %v2090
    %v2246 = vunpack.c.h.b16 %v2090
    %v2247 = vunpack.c.l.b16 %v2091
    %v2248 = vunpack.c.h.b16 %v2091
    %v2249 = vunpack.c.l.b16 %v2092
    %v2250 = vunpack.c.h.b16 %v2092
    %v2251 = vunpack.c.l.b16 %v2093
    %v2252 = vunpack.c.h.b16 %v2093
    %v2253 = vpack.c.b16 %v2249, %v2245
    %v2254 = vpack.c.b16 %v2250, %v2246
    %v2255 = vpack.c.b16 %v2251, %v2247
    %v2256 = vpack.c.b16 %v2252, %v2248
    %v2389 = vunpack.c.l.b16 %v2095
    %v2390 = vunpack.c.h.b16 %v2095
    %v2391 = vunpack.c.l.b16 %v2096
    %v2392 = vunpack.c.l.b16 %v2097
    %v2393 = vunpack.c.h.b16 %v2097
    %v2394 = vunpack.c.l.b16 %v2098
    %v2395 = vunpack.c.l.b16 %v2099
    %v2396 = vunpack.c.h.b16 %v2099
    %v2397 = vunpack.c.l.b16 %v2100
    %v2398 = vunpack.c.l.b16 %v2101
    %v2399 = vunpack.c.h.b16 %v2101
    %v2400 = vunpack.c.l.b16 %v2102
    %v2401 = vunpack.c.l.b16 %v2103
    %v2402 = vunpack.c.h.b16 %v2103
    %v2403 = vunpack.c.l.b16 %v2104
    %v2404 = vunpack.c.l.b16 %v2105
    %v2405 = vunpack.c.h.b16 %v2105
    %v2406 = vunpack.c.l.b16 %v2106
    %v2407 = vunpack.c.l.b16 %v2107
    %v2408 = vunpack.c.h.b16 %v2107
    %v2409 = vunpack.c.l.b16 %v2108
    %v2410 = vunpack.c.l.b16 %v2109
    %v2411 = vunpack.c.h.b16 %v2109
    %v2412 = vunpack.c.l.b16 %v2110
    %v2413 = vunpack.c.l.b16 %v2111
    %v2414 = vunpack.c.h.b16 %v2111
    %v2415 = vunpack.c.l.b16 %v2112
    %v2416 = vunpack.c.l.b16 %v2113
    %v2417 = vunpack.c.h.b16 %v2113
    %v2418 = vunpack.c.l.b16 %v2114
    %v2419 = vunpack.c.l.b16 %v2115
    %v2420 = vunpack.c.h.b16 %v2115
    %v2421 = vunpack.c.l.b16 %v2116
    %v2422 = vunpack.c.l.b16 %v2117
    %v2423 = vunpack.c.h.b16 %v2117
    %v2424 = vunpack.c.l.b16 %v2118
    %v2425 = vunpack.c.l.b16 %v2119
    %v2426 = vunpack.c.h.b16 %v2119
    %v2427 = vunpack.c.l.b16 %v2120
    %v2428 = vunpack.c.l.b16 %v2121
    %v2429 = vunpack.c.h.b16 %v2121
    %v2430 = vunpack.c.l.b16 %v2122
    %v2431 = vunpack.c.l.b16 %v2123
    %v2432 = vunpack.c.h.b16 %v2123
    %v2433 = vunpack.c.l.b16 %v2124
    %v2434 = vunpack.c.l.b16 %v2125
    %v2435 = vunpack.c.h.b16 %v2125
    %v2436 = vunpack.c.l.b16 %v2126
    %v2437 = vunpack.c.l.b16 %v2127
    %v2438 = vunpack.c.h.b16 %v2127
    %v2439 = vunpack.c.l.b16 %v2128
    %v2440 = vunpack.c.l.b16 %v2129
    %v2441 = vunpack.c.h.b16 %v2129
    %v2442 = vunpack.c.l.b16 %v2130
    %v2443 = vunpack.c.l.b16 %v2131
    %v2444 = vunpack.c.h.b16 %v2131
    %v2445 = vunpack.c.l.b16 %v2132
    %v2446 = vunpack.c.l.b16 %v2133
    %v2447 = vunpack.c.h.b16 %v2133
    %v2448 = vunpack.c.l.b16 %v2134
    %v2449 = vunpack.c.l.b16 %v2135
    %v2450 = vunpack.c.h.b16 %v2135
    %v2451 = vunpack.c.l.b16 %v2136
    %v2452 = vunpack.c.l.b16 %v2137
    %v2453 = vunpack.c.h.b16 %v2137
    %v2454 = vunpack.c.l.b16 %v2138
    %v2455 = vunpack.c.l.b16 %v2139
    %v2456 = vunpack.c.h.b16 %v2139
    %v2457 = vunpack.c.l.b16 %v2140
    %v2458 = vunpack.c.l.b16 %v2141
    %v2459 = vunpack.c.h.b16 %v2141
    %v2460 = vunpack.c.l.b16 %v2142
    %v2461 = vunpack.c.l.b16 %v2143
    %v2462 = vunpack.c.h.b16 %v2143
    %v2463 = vunpack.c.l.b16 %v2144
    %v2464 = vunpack.c.l.b16 %v2145
    %v2465 = vunpack.c.h.b16 %v2145
    %v2466 = vunpack.c.l.b16 %v2146
    %v2467 = vunpack.c.l.b16 %v2147
    %v2468 = vunpack.c.h.b16 %v2147
    %v2469 = vunpack.c.l.b16 %v2148
    %v2470 = vunpack.c.l.b16 %v2149
    %v2471 = vunpack.c.h.b16 %v2149
    %v2472 = vunpack.c.l.b16 %v2150
    %v2473 = vunpack.c.l.b16 %v2151
    %v2474 = vunpack.c.h.b16 %v2151
    %v2475 = vunpack.c.l.b16 %v2152
    %v2476 = vunpack.c.l.b16 %v2153
    %v2477 = vunpack.c.h.b16 %v2153
    %v2478 = vunpack.c.l.b16 %v2154
    %v2479 = vunpack.c.l.b16 %v2155
    %v2480 = vunpack.c.h.b16 %v2155
    %v2481 = vunpack.c.l.b16 %v2156
    %v2482 = vunpack.c.l.b16 %v2157
    %v2483 = vunpack.c.h.b16 %v2157
    %v2484 = vunpack.c.l.b16 %v2158
    %v2485 = vunpack.c.l.b16 %v2159
    %v2486 = vunpack.c.h.b16 %v2159
    %v2487 = vunpack.c.l.b16 %v2160
    %v2488 = vunpack.c.l.b16 %v2161
    %v2489 = vunpack.c.h.b16 %v2161
    %v2490 = vunpack.c.l.b16 %v2162
    %v2491 = vunpack.c.l.b16 %v2163
    %v2492 = vunpack.c.h.b16 %v2163
    %v2493 = vunpack.c.l.b16 %v2164
    %v2494 = vunpack.c.l.b16 %v2165
    %v2495 = vunpack.c.h.b16 %v2165
    %v2496 = vunpack.c.l.b16 %v2166
    %v2497 = vunpack.c.l.b16 %v2167
    %v2498 = vunpack.c.h.b16 %v2167
    %v2499 = vunpack.c.l.b16 %v2168
    %v2500 = vunpack.c.l.b16 %v2169
    %v2501 = vunpack.c.h.b16 %v2169
    %v2502 = vunpack.c.l.b16 %v2170
    %v2503 = vunpack.c.l.b16 %v2171
    %v2504 = vunpack.c.h.b16 %v2171
    %v2505 = vunpack.c.l.b16 %v2172
    %v2506 = vunpack.c.l.b16 %v2173
    %v2507 = vunpack.c.h.b16 %v2173
    %v2508 = vunpack.c.l.b16 %v2174
    %v2509 = vunpack.c.l.b16 %v2175
    %v2510 = vunpack.c.h.b16 %v2175
    %v2511 = vunpack.c.l.b16 %v2176
    %v2512 = vunpack.c.l.b16 %v2177
    %v2513 = vunpack.c.h.b16 %v2177
    %v2514 = vunpack.c.l.b16 %v2178
    %v2515 = vunpack.c.l.b16 %v2179
    %v2516 = vunpack.c.h.b16 %v2179
    %v2517 = vunpack.c.l.b16 %v2180
    %v2518 = vunpack.c.l.b16 %v2181
    %v2519 = vunpack.c.h.b16 %v2181
    %v2520 = vunpack.c.l.b16 %v2182
    %v2521 = vunpack.c.l.b16 %v2183
    %v2522 = vunpack.c.h.b16 %v2183
    %v2523 = vunpack.c.l.b16 %v2184
    %v2524 = vunpack.c.l.b16 %v2185
    %v2525 = vunpack.c.h.b16 %v2185
    %v2526 = vunpack.c.l.b16 %v2186
    %v2527 = vunpack.c.l.b16 %v2187
    %v2528 = vunpack.c.h.b16 %v2187
    %v2529 = vunpack.c.l.b16 %v2188
    %v2530 = vunpack.c.l.b16 %v2189
    %v2531 = vunpack.c.h.b16 %v2189
    %v2532 = vunpack.c.l.b16 %v2190
    %v2533 = vunpack.c.l.b16 %v2191
    %v2534 = vunpack.c.h.b16 %v2191
    %v2535 = vunpack.c.l.b16 %v2192
    %v2536 = vunpack.c.l.b16 %v2193
    %v2537 = vunpack.c.h.b16 %v2193
    %v2538 = vunpack.c.l.b16 %v2194
    %v2539 = vunpack.c.l.b16 %v2195
    %v2540 = vunpack.c.h.b16 %v2195
    %v2541 = vunpack.c.l.b16 %v2196
    %v2542 = vunpack.c.l.b16 %v2197
    %v2543 = vunpack.c.h.b16 %v2197
    %v2544 = vunpack.c.l.b16 %v2198
    %v2545 = vunpack.c.l.b16 %v2199
    %v2546 = vunpack.c.h.b16 %v2199
    %v2547 = vunpack.c.l.b16 %v2200
    %v2548 = vunpack.c.l.b16 %v2201
    %v2549 = vunpack.c.h.b16 %v2201
    %v2550 = vunpack.c.l.b16 %v2202
    %v2551 = vunpack.c.l.b16 %v2203
    %v2552 = vunpack.c.h.b16 %v2203
    %v2553 = vunpack.c.l.b16 %v2204
    %v2554 = vunpack.c.l.b16 %v2205
    %v2555 = vunpack.c.h.b16 %v2205
    %v2556 = vunpack.c.l.b16 %v2206
    %v2557 = vunpack.c.l.b16 %v2207
    %v2558 = vunpack.c.h.b16 %v2207
    %v2559 = vunpack.c.l.b16 %v2208
    %v2560 = vunpack.c.l.b16 %v2209
    %v2561 = vunpack.c.h.b16 %v2209
    %v2562 = vunpack.c.l.b16 %v2210
    %v2563 = vunpack.c.l.b16 %v2211
    %v2564 = vunpack.c.h.b16 %v2211
    %v2565 = vunpack.c.l.b16 %v2212
    %v2566 = vunpack.c.l.b16 %v2213
    %v2567 = vunpack.c.h.b16 %v2213
    %v2568 = vunpack.c.l.b16 %v2214
    %v2569 = vunpack.c.l.b16 %v2215
    %v2570 = vunpack.c.h.b16 %v2215
    %v2571 = vunpack.c.l.b16 %v2216
    %v2572 = vunpack.c.l.b16 %v2217
    %v2573 = vunpack.c.h.b16 %v2217
    %v2574 = vunpack.c.l.b16 %v2218
    %v2575 = vunpack.c.l.b16 %v2219
    %v2576 = vunpack.c.h.b16 %v2219
    %v2577 = vunpack.c.l.b16 %v2220
    %v2578 = vunpack.c.l.b16 %v2221
    %v2579 = vunpack.c.h.b16 %v2221
    %v2580 = vunpack.c.l.b16 %v2222
    %v2581 = vpack.c.b16 %v2392, %v2389
    %v2582 = vpack.c.b16 %v2393, %v2390
    %v2583 = vpack.c.b16 %v2394, %v2391
    %v2584 = vpack.c.b16 %v2398, %v2395
    %v2585 = vpack.c.b16 %v2399, %v2396
    %v2586 = vpack.c.b16 %v2400, %v2397
    %v2587 = vpack.c.b16 %v2404, %v2401
    %v2588 = vpack.c.b16 %v2405, %v2402
    %v2589 = vpack.c.b16 %v2406, %v2403
    %v2590 = vpack.c.b16 %v2410, %v2407
    %v2591 = vpack.c.b16 %v2411, %v2408
    %v2592 = vpack.c.b16 %v2412, %v2409
    %v2593 = vpack.c.b16 %v2416, %v2413
    %v2594 = vpack.c.b16 %v2417, %v2414
    %v2595 = vpack.c.b16 %v2418, %v2415
    %v2596 = vpack.c.b16 %v2422, %v2419
    %v2597 = vpack.c.b16 %v2423, %v2420
    %v2598 = vpack.c.b16 %v2424, %v2421
    %v2599 = vpack.c.b16 %v2428, %v2425
    %v2600 = vpack.c.b16 %v2429, %v2426
    %v2601 = vpack.c.b16 %v2430, %v2427
    %v2602 = vpack.c.b16 %v2434, %v2431
    %v2603 = vpack.c.b16 %v2435, %v2432
    %v2604 = vpack.c.b16 %v2436, %v2433
    %v2605 = vpack.c.b16 %v2440, %v2437
    %v2606 = vpack.c.b16 %v2441, %v2438
    %v2607 = vpack.c.b16 %v2442, %v2439
    %v2608 = vpack.c.b16 %v2446, %v2443
    %v2609 = vpack.c.b16 %v2447, %v2444
    %v2610 = vpack.c.b16 %v2448, %v2445
    %v2611 = vpack.c.b16 %v2452, %v2449
    %v2612 = vpack.c.b16 %v2453, %v2450
    %v2613 = vpack.c.b16 %v2454, %v2451
    %v2614 = vpack.c.b16 %v2458, %v2455
    %v2615 = vpack.c.b16 %v2459, %v2456
    %v2616 = vpack.c.b16 %v2460, %v2457
    %v2617 = vpack.c.b16 %v2464, %v2461
    %v2618 = vpack.c.b16 %v2465, %v2462
    %v2619 = vpack.c.b16 %v2466, %v2463
    %v2620 = vpack.c.b16 %v2470, %v2467
    %v2621 = vpack.c.b16 %v2471, %v2468
    %v2622 = vpack.c.b16 %v2472, %v2469
    %v2623 = vpack.c.b16 %v2476, %v2473
    %v2624 = vpack.c.b16 %v2477, %v2474
    %v2625 = vpack.c.b16 %v2478, %v2475
    %v2626 = vpack.c.b16 %v2482, %v2479
    %v2627 = vpack.c.b16 %v2483, %v2480
    %v2628 = vpack.c.b16 %v2484, %v2481
    %v2629 = vpack.c.b16 %v2488, %v2485
    %v2630 = vpack.c.b16 %v2489, %v2486
    %v2631 = vpack.c.b16 %v2490, %v2487
    %v2632 = vpack.c.b16 %v2494, %v2491
    %v2633 = vpack.c.b16 %v2495, %v2492
    %v2634 = vpack.c.b16 %v2496, %v2493
    %v2635 = vpack.c.b16 %v2500, %v2497
    %v2636 = vpack.c.b16 %v2501, %v2498
    %v2637 = vpack.c.b16 %v2502, %v2499
    %v2638 = vpack.c.b16 %v2506, %v2503
    %v2639 = vpack.c.b16 %v2507, %v2504
    %v2640 = vpack.c.b16 %v2508, %v2505
    %v2641 = vpack.c.b16 %v2512, %v2509
    %v2642 = vpack.c.b16 %v2513, %v2510
    %v2643 = vpack.c.b16 %v2514, %v2511
    %v2644 = vpack.c.b16 %v2518, %v2515
    %v2645 = vpack.c.b16 %v2519, %v2516
    %v2646 = vpack.c.b16 %v2520, %v2517
    %v2647 = vpack.c.b16 %v2524, %v2521
    %v2648 = vpack.c.b16 %v2525, %v2522
    %v2649 = vpack.c.b16 %v2526, %v2523
    %v2650 = vpack.c.b16 %v2530, %v2527
    %v2651 = vpack.c.b16 %v2531, %v2528
    %v2652 = vpack.c.b16 %v2532, %v2529
    %v2653 = vpack.c.b16 %v2536, %v2533
    %v2654 = vpack.c.b16 %v2537, %v2534
    %v2655 = vpack.c.b16 %v2538, %v2535
    %v2656 = vpack.c.b16 %v2542, %v2539
    %v2657 = vpack.c.b16 %v2543, %v2540
    %v2658 = vpack.c.b16 %v2544, %v2541
    %v2659 = vpack.c.b16 %v2548, %v2545
    %v2660 = vpack.c.b16 %v2549, %v2546
    %v2661 = vpack.c.b16 %v2550, %v2547
    %v2662 = vpack.c.b16 %v2554, %v2551
    %v2663 = vpack.c.b16 %v2555, %v2552
    %v2664 = vpack.c.b16 %v2556, %v2553
    %v2665 = vpack.c.b16 %v2560, %v2557
    %v2666 = vpack.c.b16 %v2561, %v2558
    %v2667 = vpack.c.b16 %v2562, %v2559
    %v2668 = vpack.c.b16 %v2566, %v2563
    %v2669 = vpack.c.b16 %v2567, %v2564
    %v2670 = vpack.c.b16 %v2568, %v2565
    %v2671 = vpack.c.b16 %v2572, %v2569
    %v2672 = vpack.c.b16 %v2573, %v2570
    %v2673 = vpack.c.b16 %v2574, %v2571
    %v2674 = vpack.c.b16 %v2578, %v2575
    %v2675 = vpack.c.b16 %v2579, %v2576
    %v2676 = vpack.c.b16 %v2580, %v2577
    %2773 = vmatprep.subr.bf16.mxu0 %v2582
    %2774 = vmatpush1.bf16.msra.mxu0 %v2581
    %2775 = vmatprep.subr.bf16.mxu0 %v2585
    %2776 = vmatpush1.bf16.msra.mxu0 %v2584
    %2777 = vmatprep.subr.bf16.mxu0 %v2588
    %2778 = vmatpush1.bf16.msra.mxu0 %v2587
    %2779 = vmatprep.subr.bf16.mxu0 %v2591
    %2780 = vmatpush1.bf16.msra.mxu0 %v2590
    %2781 = vmatprep.subr.bf16.mxu0 %v2594
    %2782 = vmatpush1.bf16.msra.mxu0 %v2593
    %2783 = vmatprep.subr.bf16.mxu0 %v2597
    %2784 = vmatpush1.bf16.msra.mxu0 %v2596
    %2785 = vmatprep.subr.bf16.mxu0 %v2600
    %2786 = vmatpush1.bf16.msra.mxu0 %v2599
    %2787 = vmatprep.subr.bf16.mxu0 %v2603
    %2788 = vmatpush1.bf16.msra.mxu0 %v2602
    %2789 = vmatprep.subr.bf16.mxu0 %v2606
    %2790 = vmatpush1.bf16.msra.mxu0 %v2605
    %2791 = vmatprep.subr.bf16.mxu0 %v2609
    %2792 = vmatpush1.bf16.msra.mxu0 %v2608
    %2793 = vmatprep.subr.bf16.mxu0 %v2612
    %2794 = vmatpush1.bf16.msra.mxu0 %v2611
    %2795 = vmatprep.subr.bf16.mxu0 %v2615
    %2796 = vmatpush1.bf16.msra.mxu0 %v2614
    %2797 = vmatprep.subr.bf16.mxu0 %v2618
    %2798 = vmatpush1.bf16.msra.mxu0 %v2617
    %2799 = vmatprep.subr.bf16.mxu0 %v2621
    %2800 = vmatpush1.bf16.msra.mxu0 %v2620
    %2801 = vmatprep.subr.bf16.mxu0 %v2624
    %2802 = vmatpush1.bf16.msra.mxu0 %v2623
    %2803 = vmatprep.subr.bf16.mxu0 %v2627
    %2804 = vmatpush1.bf16.msra.mxu0 %v2626
    %2805 = vmatprep.mubr.bf16.mxu0 %v2254
    %2806 = vmatmul.mubr.bf16.gmra.mrb[0].mxu0 %v2253
    %v2807 = vpop.f32.mrb[0].mxu0
    %v2808 = vadd.f32 %v2229, %v2807
    %v2809 = vpop.f32.mrb[0].mxu0
    %v2810 = vadd.f32 %v2233, %v2809
    %v2811 = vpop.f32.mrb[0].mxu0
    %v2812 = vadd.f32 %v2229, %v2811
    %v2813 = vpop.f32.mrb[0].mxu0
    %v2814 = vadd.f32 %v2233, %v2813
    %2815 = vdwg.mxu0
    %2816 = vmatprep.subr.bf16.mxu0 %v2630
    %2817 = vmatpush1.bf16.msra.mxu0 %v2629
    %2818 = vmatprep.subr.bf16.mxu0 %v2633
    %2819 = vmatpush1.bf16.msra.mxu0 %v2632
    %2820 = vmatprep.subr.bf16.mxu0 %v2636
    %2821 = vmatpush1.bf16.msra.mxu0 %v2635
    %2822 = vmatprep.subr.bf16.mxu0 %v2639
    %2823 = vmatpush1.bf16.msra.mxu0 %v2638
    %2824 = vmatprep.subr.bf16.mxu0 %v2642
    %2825 = vmatpush1.bf16.msra.mxu0 %v2641
    %2826 = vmatprep.subr.bf16.mxu0 %v2645
    %2827 = vmatpush1.bf16.msra.mxu0 %v2644
    %2828 = vmatprep.subr.bf16.mxu0 %v2648
    %2829 = vmatpush1.bf16.msra.mxu0 %v2647
    %2830 = vmatprep.subr.bf16.mxu0 %v2651
    %2831 = vmatpush1.bf16.msra.mxu0 %v2650
    %2832 = vmatprep.subr.bf16.mxu0 %v2654
    %2833 = vmatpush1.bf16.msra.mxu0 %v2653
    %2834 = vmatprep.subr.bf16.mxu0 %v2657
    %2835 = vmatpush1.bf16.msra.mxu0 %v2656
    %2836 = vmatprep.subr.bf16.mxu0 %v2660
    %2837 = vmatpush1.bf16.msra.mxu0 %v2659
    %2838 = vmatprep.subr.bf16.mxu0 %v2663
    %2839 = vmatpush1.bf16.msra.mxu0 %v2662
    %2840 = vmatprep.subr.bf16.mxu0 %v2666
    %2841 = vmatpush1.bf16.msra.mxu0 %v2665
    %2842 = vmatprep.subr.bf16.mxu0 %v2669
    %2843 = vmatpush1.bf16.msra.mxu0 %v2668
    %2844 = vmatprep.subr.bf16.mxu0 %v2672
    %2845 = vmatpush1.bf16.msra.mxu0 %v2671
    %2846 = vmatprep.subr.bf16.mxu0 %v2675
    %2847 = vmatpush1.bf16.msra.mxu0 %v2674
    %2848 = vmatprep.mubr.bf16.mxu0 %v2256
    %2849 = vmatmul.mubr.bf16.gmra.mrb[0].mxu0 %v2255
    %v2850 = vpop.f32.mrb[0].mxu0
    %v2851 = vadd.f32 %v2808, %v2850
    %v2852 = vpop.f32.mrb[0].mxu0
    %v2853 = vadd.f32 %v2810, %v2852
    %v2854 = vpop.f32.mrb[0].mxu0
    %v2855 = vadd.f32 %v2812, %v2854
    %v2856 = vpop.f32.mrb[0].mxu0
    %v2857 = vadd.f32 %v2814, %v2856
    %2858 = vdwg.mxu0
    %2859 = vmatprep.subr.bf16.mxu0 0
    %2860 = vmatpush1.bf16.msra.mxu0 %v2583
    %2861 = vmatprep.subr.bf16.mxu0 0
    %2862 = vmatpush1.bf16.msra.mxu0 %v2586
    %2863 = vmatprep.subr.bf16.mxu0 0
    %2864 = vmatpush1.bf16.msra.mxu0 %v2589
    %2865 = vmatprep.subr.bf16.mxu0 0
    %2866 = vmatpush1.bf16.msra.mxu0 %v2592
    %2867 = vmatprep.subr.bf16.mxu0 0
    %2868 = vmatpush1.bf16.msra.mxu0 %v2595
    %2869 = vmatprep.subr.bf16.mxu0 0
    %2870 = vmatpush1.bf16.msra.mxu0 %v2598
    %2871 = vmatprep.subr.bf16.mxu0 0
    %2872 = vmatpush1.bf16.msra.mxu0 %v2601
    %2873 = vmatprep.subr.bf16.mxu0 0
    %2874 = vmatpush1.bf16.msra.mxu0 %v2604
    %2875 = vmatprep.subr.bf16.mxu0 0
    %2876 = vmatpush1.bf16.msra.mxu0 %v2607
    %2877 = vmatprep.subr.bf16.mxu0 0
    %2878 = vmatpush1.bf16.msra.mxu0 %v2610
    %2879 = vmatprep.subr.bf16.mxu0 0
    %2880 = vmatpush1.bf16.msra.mxu0 %v2613
    %2881 = vmatprep.subr.bf16.mxu0 0
    %2882 = vmatpush1.bf16.msra.mxu0 %v2616
    %2883 = vmatprep.subr.bf16.mxu0 0
    %2884 = vmatpush1.bf16.msra.mxu0 %v2619
    %2885 = vmatprep.subr.bf16.mxu0 0
    %2886 = vmatpush1.bf16.msra.mxu0 %v2622
    %2887 = vmatprep.subr.bf16.mxu0 0
    %2888 = vmatpush1.bf16.msra.mxu0 %v2625
    %2889 = vmatprep.subr.bf16.mxu0 0
    %2890 = vmatpush1.bf16.msra.mxu0 %v2628
    %2891 = vmatprep.mubr.bf16.mxu0 %v2254
    %2892 = vmatmul.mubr.bf16.gmra.mrb[0].mxu0 %v2253
    %v2893 = vpop.f32.mrb[0].mxu0
    %v2894 = vadd.f32 %v2237, %v2893
    %v2895 = vpop.f32.mrb[0].mxu0
    %v2896 = vpop.f32.mrb[0].mxu0
    %v2897 = vadd.f32 %v2237, %v2896
    %v2898 = vpop.f32.mrb[0].mxu0
    %2899 = vdwg.mxu0
    %2900 = vmatprep.subr.bf16.mxu0 0
    %2901 = vmatpush1.bf16.msra.mxu0 %v2631
    %2902 = vmatprep.subr.bf16.mxu0 0
    %2903 = vmatpush1.bf16.msra.mxu0 %v2634
    %2904 = vmatprep.subr.bf16.mxu0 0
    %2905 = vmatpush1.bf16.msra.mxu0 %v2637
    %2906 = vmatprep.subr.bf16.mxu0 0
    %2907 = vmatpush1.bf16.msra.mxu0 %v2640
    %2908 = vmatprep.subr.bf16.mxu0 0
    %2909 = vmatpush1.bf16.msra.mxu0 %v2643
    %2910 = vmatprep.subr.bf16.mxu0 0
    %2911 = vmatpush1.bf16.msra.mxu0 %v2646
    %2912 = vmatprep.subr.bf16.mxu0 0
    %2913 = vmatpush1.bf16.msra.mxu0 %v2649
    %2914 = vmatprep.subr.bf16.mxu0 0
    %2915 = vmatpush1.bf16.msra.mxu0 %v2652
    %2916 = vmatprep.subr.bf16.mxu0 0
    %2917 = vmatpush1.bf16.msra.mxu0 %v2655
    %2918 = vmatprep.subr.bf16.mxu0 0
    %2919 = vmatpush1.bf16.msra.mxu0 %v2658
    %2920 = vmatprep.subr.bf16.mxu0 0
    %2921 = vmatpush1.bf16.msra.mxu0 %v2661
    %2922 = vmatprep.subr.bf16.mxu0 0
    %2923 = vmatpush1.bf16.msra.mxu0 %v2664
    %2924 = vmatprep.subr.bf16.mxu0 0
    %2925 = vmatpush1.bf16.msra.mxu0 %v2667
    %2926 = vmatprep.subr.bf16.mxu0 0
    %2927 = vmatpush1.bf16.msra.mxu0 %v2670
    %2928 = vmatprep.subr.bf16.mxu0 0
    %2929 = vmatpush1.bf16.msra.mxu0 %v2673
    %2930 = vmatprep.subr.bf16.mxu0 0
    %2931 = vmatpush1.bf16.msra.mxu0 %v2676
    %2932 = vmatprep.mubr.bf16.mxu0 %v2256
    %2933 = vmatmul.mubr.bf16.gmra.mrb[0].mxu0 %v2255
    %v2934 = vpop.f32.mrb[0].mxu0
    %v2935 = vadd.f32 %v2894, %v2934
    %v2936 = vpop.f32.mrb[0].mxu0
    %v2937 = vpop.f32.mrb[0].mxu0
    %v2938 = vadd.f32 %v2897, %v2937
    %v2939 = vpop.f32.mrb[0].mxu0
    %2940 = vdwg.mxu0
    %v2941 = vxor.u32 %v2851, 2147483648
    %v2942 = vxor.u32 %v2855, 2147483648
    %v2943 = vmul.f32 %v2941, 1.442695
    %v2944 = vpow.pop %v2943
    %v2945 = vmul.f32 %v2942, 1.442695
    %v2946 = vpow.pop %v2945
    %v2947 = vadd.f32 %v2944, 1.0
    %v2948 = vadd.f32 %v2946, 1.0
    %v2949 = vrcp.pop %v2947
    %v2950 = vmul.f32 1.0, %v2949
    %v2951 = vrcp.pop %v2948
    %v2952 = vmul.f32 1.0, %v2951
    %v2953 = vtanh.pop %v2853
    %v2954 = vtanh.pop %v2857
    %v2955 = vxor.u32 %v2935, 2147483648
    %v2956 = vxor.u32 %v2938, 2147483648
    %v2957 = vmul.f32 %v2955, 1.442695
    %v2958 = vpow.pop %v2957
    %v2959 = vmul.f32 %v2956, 1.442695
    %v2960 = vpow.pop %v2959
    %v2961 = vadd.f32 %v2958, 1.0
    %v2962 = vadd.f32 %v2960, 1.0
    %v2963 = vrcp.pop %v2961
    %v2964 = vmul.f32 1.0, %v2963
    %v2965 = vrcp.pop %v2962
    %v2966 = vmul.f32 1.0, %v2965
    %v2967 = vmul.f32 %v2950, %v2953
    %v2968 = vmul.f32 %v2952, %v2954
    %v2969 = vtanh.pop %v2967
    %v2970 = vtanh.pop %v2968
    %v2971 = vmul.f32 %v2964, %v2969
    %v2972 = vmul.f32 %v2966, %v2970
    %v2973 = vmul.f32 %v2971, 0.2
    %v2974 = vmul.f32 %v2972, 0.2
    %v2975 = vmax.f32 %v2971, %v2973
    %v2976 = vmax.f32 %v2972, %v2974
    %v2977 = vpack.c.bf16 %v2976, %v2975
    %s2978 = scalar_lea.vmem [#allocation6], 128
    %v2979 = vld [vmem:[%s2978] sm:$0xf]
    %v2980 = vld [vmem:[%s2978 + $0x4] sm:$0xf]
    %v2981 = vld [vmem:[%s2978 + $0x8] sm:$0xf]
    %v2982 = vld [vmem:[%s2978 + $0xc] sm:$0xf]
    %v2983 = vld [vmem:[%s2978 + $0x10] sm:$0xf]
    %v2984 = vld [vmem:[%s2978 + $0x14] sm:$0xf]
    %v2985 = vld [vmem:[%s2978 + $0x18] sm:$0xf]
    %v2986 = vld [vmem:[%s2978 + $0x1c] sm:$0xf]
    %v2987 = vld [vmem:[%s2978 + $0x20] sm:$0xf]
    %v2988 = vld [vmem:[%s2978 + $0x24] sm:$0xf]
    %v2989 = vld [vmem:[%s2978 + $0x28] sm:$0xf]
    %v2990 = vld [vmem:[%s2978 + $0x2c] sm:$0xf]
    %v2991 = vld [vmem:[%s2978 + $0x30] sm:$0xf]
    %v2992 = vld [vmem:[%s2978 + $0x34] sm:$0xf]
    %v2993 = vld [vmem:[%s2978 + $0x38] sm:$0xf]
    %v2994 = vld [vmem:[%s2978 + $0x3c] sm:$0xf]
    %v3011 = vunpack.c.l.b16 %v2979
    %v3012 = vunpack.c.l.b16 %v2980
    %v3013 = vunpack.c.l.b16 %v2981
    %v3014 = vunpack.c.l.b16 %v2982
    %v3015 = vunpack.c.l.b16 %v2983
    %v3016 = vunpack.c.l.b16 %v2984
    %v3017 = vunpack.c.l.b16 %v2985
    %v3018 = vunpack.c.l.b16 %v2986
    %v3019 = vunpack.c.l.b16 %v2987
    %v3020 = vunpack.c.l.b16 %v2988
    %v3021 = vunpack.c.l.b16 %v2989
    %v3022 = vunpack.c.l.b16 %v2990
    %v3023 = vunpack.c.l.b16 %v2991
    %v3024 = vunpack.c.l.b16 %v2992
    %v3025 = vunpack.c.l.b16 %v2993
    %v3026 = vunpack.c.l.b16 %v2994
    %v3027 = vpack.c.b16 %v3012, %v3011
    %v3028 = vpack.c.b16 %v3014, %v3013
    %v3029 = vpack.c.b16 %v3016, %v3015
    %v3030 = vpack.c.b16 %v3018, %v3017
    %v3031 = vpack.c.b16 %v3020, %v3019
    %v3032 = vpack.c.b16 %v3022, %v3021
    %v3033 = vpack.c.b16 %v3024, %v3023
    %v3034 = vpack.c.b16 %v3026, %v3025
    %3043 = vmatprep.subr.bf16.mxu0 0
    %3044 = vmatpush1.bf16.msra.mxu0 %v3027
    %3045 = vmatprep.subr.bf16.mxu0 0
    %3046 = vmatpush1.bf16.msra.mxu0 %v3028
    %3047 = vmatprep.subr.bf16.mxu0 0
    %3048 = vmatpush1.bf16.msra.mxu0 %v3029
    %3049 = vmatprep.subr.bf16.mxu0 0
    %3050 = vmatpush1.bf16.msra.mxu0 %v3030
    %3051 = vmatprep.subr.bf16.mxu0 0
    %3052 = vmatpush1.bf16.msra.mxu0 %v3031
    %3053 = vmatprep.subr.bf16.mxu0 0
    %3054 = vmatpush1.bf16.msra.mxu0 %v3032
    %3055 = vmatprep.subr.bf16.mxu0 0
    %3056 = vmatpush1.bf16.msra.mxu0 %v3033
    %3057 = vmatprep.subr.bf16.mxu0 0
    %3058 = vmatpush1.bf16.msra.mxu0 %v3034
    %3059 = vmatprep.subr.bf16.mxu0 0
    %3060 = vmatpush1.bf16.msra.mxu0 0
    %3061 = vmatprep.subr.bf16.mxu0 0
    %3062 = vmatpush1.bf16.msra.mxu0 0
    %3063 = vmatprep.subr.bf16.mxu0 0
    %3064 = vmatpush1.bf16.msra.mxu0 0
    %3065 = vmatprep.subr.bf16.mxu0 0
    %3066 = vmatpush1.bf16.msra.mxu0 0
    %3067 = vmatprep.subr.bf16.mxu0 0
    %3068 = vmatpush1.bf16.msra.mxu0 0
    %3069 = vmatprep.subr.bf16.mxu0 0
    %3070 = vmatpush1.bf16.msra.mxu0 0
    %3071 = vmatprep.subr.bf16.mxu0 0
    %3072 = vmatpush1.bf16.msra.mxu0 0
    %3073 = vmatprep.subr.bf16.mxu0 0
    %3074 = vmatpush1.bf16.msra.mxu0 0
    %3075 = vmatprep.mubr.bf16.mxu0 0
    %3076 = vmatmul.mubr.bf16.gmra.mrb[0].mxu0 %v2977
    %v3077 = vpop.f32.mrb[0].mxu0
    %v3078 = vadd.f32 0.0, %v3077
    %v3079 = vpop.f32.mrb[0].mxu0
    %v3080 = vpop.f32.mrb[0].mxu0
    %v3081 = vadd.f32 0.0, %v3080
    %v3082 = vpop.f32.mrb[0].mxu0
    %3083 = vdwg.mxu0
    %v3084 = vadd.f32 %v2084, %v3078
    %v3085 = vadd.f32 %v2087, %v3081
    %v3086 = vld [vmem:[%s0 + $0x30] sm:$0xff]
    %v3087 = vld [vmem:[%s0 + $0x38] sm:$0xff]
    %v3088 = vld [vmem:[%s0 + $0x70] sm:$0xff]
    %v3089 = vld [vmem:[%s0 + $0x78] sm:$0xff]
    %s3090 = scalar_lea.vmem [#allocation2], 2304
    %v3091 = vld [vmem:[%s3090] sm:$0xff]
    %v3092 = vld [vmem:[%s3090 + $0x8] sm:$0xf]
    %v3093 = vld [vmem:[%s3090 + $0xc] sm:$0xff]
    %v3094 = vld [vmem:[%s3090 + $0x14] sm:$0xf]
    %v3095 = vld [vmem:[%s3090 + $0x18] sm:$0xff]
    %v3096 = vld [vmem:[%s3090 + $0x20] sm:$0xf]
    %v3097 = vld [vmem:[%s3090 + $0x24] sm:$0xff]
    %v3098 = vld [vmem:[%s3090 + $0x2c] sm:$0xf]
    %v3099 = vld [vmem:[%s3090 + $0x30] sm:$0xff]
    %v3100 = vld [vmem:[%s3090 + $0x38] sm:$0xf]
    %v3101 = vld [vmem:[%s3090 + $0x3c] sm:$0xff]
    %v3102 = vld [vmem:[%s3090 + $0x44] sm:$0xf]
    %v3103 = vld [vmem:[%s3090 + $0x48] sm:$0xff]
    %v3104 = vld [vmem:[%s3090 + $0x50] sm:$0xf]
    %v3105 = vld [vmem:[%s3090 + $0x54] sm:$0xff]
    %v3106 = vld [vmem:[%s3090 + $0x5c] sm:$0xf]
    %v3107 = vld [vmem:[%s3090 + $0x60] sm:$0xff]
    %v3108 = vld [vmem:[%s3090 + $0x68] sm:$0xf]
    %v3109 = vld [vmem:[%s3090 + $0x6c] sm:$0xff]
    %v3110 = vld [vmem:[%s3090 + $0x74] sm:$0xf]
    %v3111 = vld [vmem:[%s3090 + $0x78] sm:$0xff]
    %v3112 = vld [vmem:[%s3090 + $0x80] sm:$0xf]
    %v3113 = vld [vmem:[%s3090 + $0x84] sm:$0xff]
    %v3114 = vld [vmem:[%s3090 + $0x8c] sm:$0xf]
    %v3115 = vld [vmem:[%s3090 + $0x90] sm:$0xff]
    %v3116 = vld [vmem:[%s3090 + $0x98] sm:$0xf]
    %v3117 = vld [vmem:[%s3090 + $0x9c] sm:$0xff]
    %v3118 = vld [vmem:[%s3090 + $0xa4] sm:$0xf]
    %v3119 = vld [vmem:[%s3090 + $0xa8] sm:$0xff]
    %v3120 = vld [vmem:[%s3090 + $0xb0] sm:$0xf]
    %v3121 = vld [vmem:[%s3090 + $0xb4] sm:$0xff]
    %v3122 = vld [vmem:[%s3090 + $0xbc] sm:$0xf]
    %v3123 = vld [vmem:[%s3090 + $0xc0] sm:$0xff]
    %v3124 = vld [vmem:[%s3090 + $0xc8] sm:$0xf]
    %v3125 = vld [vmem:[%s3090 + $0xcc] sm:$0xff]
    %v3126 = vld [vmem:[%s3090 + $0xd4] sm:$0xf]
    %v3127 = vld [vmem:[%s3090 + $0xd8] sm:$0xff]
    %v3128 = vld [vmem:[%s3090 + $0xe0] sm:$0xf]
    %v3129 = vld [vmem:[%s3090 + $0xe4] sm:$0xff]
    %v3130 = vld [vmem:[%s3090 + $0xec] sm:$0xf]
    %v3131 = vld [vmem:[%s3090 + $0xf0] sm:$0xff]
    %v3132 = vld [vmem:[%s3090 + $0xf8] sm:$0xf]
    %v3133 = vld [vmem:[%s3090 + $0xfc] sm:$0xff]
    %v3134 = vld [vmem:[%s3090 + $0x104] sm:$0xf]
    %v3135 = vld [vmem:[%s3090 + $0x108] sm:$0xff]
    %v3136 = vld [vmem:[%s3090 + $0x110] sm:$0xf]
    %v3137 = vld [vmem:[%s3090 + $0x114] sm:$0xff]
    %v3138 = vld [vmem:[%s3090 + $0x11c] sm:$0xf]
    %v3139 = vld [vmem:[%s3090 + $0x120] sm:$0xff]
    %v3140 = vld [vmem:[%s3090 + $0x128] sm:$0xf]
    %v3141 = vld [vmem:[%s3090 + $0x12c] sm:$0xff]
    %v3142 = vld [vmem:[%s3090 + $0x134] sm:$0xf]
    %v3143 = vld [vmem:[%s3090 + $0x138] sm:$0xff]
    %v3144 = vld [vmem:[%s3090 + $0x140] sm:$0xf]
    %v3145 = vld [vmem:[%s3090 + $0x144] sm:$0xff]
    %v3146 = vld [vmem:[%s3090 + $0x14c] sm:$0xf]
    %v3147 = vld [vmem:[%s3090 + $0x150] sm:$0xff]
    %v3148 = vld [vmem:[%s3090 + $0x158] sm:$0xf]
    %v3149 = vld [vmem:[%s3090 + $0x15c] sm:$0xff]
    %v3150 = vld [vmem:[%s3090 + $0x164] sm:$0xf]
    %v3151 = vld [vmem:[%s3090 + $0x168] sm:$0xff]
    %v3152 = vld [vmem:[%s3090 + $0x170] sm:$0xf]
    %v3153 = vld [vmem:[%s3090 + $0x174] sm:$0xff]
    %v3154 = vld [vmem:[%s3090 + $0x17c] sm:$0xf]
    %v3155 = vld [vmem:[%s3090 + $0x180] sm:$0xff]
    %v3156 = vld [vmem:[%s3090 + $0x188] sm:$0xf]
    %v3157 = vld [vmem:[%s3090 + $0x18c] sm:$0xff]
    %v3158 = vld [vmem:[%s3090 + $0x194] sm:$0xf]
    %v3159 = vld [vmem:[%s3090 + $0x198] sm:$0xff]
    %v3160 = vld [vmem:[%s3090 + $0x1a0] sm:$0xf]
    %v3161 = vld [vmem:[%s3090 + $0x1a4] sm:$0xff]
    %v3162 = vld [vmem:[%s3090 + $0x1ac] sm:$0xf]
    %v3163 = vld [vmem:[%s3090 + $0x1b0] sm:$0xff]
    %v3164 = vld [vmem:[%s3090 + $0x1b8] sm:$0xf]
    %v3165 = vld [vmem:[%s3090 + $0x1bc] sm:$0xff]
    %v3166 = vld [vmem:[%s3090 + $0x1c4] sm:$0xf]
    %v3167 = vld [vmem:[%s3090 + $0x1c8] sm:$0xff]
    %v3168 = vld [vmem:[%s3090 + $0x1d0] sm:$0xf]
    %v3169 = vld [vmem:[%s3090 + $0x1d4] sm:$0xff]
    %v3170 = vld [vmem:[%s3090 + $0x1dc] sm:$0xf]
    %v3171 = vld [vmem:[%s3090 + $0x1e0] sm:$0xff]
    %v3172 = vld [vmem:[%s3090 + $0x1e8] sm:$0xf]
    %v3173 = vld [vmem:[%s3090 + $0x1ec] sm:$0xff]
    %v3174 = vld [vmem:[%s3090 + $0x1f4] sm:$0xf]
    %v3175 = vld [vmem:[%s3090 + $0x1f8] sm:$0xff]
    %v3176 = vld [vmem:[%s3090 + $0x200] sm:$0xf]
    %v3177 = vld [vmem:[%s3090 + $0x204] sm:$0xff]
    %v3178 = vld [vmem:[%s3090 + $0x20c] sm:$0xf]
    %v3179 = vld [vmem:[%s3090 + $0x210] sm:$0xff]
    %v3180 = vld [vmem:[%s3090 + $0x218] sm:$0xf]
    %v3181 = vld [vmem:[%s3090 + $0x21c] sm:$0xff]
    %v3182 = vld [vmem:[%s3090 + $0x224] sm:$0xf]
    %v3183 = vld [vmem:[%s3090 + $0x228] sm:$0xff]
    %v3184 = vld [vmem:[%s3090 + $0x230] sm:$0xf]
    %v3185 = vld [vmem:[%s3090 + $0x234] sm:$0xff]
    %v3186 = vld [vmem:[%s3090 + $0x23c] sm:$0xf]
    %v3187 = vld [vmem:[%s3090 + $0x240] sm:$0xff]
    %v3188 = vld [vmem:[%s3090 + $0x248] sm:$0xf]
    %v3189 = vld [vmem:[%s3090 + $0x24c] sm:$0xff]
    %v3190 = vld [vmem:[%s3090 + $0x254] sm:$0xf]
    %v3191 = vld [vmem:[%s3090 + $0x258] sm:$0xff]
    %v3192 = vld [vmem:[%s3090 + $0x260] sm:$0xf]
    %v3193 = vld [vmem:[%s3090 + $0x264] sm:$0xff]
    %v3194 = vld [vmem:[%s3090 + $0x26c] sm:$0xf]
    %v3195 = vld [vmem:[%s3090 + $0x270] sm:$0xff]
    %v3196 = vld [vmem:[%s3090 + $0x278] sm:$0xf]
    %v3197 = vld [vmem:[%s3090 + $0x27c] sm:$0xff]
    %v3198 = vld [vmem:[%s3090 + $0x284] sm:$0xf]
    %v3199 = vld [vmem:[%s3090 + $0x288] sm:$0xff]
    %v3200 = vld [vmem:[%s3090 + $0x290] sm:$0xf]
    %v3201 = vld [vmem:[%s3090 + $0x294] sm:$0xff]
    %v3202 = vld [vmem:[%s3090 + $0x29c] sm:$0xf]
    %v3203 = vld [vmem:[%s3090 + $0x2a0] sm:$0xff]
    %v3204 = vld [vmem:[%s3090 + $0x2a8] sm:$0xf]
    %v3205 = vld [vmem:[%s3090 + $0x2ac] sm:$0xff]
    %v3206 = vld [vmem:[%s3090 + $0x2b4] sm:$0xf]
    %v3207 = vld [vmem:[%s3090 + $0x2b8] sm:$0xff]
    %v3208 = vld [vmem:[%s3090 + $0x2c0] sm:$0xf]
    %v3209 = vld [vmem:[%s3090 + $0x2c4] sm:$0xff]
    %v3210 = vld [vmem:[%s3090 + $0x2cc] sm:$0xf]
    %v3211 = vld [vmem:[%s3090 + $0x2d0] sm:$0xff]
    %v3212 = vld [vmem:[%s3090 + $0x2d8] sm:$0xf]
    %v3213 = vld [vmem:[%s3090 + $0x2dc] sm:$0xff]
    %v3214 = vld [vmem:[%s3090 + $0x2e4] sm:$0xf]
    %v3215 = vld [vmem:[%s3090 + $0x2e8] sm:$0xff]
    %v3216 = vld [vmem:[%s3090 + $0x2f0] sm:$0xf]
    %v3217 = vld [vmem:[%s3090 + $0x2f4] sm:$0xff]
    %v3218 = vld [vmem:[%s3090 + $0x2fc] sm:$0xf]
    %s3219 = scalar_lea.vmem [#allocation4], 9
    %v3220 = vld [vmem:[%s3219] sm:$0x7]
    %v3222 = vlaneseq
    %v3223 = vshrl.u32 %v3222, 7
    %v3224 = vsub.s32 0, %v3223
    %v3225 = vrot.slane %v3220, %v3224
    %v3226 = vlaneseq
    %v3227 = vshrl.u32 %v3226, 7
    %v3228 = vsub.s32 1, %v3227
    %v3229 = vrot.slane %v3220, %v3228
    %v3230 = vlaneseq
    %v3231 = vshrl.u32 %v3230, 7
    %v3232 = vsub.s32 2, %v3231
    %v3233 = vrot.slane %v3220, %v3232
    %v3241 = vunpack.c.l.b16 %v3086
    %v3242 = vunpack.c.h.b16 %v3086
    %v3243 = vunpack.c.l.b16 %v3087
    %v3244 = vunpack.c.h.b16 %v3087
    %v3245 = vunpack.c.l.b16 %v3088
    %v3246 = vunpack.c.h.b16 %v3088
    %v3247 = vunpack.c.l.b16 %v3089
    %v3248 = vunpack.c.h.b16 %v3089
    %v3249 = vpack.c.b16 %v3245, %v3241
    %v3250 = vpack.c.b16 %v3246, %v3242
    %v3251 = vpack.c.b16 %v3247, %v3243
    %v3252 = vpack.c.b16 %v3248, %v3244
    %v3385 = vunpack.c.l.b16 %v3091
    %v3386 = vunpack.c.h.b16 %v3091
    %v3387 = vunpack.c.l.b16 %v3092
    %v3388 = vunpack.c.l.b16 %v3093
    %v3389 = vunpack.c.h.b16 %v3093
    %v3390 = vunpack.c.l.b16 %v3094
    %v3391 = vunpack.c.l.b16 %v3095
    %v3392 = vunpack.c.h.b16 %v3095
    %v3393 = vunpack.c.l.b16 %v3096
    %v3394 = vunpack.c.l.b16 %v3097
    %v3395 = vunpack.c.h.b16 %v3097
    %v3396 = vunpack.c.l.b16 %v3098
    %v3397 = vunpack.c.l.b16 %v3099
    %v3398 = vunpack.c.h.b16 %v3099
    %v3399 = vunpack.c.l.b16 %v3100
    %v3400 = vunpack.c.l.b16 %v3101
    %v3401 = vunpack.c.h.b16 %v3101
    %v3402 = vunpack.c.l.b16 %v3102
    %v3403 = vunpack.c.l.b16 %v3103
    %v3404 = vunpack.c.h.b16 %v3103
    %v3405 = vunpack.c.l.b16 %v3104
    %v3406 = vunpack.c.l.b16 %v3105
    %v3407 = vunpack.c.h.b16 %v3105
    %v3408 = vunpack.c.l.b16 %v3106
    %v3409 = vunpack.c.l.b16 %v3107
    %v3410 = vunpack.c.h.b16 %v3107
    %v3411 = vunpack.c.l.b16 %v3108
    %v3412 = vunpack.c.l.b16 %v3109
    %v3413 = vunpack.c.h.b16 %v3109
    %v3414 = vunpack.c.l.b16 %v3110
    %v3415 = vunpack.c.l.b16 %v3111
    %v3416 = vunpack.c.h.b16 %v3111
    %v3417 = vunpack.c.l.b16 %v3112
    %v3418 = vunpack.c.l.b16 %v3113
    %v3419 = vunpack.c.h.b16 %v3113
    %v3420 = vunpack.c.l.b16 %v3114
    %v3421 = vunpack.c.l.b16 %v3115
    %v3422 = vunpack.c.h.b16 %v3115
    %v3423 = vunpack.c.l.b16 %v3116
    %v3424 = vunpack.c.l.b16 %v3117
    %v3425 = vunpack.c.h.b16 %v3117
    %v3426 = vunpack.c.l.b16 %v3118
    %v3427 = vunpack.c.l.b16 %v3119
    %v3428 = vunpack.c.h.b16 %v3119
    %v3429 = vunpack.c.l.b16 %v3120
    %v3430 = vunpack.c.l.b16 %v3121
    %v3431 = vunpack.c.h.b16 %v3121
    %v3432 = vunpack.c.l.b16 %v3122
    %v3433 = vunpack.c.l.b16 %v3123
    %v3434 = vunpack.c.h.b16 %v3123
    %v3435 = vunpack.c.l.b16 %v3124
    %v3436 = vunpack.c.l.b16 %v3125
    %v3437 = vunpack.c.h.b16 %v3125
    %v3438 = vunpack.c.l.b16 %v3126
    %v3439 = vunpack.c.l.b16 %v3127
    %v3440 = vunpack.c.h.b16 %v3127
    %v3441 = vunpack.c.l.b16 %v3128
    %v3442 = vunpack.c.l.b16 %v3129
    %v3443 = vunpack.c.h.b16 %v3129
    %v3444 = vunpack.c.l.b16 %v3130
    %v3445 = vunpack.c.l.b16 %v3131
    %v3446 = vunpack.c.h.b16 %v3131
    %v3447 = vunpack.c.l.b16 %v3132
    %v3448 = vunpack.c.l.b16 %v3133
    %v3449 = vunpack.c.h.b16 %v3133
    %v3450 = vunpack.c.l.b16 %v3134
    %v3451 = vunpack.c.l.b16 %v3135
    %v3452 = vunpack.c.h.b16 %v3135
    %v3453 = vunpack.c.l.b16 %v3136
    %v3454 = vunpack.c.l.b16 %v3137
    %v3455 = vunpack.c.h.b16 %v3137
    %v3456 = vunpack.c.l.b16 %v3138
    %v3457 = vunpack.c.l.b16 %v3139
    %v3458 = vunpack.c.h.b16 %v3139
    %v3459 = vunpack.c.l.b16 %v3140
    %v3460 = vunpack.c.l.b16 %v3141
    %v3461 = vunpack.c.h.b16 %v3141
    %v3462 = vunpack.c.l.b16 %v3142
    %v3463 = vunpack.c.l.b16 %v3143
    %v3464 = vunpack.c.h.b16 %v3143
    %v3465 = vunpack.c.l.b16 %v3144
    %v3466 = vunpack.c.l.b16 %v3145
    %v3467 = vunpack.c.h.b16 %v3145
    %v3468 = vunpack.c.l.b16 %v3146
    %v3469 = vunpack.c.l.b16 %v3147
    %v3470 = vunpack.c.h.b16 %v3147
    %v3471 = vunpack.c.l.b16 %v3148
    %v3472 = vunpack.c.l.b16 %v3149
    %v3473 = vunpack.c.h.b16 %v3149
    %v3474 = vunpack.c.l.b16 %v3150
    %v3475 = vunpack.c.l.b16 %v3151
    %v3476 = vunpack.c.h.b16 %v3151
    %v3477 = vunpack.c.l.b16 %v3152
    %v3478 = vunpack.c.l.b16 %v3153
    %v3479 = vunpack.c.h.b16 %v3153
    %v3480 = vunpack.c.l.b16 %v3154
    %v3481 = vunpack.c.l.b16 %v3155
    %v3482 = vunpack.c.h.b16 %v3155
    %v3483 = vunpack.c.l.b16 %v3156
    %v3484 = vunpack.c.l.b16 %v3157
    %v3485 = vunpack.c.h.b16 %v3157
    %v3486 = vunpack.c.l.b16 %v3158
    %v3487 = vunpack.c.l.b16 %v3159
    %v3488 = vunpack.c.h.b16 %v3159
    %v3489 = vunpack.c.l.b16 %v3160
    %v3490 = vunpack.c.l.b16 %v3161
    %v3491 = vunpack.c.h.b16 %v3161
    %v3492 = vunpack.c.l.b16 %v3162
    %v3493 = vunpack.c.l.b16 %v3163
    %v3494 = vunpack.c.h.b16 %v3163
    %v3495 = vunpack.c.l.b16 %v3164
    %v3496 = vunpack.c.l.b16 %v3165
    %v3497 = vunpack.c.h.b16 %v3165
    %v3498 = vunpack.c.l.b16 %v3166
    %v3499 = vunpack.c.l.b16 %v3167
    %v3500 = vunpack.c.h.b16 %v3167
    %v3501 = vunpack.c.l.b16 %v3168
    %v3502 = vunpack.c.l.b16 %v3169
    %v3503 = vunpack.c.h.b16 %v3169
    %v3504 = vunpack.c.l.b16 %v3170
    %v3505 = vunpack.c.l.b16 %v3171
    %v3506 = vunpack.c.h.b16 %v3171
    %v3507 = vunpack.c.l.b16 %v3172
    %v3508 = vunpack.c.l.b16 %v3173
    %v3509 = vunpack.c.h.b16 %v3173
    %v3510 = vunpack.c.l.b16 %v3174
    %v3511 = vunpack.c.l.b16 %v3175
    %v3512 = vunpack.c.h.b16 %v3175
    %v3513 = vunpack.c.l.b16 %v3176
    %v3514 = vunpack.c.l.b16 %v3177
    %v3515 = vunpack.c.h.b16 %v3177
    %v3516 = vunpack.c.l.b16 %v3178
    %v3517 = vunpack.c.l.b16 %v3179
    %v3518 = vunpack.c.h.b16 %v3179
    %v3519 = vunpack.c.l.b16 %v3180
    %v3520 = vunpack.c.l.b16 %v3181
    %v3521 = vunpack.c.h.b16 %v3181
    %v3522 = vunpack.c.l.b16 %v3182
    %v3523 = vunpack.c.l.b16 %v3183
    %v3524 = vunpack.c.h.b16 %v3183
    %v3525 = vunpack.c.l.b16 %v3184
    %v3526 = vunpack.c.l.b16 %v3185
    %v3527 = vunpack.c.h.b16 %v3185
    %v3528 = vunpack.c.l.b16 %v3186
    %v3529 = vunpack.c.l.b16 %v3187
    %v3530 = vunpack.c.h.b16 %v3187
    %v3531 = vunpack.c.l.b16 %v3188
    %v3532 = vunpack.c.l.b16 %v3189
    %v3533 = vunpack.c.h.b16 %v3189
    %v3534 = vunpack.c.l.b16 %v3190
    %v3535 = vunpack.c.l.b16 %v3191
    %v3536 = vunpack.c.h.b16 %v3191
    %v3537 = vunpack.c.l.b16 %v3192
    %v3538 = vunpack.c.l.b16 %v3193
    %v3539 = vunpack.c.h.b16 %v3193
    %v3540 = vunpack.c.l.b16 %v3194
    %v3541 = vunpack.c.l.b16 %v3195
    %v3542 = vunpack.c.h.b16 %v3195
    %v3543 = vunpack.c.l.b16 %v3196
    %v3544 = vunpack.c.l.b16 %v3197
    %v3545 = vunpack.c.h.b16 %v3197
    %v3546 = vunpack.c.l.b16 %v3198
    %v3547 = vunpack.c.l.b16 %v3199
    %v3548 = vunpack.c.h.b16 %v3199
    %v3549 = vunpack.c.l.b16 %v3200
    %v3550 = vunpack.c.l.b16 %v3201
    %v3551 = vunpack.c.h.b16 %v3201
    %v3552 = vunpack.c.l.b16 %v3202
    %v3553 = vunpack.c.l.b16 %v3203
    %v3554 = vunpack.c.h.b16 %v3203
    %v3555 = vunpack.c.l.b16 %v3204
    %v3556 = vunpack.c.l.b16 %v3205
    %v3557 = vunpack.c.h.b16 %v3205
    %v3558 = vunpack.c.l.b16 %v3206
    %v3559 = vunpack.c.l.b16 %v3207
    %v3560 = vunpack.c.h.b16 %v3207
    %v3561 = vunpack.c.l.b16 %v3208
    %v3562 = vunpack.c.l.b16 %v3209
    %v3563 = vunpack.c.h.b16 %v3209
    %v3564 = vunpack.c.l.b16 %v3210
    %v3565 = vunpack.c.l.b16 %v3211
    %v3566 = vunpack.c.h.b16 %v3211
    %v3567 = vunpack.c.l.b16 %v3212
    %v3568 = vunpack.c.l.b16 %v3213
    %v3569 = vunpack.c.h.b16 %v3213
    %v3570 = vunpack.c.l.b16 %v3214
    %v3571 = vunpack.c.l.b16 %v3215
    %v3572 = vunpack.c.h.b16 %v3215
    %v3573 = vunpack.c.l.b16 %v3216
    %v3574 = vunpack.c.l.b16 %v3217
    %v3575 = vunpack.c.h.b16 %v3217
    %v3576 = vunpack.c.l.b16 %v3218
    %v3577 = vpack.c.b16 %v3388, %v3385
    %v3578 = vpack.c.b16 %v3389, %v3386
    %v3579 = vpack.c.b16 %v3390, %v3387
    %v3580 = vpack.c.b16 %v3394, %v3391
    %v3581 = vpack.c.b16 %v3395, %v3392
    %v3582 = vpack.c.b16 %v3396, %v3393
    %v3583 = vpack.c.b16 %v3400, %v3397
    %v3584 = vpack.c.b16 %v3401, %v3398
    %v3585 = vpack.c.b16 %v3402, %v3399
    %v3586 = vpack.c.b16 %v3406, %v3403
    %v3587 = vpack.c.b16 %v3407, %v3404
    %v3588 = vpack.c.b16 %v3408, %v3405
    %v3589 = vpack.c.b16 %v3412, %v3409
    %v3590 = vpack.c.b16 %v3413, %v3410
    %v3591 = vpack.c.b16 %v3414, %v3411
    %v3592 = vpack.c.b16 %v3418, %v3415
    %v3593 = vpack.c.b16 %v3419, %v3416
    %v3594 = vpack.c.b16 %v3420, %v3417
    %v3595 = vpack.c.b16 %v3424, %v3421
    %v3596 = vpack.c.b16 %v3425, %v3422
    %v3597 = vpack.c.b16 %v3426, %v3423
    %v3598 = vpack.c.b16 %v3430, %v3427
    %v3599 = vpack.c.b16 %v3431, %v3428
    %v3600 = vpack.c.b16 %v3432, %v3429
    %v3601 = vpack.c.b16 %v3436, %v3433
    %v3602 = vpack.c.b16 %v3437, %v3434
    %v3603 = vpack.c.b16 %v3438, %v3435
    %v3604 = vpack.c.b16 %v3442, %v3439
    %v3605 = vpack.c.b16 %v3443, %v3440
    %v3606 = vpack.c.b16 %v3444, %v3441
    %v3607 = vpack.c.b16 %v3448, %v3445
    %v3608 = vpack.c.b16 %v3449, %v3446
    %v3609 = vpack.c.b16 %v3450, %v3447
    %v3610 = vpack.c.b16 %v3454, %v3451
    %v3611 = vpack.c.b16 %v3455, %v3452
    %v3612 = vpack.c.b16 %v3456, %v3453
    %v3613 = vpack.c.b16 %v3460, %v3457
    %v3614 = vpack.c.b16 %v3461, %v3458
    %v3615 = vpack.c.b16 %v3462, %v3459
    %v3616 = vpack.c.b16 %v3466, %v3463
    %v3617 = vpack.c.b16 %v3467, %v3464
    %v3618 = vpack.c.b16 %v3468, %v3465
    %v3619 = vpack.c.b16 %v3472, %v3469
    %v3620 = vpack.c.b16 %v3473, %v3470
    %v3621 = vpack.c.b16 %v3474, %v3471
    %v3622 = vpack.c.b16 %v3478, %v3475
    %v3623 = vpack.c.b16 %v3479, %v3476
    %v3624 = vpack.c.b16 %v3480, %v3477
    %v3625 = vpack.c.b16 %v3484, %v3481
    %v3626 = vpack.c.b16 %v3485, %v3482
    %v3627 = vpack.c.b16 %v3486, %v3483
    %v3628 = vpack.c.b16 %v3490, %v3487
    %v3629 = vpack.c.b16 %v3491, %v3488
    %v3630 = vpack.c.b16 %v3492, %v3489
    %v3631 = vpack.c.b16 %v3496, %v3493
    %v3632 = vpack.c.b16 %v3497, %v3494
    %v3633 = vpack.c.b16 %v3498, %v3495
    %v3634 = vpack.c.b16 %v3502, %v3499
    %v3635 = vpack.c.b16 %v3503, %v3500
    %v3636 = vpack.c.b16 %v3504, %v3501
    %v3637 = vpack.c.b16 %v3508, %v3505
    %v3638 = vpack.c.b16 %v3509, %v3506
    %v3639 = vpack.c.b16 %v3510, %v3507
    %v3640 = vpack.c.b16 %v3514, %v3511
    %v3641 = vpack.c.b16 %v3515, %v3512
    %v3642 = vpack.c.b16 %v3516, %v3513
    %v3643 = vpack.c.b16 %v3520, %v3517
    %v3644 = vpack.c.b16 %v3521, %v3518
    %v3645 = vpack.c.b16 %v3522, %v3519
    %v3646 = vpack.c.b16 %v3526, %v3523
    %v3647 = vpack.c.b16 %v3527, %v3524
    %v3648 = vpack.c.b16 %v3528, %v3525
    %v3649 = vpack.c.b16 %v3532, %v3529
    %v3650 = vpack.c.b16 %v3533, %v3530
    %v3651 = vpack.c.b16 %v3534, %v3531
    %v3652 = vpack.c.b16 %v3538, %v3535
    %v3653 = vpack.c.b16 %v3539, %v3536
    %v3654 = vpack.c.b16 %v3540, %v3537
    %v3655 = vpack.c.b16 %v3544, %v3541
    %v3656 = vpack.c.b16 %v3545, %v3542
    %v3657 = vpack.c.b16 %v3546, %v3543
    %v3658 = vpack.c.b16 %v3550, %v3547
    %v3659 = vpack.c.b16 %v3551, %v3548
    %v3660 = vpack.c.b16 %v3552, %v3549
    %v3661 = vpack.c.b16 %v3556, %v3553
    %v3662 = vpack.c.b16 %v3557, %v3554
    %v3663 = vpack.c.b16 %v3558, %v3555
    %v3664 = vpack.c.b16 %v3562, %v3559
    %v3665 = vpack.c.b16 %v3563, %v3560
    %v3666 = vpack.c.b16 %v3564, %v3561
    %v3667 = vpack.c.b16 %v3568, %v3565
    %v3668 = vpack.c.b16 %v3569, %v3566
    %v3669 = vpack.c.b16 %v3570, %v3567
    %v3670 = vpack.c.b16 %v3574, %v3571
    %v3671 = vpack.c.b16 %v3575, %v3572
    %v3672 = vpack.c.b16 %v3576, %v3573
    %3769 = vmatprep.subr.bf16.mxu0 %v3578
    %3770 = vmatpush1.bf16.msra.mxu0 %v3577
    %3771 = vmatprep.subr.bf16.mxu0 %v3581
    %3772 = vmatpush1.bf16.msra.mxu0 %v3580
    %3773 = vmatprep.subr.bf16.mxu0 %v3584
    %3774 = vmatpush1.bf16.msra.mxu0 %v3583
    %3775 = vmatprep.subr.bf16.mxu0 %v3587
    %3776 = vmatpush1.bf16.msra.mxu0 %v3586
    %3777 = vmatprep.subr.bf16.mxu0 %v3590
    %3778 = vmatpush1.bf16.msra.mxu0 %v3589
    %3779 = vmatprep.subr.bf16.mxu0 %v3593
    %3780 = vmatpush1.bf16.msra.mxu0 %v3592
    %3781 = vmatprep.subr.bf16.mxu0 %v3596
    %3782 = vmatpush1.bf16.msra.mxu0 %v3595
    %3783 = vmatprep.subr.bf16.mxu0 %v3599
    %3784 = vmatpush1.bf16.msra.mxu0 %v3598
    %3785 = vmatprep.subr.bf16.mxu0 %v3602
    %3786 = vmatpush1.bf16.msra.mxu0 %v3601
    %3787 = vmatprep.subr.bf16.mxu0 %v3605
    %3788 = vmatpush1.bf16.msra.mxu0 %v3604
    %3789 = vmatprep.subr.bf16.mxu0 %v3608
    %3790 = vmatpush1.bf16.msra.mxu0 %v3607
    %3791 = vmatprep.subr.bf16.mxu0 %v3611
    %3792 = vmatpush1.bf16.msra.mxu0 %v3610
    %3793 = vmatprep.subr.bf16.mxu0 %v3614
    %3794 = vmatpush1.bf16.msra.mxu0 %v3613
    %3795 = vmatprep.subr.bf16.mxu0 %v3617
    %3796 = vmatpush1.bf16.msra.mxu0 %v3616
    %3797 = vmatprep.subr.bf16.mxu0 %v3620
    %3798 = vmatpush1.bf16.msra.mxu0 %v3619
    %3799 = vmatprep.subr.bf16.mxu0 %v3623
    %3800 = vmatpush1.bf16.msra.mxu0 %v3622
    %3801 = vmatprep.mubr.bf16.mxu0 %v3250
    %3802 = vmatmul.mubr.bf16.gmra.mrb[0].mxu0 %v3249
    %v3803 = vpop.f32.mrb[0].mxu0
    %v3804 = vadd.f32 %v3225, %v3803
    %v3805 = vpop.f32.mrb[0].mxu0
    %v3806 = vadd.f32 %v3229, %v3805
    %v3807 = vpop.f32.mrb[0].mxu0
    %v3808 = vadd.f32 %v3225, %v3807
    %v3809 = vpop.f32.mrb[0].mxu0
    %v3810 = vadd.f32 %v3229, %v3809
    %3811 = vdwg.mxu0
    %3812 = vmatprep.subr.bf16.mxu0 %v3626
    %3813 = vmatpush1.bf16.msra.mxu0 %v3625
    %3814 = vmatprep.subr.bf16.mxu0 %v3629
    %3815 = vmatpush1.bf16.msra.mxu0 %v3628
    %3816 = vmatprep.subr.bf16.mxu0 %v3632
    %3817 = vmatpush1.bf16.msra.mxu0 %v3631
    %3818 = vmatprep.subr.bf16.mxu0 %v3635
    %3819 = vmatpush1.bf16.msra.mxu0 %v3634
    %3820 = vmatprep.subr.bf16.mxu0 %v3638
    %3821 = vmatpush1.bf16.msra.mxu0 %v3637
    %3822 = vmatprep.subr.bf16.mxu0 %v3641
    %3823 = vmatpush1.bf16.msra.mxu0 %v3640
    %3824 = vmatprep.subr.bf16.mxu0 %v3644
    %3825 = vmatpush1.bf16.msra.mxu0 %v3643
    %3826 = vmatprep.subr.bf16.mxu0 %v3647
    %3827 = vmatpush1.bf16.msra.mxu0 %v3646
    %3828 = vmatprep.subr.bf16.mxu0 %v3650
    %3829 = vmatpush1.bf16.msra.mxu0 %v3649
    %3830 = vmatprep.subr.bf16.mxu0 %v3653
    %3831 = vmatpush1.bf16.msra.mxu0 %v3652
    %3832 = vmatprep.subr.bf16.mxu0 %v3656
    %3833 = vmatpush1.bf16.msra.mxu0 %v3655
    %3834 = vmatprep.subr.bf16.mxu0 %v3659
    %3835 = vmatpush1.bf16.msra.mxu0 %v3658
    %3836 = vmatprep.subr.bf16.mxu0 %v3662
    %3837 = vmatpush1.bf16.msra.mxu0 %v3661
    %3838 = vmatprep.subr.bf16.mxu0 %v3665
    %3839 = vmatpush1.bf16.msra.mxu0 %v3664
    %3840 = vmatprep.subr.bf16.mxu0 %v3668
    %3841 = vmatpush1.bf16.msra.mxu0 %v3667
    %3842 = vmatprep.subr.bf16.mxu0 %v3671
    %3843 = vmatpush1.bf16.msra.mxu0 %v3670
    %3844 = vmatprep.mubr.bf16.mxu0 %v3252
    %3845 = vmatmul.mubr.bf16.gmra.mrb[0].mxu0 %v3251
    %v3846 = vpop.f32.mrb[0].mxu0
    %v3847 = vadd.f32 %v3804, %v3846
    %v3848 = vpop.f32.mrb[0].mxu0
    %v3849 = vadd.f32 %v3806, %v3848
    %v3850 = vpop.f32.mrb[0].mxu0
    %v3851 = vadd.f32 %v3808, %v3850
    %v3852 = vpop.f32.mrb[0].mxu0
    %v3853 = vadd.f32 %v3810, %v3852
    %3854 = vdwg.mxu0
    %3855 = vmatprep.subr.bf16.mxu0 0
    %3856 = vmatpush1.bf16.msra.mxu0 %v3579
    %3857 = vmatprep.subr.bf16.mxu0 0
    %3858 = vmatpush1.bf16.msra.mxu0 %v3582
    %3859 = vmatprep.subr.bf16.mxu0 0
    %3860 = vmatpush1.bf16.msra.mxu0 %v3585
    %3861 = vmatprep.subr.bf16.mxu0 0
    %3862 = vmatpush1.bf16.msra.mxu0 %v3588
    %3863 = vmatprep.subr.bf16.mxu0 0
    %3864 = vmatpush1.bf16.msra.mxu0 %v3591
    %3865 = vmatprep.subr.bf16.mxu0 0
    %3866 = vmatpush1.bf16.msra.mxu0 %v3594
    %3867 = vmatprep.subr.bf16.mxu0 0
    %3868 = vmatpush1.bf16.msra.mxu0 %v3597
    %3869 = vmatprep.subr.bf16.mxu0 0
    %3870 = vmatpush1.bf16.msra.mxu0 %v3600
    %3871 = vmatprep.subr.bf16.mxu0 0
    %3872 = vmatpush1.bf16.msra.mxu0 %v3603
    %3873 = vmatprep.subr.bf16.mxu0 0
    %3874 = vmatpush1.bf16.msra.mxu0 %v3606
    %3875 = vmatprep.subr.bf16.mxu0 0
    %3876 = vmatpush1.bf16.msra.mxu0 %v3609
    %3877 = vmatprep.subr.bf16.mxu0 0
    %3878 = vmatpush1.bf16.msra.mxu0 %v3612
    %3879 = vmatprep.subr.bf16.mxu0 0
    %3880 = vmatpush1.bf16.msra.mxu0 %v3615
    %3881 = vmatprep.subr.bf16.mxu0 0
    %3882 = vmatpush1.bf16.msra.mxu0 %v3618
    %3883 = vmatprep.subr.bf16.mxu0 0
    %3884 = vmatpush1.bf16.msra.mxu0 %v3621
    %3885 = vmatprep.subr.bf16.mxu0 0
    %3886 = vmatpush1.bf16.msra.mxu0 %v3624
    %3887 = vmatprep.mubr.bf16.mxu0 %v3250
    %3888 = vmatmul.mubr.bf16.gmra.mrb[0].mxu0 %v3249
    %v3889 = vpop.f32.mrb[0].mxu0
    %v3890 = vadd.f32 %v3233, %v3889
    %v3891 = vpop.f32.mrb[0].mxu0
    %v3892 = vpop.f32.mrb[0].mxu0
    %v3893 = vadd.f32 %v3233, %v3892
    %v3894 = vpop.f32.mrb[0].mxu0
    %3895 = vdwg.mxu0
    %3896 = vmatprep.subr.bf16.mxu0 0
    %3897 = vmatpush1.bf16.msra.mxu0 %v3627
    %3898 = vmatprep.subr.bf16.mxu0 0
    %3899 = vmatpush1.bf16.msra.mxu0 %v3630
    %3900 = vmatprep.subr.bf16.mxu0 0
    %3901 = vmatpush1.bf16.msra.mxu0 %v3633
    %3902 = vmatprep.subr.bf16.mxu0 0
    %3903 = vmatpush1.bf16.msra.mxu0 %v3636
    %3904 = vmatprep.subr.bf16.mxu0 0
    %3905 = vmatpush1.bf16.msra.mxu0 %v3639
    %3906 = vmatprep.subr.bf16.mxu0 0
    %3907 = vmatpush1.bf16.msra.mxu0 %v3642
    %3908 = vmatprep.subr.bf16.mxu0 0
    %3909 = vmatpush1.bf16.msra.mxu0 %v3645
    %3910 = vmatprep.subr.bf16.mxu0 0
    %3911 = vmatpush1.bf16.msra.mxu0 %v3648
    %3912 = vmatprep.subr.bf16.mxu0 0
    %3913 = vmatpush1.bf16.msra.mxu0 %v3651
    %3914 = vmatprep.subr.bf16.mxu0 0
    %3915 = vmatpush1.bf16.msra.mxu0 %v3654
    %3916 = vmatprep.subr.bf16.mxu0 0
    %3917 = vmatpush1.bf16.msra.mxu0 %v3657
    %3918 = vmatprep.subr.bf16.mxu0 0
    %3919 = vmatpush1.bf16.msra.mxu0 %v3660
    %3920 = vmatprep.subr.bf16.mxu0 0
    %3921 = vmatpush1.bf16.msra.mxu0 %v3663
    %3922 = vmatprep.subr.bf16.mxu0 0
    %3923 = vmatpush1.bf16.msra.mxu0 %v3666
    %3924 = vmatprep.subr.bf16.mxu0 0
    %3925 = vmatpush1.bf16.msra.mxu0 %v3669
    %3926 = vmatprep.subr.bf16.mxu0 0
    %3927 = vmatpush1.bf16.msra.mxu0 %v3672
    %3928 = vmatprep.mubr.bf16.mxu0 %v3252
    %3929 = vmatmul.mubr.bf16.gmra.mrb[0].mxu0 %v3251
    %v3930 = vpop.f32.mrb[0].mxu0
    %v3931 = vadd.f32 %v3890, %v3930
    %v3932 = vpop.f32.mrb[0].mxu0
    %v3933 = vpop.f32.mrb[0].mxu0
    %v3934 = vadd.f32 %v3893, %v3933
    %v3935 = vpop.f32.mrb[0].mxu0
    %3936 = vdwg.mxu0
    %v3937 = vxor.u32 %v3847, 2147483648
    %v3938 = vxor.u32 %v3851, 2147483648
    %v3939 = vmul.f32 %v3937, 1.442695
    %v3940 = vpow.pop %v3939
    %v3941 = vmul.f32 %v3938, 1.442695
    %v3942 = vpow.pop %v3941
    %v3943 = vadd.f32 %v3940, 1.0
    %v3944 = vadd.f32 %v3942, 1.0
    %v3945 = vrcp.pop %v3943
    %v3946 = vmul.f32 1.0, %v3945
    %v3947 = vrcp.pop %v3944
    %v3948 = vmul.f32 1.0, %v3947
    %v3949 = vtanh.pop %v3849
    %v3950 = vtanh.pop %v3853
    %v3951 = vxor.u32 %v3931, 2147483648
    %v3952 = vxor.u32 %v3934, 2147483648
    %v3953 = vmul.f32 %v3951, 1.442695
    %v3954 = vpow.pop %v3953
    %v3955 = vmul.f32 %v3952, 1.442695
    %v3956 = vpow.pop %v3955
    %v3957 = vadd.f32 %v3954, 1.0
    %v3958 = vadd.f32 %v3956, 1.0
    %v3959 = vrcp.pop %v3957
    %v3960 = vmul.f32 1.0, %v3959
    %v3961 = vrcp.pop %v3958
    %v3962 = vmul.f32 1.0, %v3961
    %v3963 = vmul.f32 %v3946, %v3949
    %v3964 = vmul.f32 %v3948, %v3950
    %v3965 = vtanh.pop %v3963
    %v3966 = vtanh.pop %v3964
    %v3967 = vmul.f32 %v3960, %v3965
    %v3968 = vmul.f32 %v3962, %v3966
    %v3969 = vmul.f32 %v3967, 0.2
    %v3970 = vmul.f32 %v3968, 0.2
    %v3971 = vmax.f32 %v3967, %v3969
    %v3972 = vmax.f32 %v3968, %v3970
    %v3973 = vpack.c.bf16 %v3972, %v3971
    %s3974 = scalar_lea.vmem [#allocation6], 192
    %v3975 = vld [vmem:[%s3974] sm:$0xf]
    %v3976 = vld [vmem:[%s3974 + $0x4] sm:$0xf]
    %v3977 = vld [vmem:[%s3974 + $0x8] sm:$0xf]
    %v3978 = vld [vmem:[%s3974 + $0xc] sm:$0xf]
    %v3979 = vld [vmem:[%s3974 + $0x10] sm:$0xf]
    %v3980 = vld [vmem:[%s3974 + $0x14] sm:$0xf]
    %v3981 = vld [vmem:[%s3974 + $0x18] sm:$0xf]
    %v3982 = vld [vmem:[%s3974 + $0x1c] sm:$0xf]
    %v3983 = vld [vmem:[%s3974 + $0x20] sm:$0xf]
    %v3984 = vld [vmem:[%s3974 + $0x24] sm:$0xf]
    %v3985 = vld [vmem:[%s3974 + $0x28] sm:$0xf]
    %v3986 = vld [vmem:[%s3974 + $0x2c] sm:$0xf]
    %v3987 = vld [vmem:[%s3974 + $0x30] sm:$0xf]
    %v3988 = vld [vmem:[%s3974 + $0x34] sm:$0xf]
    %v3989 = vld [vmem:[%s3974 + $0x38] sm:$0xf]
    %v3990 = vld [vmem:[%s3974 + $0x3c] sm:$0xf]
    %v4007 = vunpack.c.l.b16 %v3975
    %v4008 = vunpack.c.l.b16 %v3976
    %v4009 = vunpack.c.l.b16 %v3977
    %v4010 = vunpack.c.l.b16 %v3978
    %v4011 = vunpack.c.l.b16 %v3979
    %v4012 = vunpack.c.l.b16 %v3980
    %v4013 = vunpack.c.l.b16 %v3981
    %v4014 = vunpack.c.l.b16 %v3982
    %v4015 = vunpack.c.l.b16 %v3983
    %v4016 = vunpack.c.l.b16 %v3984
    %v4017 = vunpack.c.l.b16 %v3985
    %v4018 = vunpack.c.l.b16 %v3986
    %v4019 = vunpack.c.l.b16 %v3987
    %v4020 = vunpack.c.l.b16 %v3988
    %v4021 = vunpack.c.l.b16 %v3989
    %v4022 = vunpack.c.l.b16 %v3990
    %v4023 = vpack.c.b16 %v4008, %v4007
    %v4024 = vpack.c.b16 %v4010, %v4009
    %v4025 = vpack.c.b16 %v4012, %v4011
    %v4026 = vpack.c.b16 %v4014, %v4013
    %v4027 = vpack.c.b16 %v4016, %v4015
    %v4028 = vpack.c.b16 %v4018, %v4017
    %v4029 = vpack.c.b16 %v4020, %v4019
    %v4030 = vpack.c.b16 %v4022, %v4021
    %4039 = vmatprep.subr.bf16.mxu0 0
    %4040 = vmatpush1.bf16.msra.mxu0 %v4023
    %4041 = vmatprep.subr.bf16.mxu0 0
    %4042 = vmatpush1.bf16.msra.mxu0 %v4024
    %4043 = vmatprep.subr.bf16.mxu0 0
    %4044 = vmatpush1.bf16.msra.mxu0 %v4025
    %4045 = vmatprep.subr.bf16.mxu0 0
    %4046 = vmatpush1.bf16.msra.mxu0 %v4026
    %4047 = vmatprep.subr.bf16.mxu0 0
    %4048 = vmatpush1.bf16.msra.mxu0 %v4027
    %4049 = vmatprep.subr.bf16.mxu0 0
    %4050 = vmatpush1.bf16.msra.mxu0 %v4028
    %4051 = vmatprep.subr.bf16.mxu0 0
    %4052 = vmatpush1.bf16.msra.mxu0 %v4029
    %4053 = vmatprep.subr.bf16.mxu0 0
    %4054 = vmatpush1.bf16.msra.mxu0 %v4030
    %4055 = vmatprep.subr.bf16.mxu0 0
    %4056 = vmatpush1.bf16.msra.mxu0 0
    %4057 = vmatprep.subr.bf16.mxu0 0
    %4058 = vmatpush1.bf16.msra.mxu0 0
    %4059 = vmatprep.subr.bf16.mxu0 0
    %4060 = vmatpush1.bf16.msra.mxu0 0
    %4061 = vmatprep.subr.bf16.mxu0 0
    %4062 = vmatpush1.bf16.msra.mxu0 0
    %4063 = vmatprep.subr.bf16.mxu0 0
    %4064 = vmatpush1.bf16.msra.mxu0 0
    %4065 = vmatprep.subr.bf16.mxu0 0
    %4066 = vmatpush1.bf16.msra.mxu0 0
    %4067 = vmatprep.subr.bf16.mxu0 0
    %4068 = vmatpush1.bf16.msra.mxu0 0
    %4069 = vmatprep.subr.bf16.mxu0 0
    %4070 = vmatpush1.bf16.msra.mxu0 0
    %4071 = vmatprep.mubr.bf16.mxu0 0
    %4072 = vmatmul.mubr.bf16.gmra.mrb[0].mxu0 %v3973
    %v4073 = vpop.f32.mrb[0].mxu0
    %v4074 = vadd.f32 0.0, %v4073
    %v4075 = vpop.f32.mrb[0].mxu0
    %v4076 = vpop.f32.mrb[0].mxu0
    %v4077 = vadd.f32 0.0, %v4076
    %v4078 = vpop.f32.mrb[0].mxu0
    %4079 = vdwg.mxu0
    %v4080 = vadd.f32 %v3084, %v4074
    %v4081 = vadd.f32 %v3085, %v4077
    %v4082 = vld [vmem:[#allocation7] sm:$0x1]
    %v4084 = vlaneseq
    %v4085 = vshrl.u32 %v4084, 7
    %v4086 = vsub.s32 0, %v4085
    %v4087 = vrot.slane %v4082, %v4086
    %v4089 = vadd.f32 %v4080, %v4087
    %v4090 = vadd.f32 %v4081, %v4087
    %v4091 = vmul.f32 %v4089, 0.2
    %v4092 = vmul.f32 %v4090, 0.2
    %v4093 = vmax.f32 %v4089, %v4091
    %v4094 = vmax.f32 %v4090, %v4092
    %v4095 = vpack.c.bf16 %v4094, %v4093
    %v4096 = vld [vmem:[#allocation9] sm:$0xf]
    %v4097 = vld [vmem:[#allocation9 + $0x4] sm:$0xf]
    %v4098 = vld [vmem:[#allocation9 + $0x8] sm:$0xf]
    %v4099 = vld [vmem:[#allocation9 + $0xc] sm:$0xf]
    %v4100 = vld [vmem:[#allocation9 + $0x10] sm:$0xf]
    %v4101 = vld [vmem:[#allocation9 + $0x14] sm:$0xf]
    %v4102 = vld [vmem:[#allocation9 + $0x18] sm:$0xf]
    %v4103 = vld [vmem:[#allocation9 + $0x1c] sm:$0xf]
    %v4104 = vld [vmem:[#allocation9 + $0x20] sm:$0xf]
    %v4105 = vld [vmem:[#allocation9 + $0x24] sm:$0xf]
    %v4106 = vld [vmem:[#allocation9 + $0x28] sm:$0xf]
    %v4107 = vld [vmem:[#allocation9 + $0x2c] sm:$0xf]
    %v4108 = vld [vmem:[#allocation9 + $0x30] sm:$0xf]
    %v4109 = vld [vmem:[#allocation9 + $0x34] sm:$0xf]
    %v4110 = vld [vmem:[#allocation9 + $0x38] sm:$0xf]
    %v4111 = vld [vmem:[#allocation9 + $0x3c] sm:$0xf]
    %v4112 = vld [vmem:[#allocation10] sm:$0x1]
    %v4114 = vlaneseq
    %v4115 = vshrl.u32 %v4114, 7
    %v4116 = vsub.s32 0, %v4115
    %v4117 = vrot.slane %v4112, %v4116
    %v4135 = vunpack.c.l.b16 %v4096
    %v4136 = vunpack.c.l.b16 %v4097
    %v4137 = vunpack.c.l.b16 %v4098
    %v4138 = vunpack.c.l.b16 %v4099
    %v4139 = vunpack.c.l.b16 %v4100
    %v4140 = vunpack.c.l.b16 %v4101
    %v4141 = vunpack.c.l.b16 %v4102
    %v4142 = vunpack.c.l.b16 %v4103
    %v4143 = vunpack.c.l.b16 %v4104
    %v4144 = vunpack.c.l.b16 %v4105
    %v4145 = vunpack.c.l.b16 %v4106
    %v4146 = vunpack.c.l.b16 %v4107
    %v4147 = vunpack.c.l.b16 %v4108
    %v4148 = vunpack.c.l.b16 %v4109
    %v4149 = vunpack.c.l.b16 %v4110
    %v4150 = vunpack.c.l.b16 %v4111
    %v4151 = vpack.c.b16 %v4136, %v4135
    %v4152 = vpack.c.b16 %v4138, %v4137
    %v4153 = vpack.c.b16 %v4140, %v4139
    %v4154 = vpack.c.b16 %v4142, %v4141
    %v4155 = vpack.c.b16 %v4144, %v4143
    %v4156 = vpack.c.b16 %v4146, %v4145
    %v4157 = vpack.c.b16 %v4148, %v4147
    %v4158 = vpack.c.b16 %v4150, %v4149
    %4167 = vmatprep.subr.bf16.mxu0 0
    %4168 = vmatpush1.bf16.msra.mxu0 %v4151
    %4169 = vmatprep.subr.bf16.mxu0 0
    %4170 = vmatpush1.bf16.msra.mxu0 %v4152
    %4171 = vmatprep.subr.bf16.mxu0 0
    %4172 = vmatpush1.bf16.msra.mxu0 %v4153
    %4173 = vmatprep.subr.bf16.mxu0 0
    %4174 = vmatpush1.bf16.msra.mxu0 %v4154
    %4175 = vmatprep.subr.bf16.mxu0 0
    %4176 = vmatpush1.bf16.msra.mxu0 %v4155
    %4177 = vmatprep.subr.bf16.mxu0 0
    %4178 = vmatpush1.bf16.msra.mxu0 %v4156
    %4179 = vmatprep.subr.bf16.mxu0 0
    %4180 = vmatpush1.bf16.msra.mxu0 %v4157
    %4181 = vmatprep.subr.bf16.mxu0 0
    %4182 = vmatpush1.bf16.msra.mxu0 %v4158
    %4183 = vmatprep.subr.bf16.mxu0 0
    %4184 = vmatpush1.bf16.msra.mxu0 0
    %4185 = vmatprep.subr.bf16.mxu0 0
    %4186 = vmatpush1.bf16.msra.mxu0 0
    %4187 = vmatprep.subr.bf16.mxu0 0
    %4188 = vmatpush1.bf16.msra.mxu0 0
    %4189 = vmatprep.subr.bf16.mxu0 0
    %4190 = vmatpush1.bf16.msra.mxu0 0
    %4191 = vmatprep.subr.bf16.mxu0 0
    %4192 = vmatpush1.bf16.msra.mxu0 0
    %4193 = vmatprep.subr.bf16.mxu0 0
    %4194 = vmatpush1.bf16.msra.mxu0 0
    %4195 = vmatprep.subr.bf16.mxu0 0
    %4196 = vmatpush1.bf16.msra.mxu0 0
    %4197 = vmatprep.subr.bf16.mxu0 0
    %4198 = vmatpush1.bf16.msra.mxu0 0
    %4199 = vmatprep.mubr.bf16.mxu0 0
    %4200 = vmatmul.mubr.bf16.gmra.mrb[0].mxu0 %v4095
    %v4201 = vpop.f32.mrb[0].mxu0
    %v4202 = vadd.f32 %v4117, %v4201
    %v4203 = vpop.f32.mrb[0].mxu0
    %v4204 = vpop.f32.mrb[0].mxu0
    %v4205 = vadd.f32 %v4117, %v4204
    %v4206 = vpop.f32.mrb[0].mxu0
    %4207 = vdwg.mxu0
    %v4208 = vmax.f32 %v4202, 0.0
    %v4209 = vmax.f32 %v4205, 0.0
    %v4210 = vpack.c.bf16 %v4209, %v4208
    %v4212 = vunpack.c.l.b16 %v4210
    %v4213 = vunpack.c.h.b16 %v4210
    %v4214 = vpack.c.b16 %v4212, %v4212
    %v4215 = vpack.c.b16 %v4213, %v4213
    %4218 = vst [vmem:[%s7] sm:$0xf] %v4214
    %4219 = vst [vmem:[%s7 + $0x4] sm:$0xf] %v4215
    // Predicated region
    $region54: #{forward.1} parent=1 // pred_check
      _
    $region55: #{forward.1} parent=1 // pred_check_branch
      %4221 = sbr.rel (0) target = $region57
    $region56: #{forward.1} parent=1 // pred_region
      _
    $region57: #{forward.1} parent=1 // pred_fallthru
      _
    // Predicated region
    $region58: #{forward.1} parent=1 // pred_check
      _
    $region59: #{forward.1} parent=1 // pred_check_branch
      %4223 = sbr.rel (0) target = $region61
    $region60: #{forward.1} parent=1 // pred_region
      _
    $region61: #{forward.1} parent=1 // pred_fallthru
      _
    %4224 = vsyncpa [#allocation3], 1
    %4225 = vsyncpa [#allocation5], 1
    %4226 = vsyncpa [#allocation8], 1
    %4227 = vsyncpa [#allocation11], 1

</llo_original>
